<compile_context>
chip_gen: v7x
topology: tpu7x:2x2x1
jax: 0.10.0
libtpu: 0.0.40
codegen_flags: <defaults>
</compile_context>

<pallas_src>
import jax
import jax.numpy as jnp
import numpy as np
from jax.experimental import pallas as pl
from jax.experimental.pallas import tpu as pltpu


def _mlp_kernel(x_ref, *rest):
    """One row-tile of the rendering MLP: Linear(+ReLU) x (L-1) -> Linear -> tanh.

    rest = (w0, b0, w1, b1, ..., w_{L-1}, b_{L-1}, o_ref)
    w0 is f32 [d_in_p, h0]; subsequent weights are bf16 [in, out];
    biases are f32 [1, out]; output block is bf16.
    """
    *param_refs, o_ref = rest
    n_layers = len(param_refs) // 2

    # ---- layer 0 in full f32 (K is tiny; preserves the f32 input path) ----
    acc = jnp.dot(x_ref[...], param_refs[0][...],
                  preferred_element_type=jnp.float32) + param_refs[1][...]

    if n_layers == 1:
        o_ref[...] = jnp.tanh(acc).astype(o_ref.dtype)
        return

    # ReLU in f32, recast to bf16 for the MXU operands of the next layer.
    h = jnp.maximum(acc, 0.0).astype(jnp.bfloat16)

    # ---- hidden + output layers: bf16 operands, f32 accumulate/elementwise --
    for l in range(1, n_layers):
        w = param_refs[2 * l][...]            # bf16 [in, out]
        b = param_refs[2 * l + 1][...]        # f32  [1, out]
        acc = jnp.dot(h, w, preferred_element_type=jnp.float32) + b
        if l < n_layers - 1:
            h = jnp.maximum(acc, 0.0).astype(jnp.bfloat16)
        else:
            o_ref[...] = jnp.tanh(acc).astype(o_ref.dtype)   # tanh in f32 (EUP)


def _pick_row_tile(n, *, max_tile=2048, min_tile=256, target_min_grid=2):
    """Largest power-of-two tile <= max_tile keeping grid >= target_min_grid."""
    tile = max_tile
    while tile > min_tile and pl.cdiv(n, tile) < target_min_grid:
        tile //= 2
    return tile


def nerf_rendering_forward(points, params, *, row_tile=None, max_row_tile=2048,
                           vmem_limit_bytes=48 * 1024 * 1024):
    """RenderingNetwork (mode='naive') forward via a Pallas TPU kernel.

    points : [N, d_in] float32
    params : list of (W, b) pairs; W is [in, out], b is [1, out] (float32,
             with any weight_norm already folded into W in f32)
    returns: [N, d_out] float32
    """
    n, d_in = points.shape
    d_out = params[-1][0].shape[1]
    n_layers = len(params)

    if row_tile is None:
        row_tile = _pick_row_tile(n, max_tile=max_row_tile)

    # --- pad rows so N is a multiple of the row tile (wrapper-side) ---------
    n_pad = pl.cdiv(n, row_tile) * row_tile
    if n_pad != n:
        points = jnp.pad(points, ((0, n_pad - n), (0, 0)))

    # --- pad d_in to a sublane-aligned width (3 -> 8) -----------------------
    d_in_p = max(8, ((d_in + 7) // 8) * 8)
    if d_in_p != d_in:
        points = jnp.pad(points, ((0, 0), (0, d_in_p - d_in)))

    # --- pad the rgb head to a lane-dense (multiple-of-128) output ----------
    d_out_p = max(128, ((d_out + 127) // 128) * 128)

    flat_params = []
    weight_specs = []
    for li, (w, b) in enumerate(params):
        w = w.astype(jnp.float32)
        b = b.astype(jnp.float32).reshape(1, -1)
        if li == 0 and d_in_p != d_in:
            w = jnp.pad(w, ((0, d_in_p - d_in), (0, 0)))      # zero rows: no-op
        if li == n_layers - 1 and d_out_p != d_out:
            w = jnp.pad(w, ((0, 0), (0, d_out_p - d_out)))
            b = jnp.pad(b, ((0, 0), (0, d_out_p - d_out)))
        if li > 0:
            w = w.astype(jnp.bfloat16)                        # bf16 MXU operands
        flat_params.extend([w, b])
        # Grid-invariant parameters: single-buffer them (no overlap benefit
        # from double buffering, halves their VMEM footprint).
        weight_specs.append(
            pl.BlockSpec(w.shape, lambda i: (0, 0), pipeline_mode=pl.Buffered(1)))
        weight_specs.append(
            pl.BlockSpec(b.shape, lambda i: (0, 0), pipeline_mode=pl.Buffered(1)))

    x_spec = pl.BlockSpec((row_tile, d_in_p), lambda i: (i, 0))
    o_spec = pl.BlockSpec((row_tile, d_out_p), lambda i: (i, 0))

    out = pl.pallas_call(
        _mlp_kernel,
        out_shape=jax.ShapeDtypeStruct((n_pad, d_out_p), jnp.bfloat16),
        grid_spec=pltpu.PrefetchScalarGridSpec(
            num_scalar_prefetch=0,
            grid=(n_pad // row_tile,),
            in_specs=[x_spec] + weight_specs,
            out_specs=o_spec,
        ),
        compiler_params=pltpu.CompilerParams(
            dimension_semantics=("parallel",),
            vmem_limit_bytes=vmem_limit_bytes,
        ),
    )(points, *flat_params)

    return out[:n, :d_out].astype(jnp.float32)


def init_params(key, dims):
    """Deterministic synthetic Linear params. dims = [d0, d1, ..., dk]."""
    params = []
    for i in range(len(dims) - 1):
        k_w, k_b, key = jax.random.split(key, 3)
        fan_in = dims[i]
        scale = 1.0 / np.sqrt(fan_in)
        w = jax.random.uniform(k_w, (dims[i], dims[i + 1]),
                               minval=-scale, maxval=scale, dtype=jnp.float32)
        b = jax.random.uniform(k_b, (1, dims[i + 1]),
                               minval=-scale, maxval=scale, dtype=jnp.float32)
        params.append((w, b))
    return params


def reference_forward(points, params):
    """Plain-JAX reference mirroring the kernel numerics: layer 0 in f32,
    later layers with bf16 matmul operands and f32 accumulation/elementwise,
    bf16 final store."""
    acc = jnp.dot(points, params[0][0],
                  preferred_element_type=jnp.float32) + params[0][1]
    for (w, b) in params[1:]:
        h = jnp.maximum(acc, 0.0).astype(jnp.bfloat16)
        acc = jnp.dot(h, w.astype(jnp.bfloat16),
                      preferred_element_type=jnp.float32) + b
    return jnp.tanh(acc).astype(jnp.bfloat16).astype(jnp.float32)


def reference_forward_f32(points, params):
    """Pure-f32 reference mirroring the PyTorch forward (mode='naive')."""
    x = points
    for (w, b) in params[:-1]:
        x = jnp.maximum(x @ w + b, 0.0)
    w, b = params[-1]
    return jnp.tanh(x @ w + b)


if __name__ == "__main__":
    key = jax.random.PRNGKey(0)

    # Small, MXU-friendly stand-in for the full-size module:
    # mode='naive' => d_in=3; hidden dims [128]*4 (full size uses [512]*4);
    # d_out=3 rgb head (padded to 128 lanes inside the kernel).
    # TODO(synk): mode='full'/'no_normal' input concatenation and the
    # positional view embedding (pe_freq_view > 0) are host-side preprocessing
    # and are not exercised here (mode='naive' default has neither).
    d_in, d_out = 3, 3
    hidden_dims = [128, 128, 128, 128]
    all_dims = [d_in] + hidden_dims + [d_out]

    n_points = 1000                       # deliberately not a tile multiple
    k_pts, k_par = jax.random.split(key)
    points = jax.random.normal(k_pts, (n_points, d_in), dtype=jnp.float32)
    params = init_params(k_par, all_dims)

    out = nerf_rendering_forward(points, params)   # row_tile auto-selected
    out = jax.block_until_ready(out)
    assert out.shape == (n_points, d_out)

    # Reference with the same mixed-precision path (bf16 output rounding too).
    ref = reference_forward(points, params)
    np.testing.assert_allclose(np.asarray(out), np.asarray(ref),
                               atol=1.5e-2, rtol=1.5e-2)

    # Loose sanity check against the pure-f32 PyTorch-equivalent math.
    ref32 = reference_forward_f32(points, params)
    assert np.max(np.abs(np.asarray(out) - np.asarray(ref32))) < 0.1

    print("KERNEL_OK")
</pallas_src>

<mosaic_0001>
module attributes {stable_mosaic.version = 11 : i64} {
  func.func @_mlp_kernel(%arg0: i32, %arg1: memref<512x8xf32, #tpu.memory_space<vmem>>, %arg2: memref<8x128xf32, #tpu.memory_space<vmem>>, %arg3: memref<1x128xf32, #tpu.memory_space<vmem>>, %arg4: memref<128x128xbf16, #tpu.memory_space<vmem>>, %arg5: memref<1x128xf32, #tpu.memory_space<vmem>>, %arg6: memref<128x128xbf16, #tpu.memory_space<vmem>>, %arg7: memref<1x128xf32, #tpu.memory_space<vmem>>, %arg8: memref<128x128xbf16, #tpu.memory_space<vmem>>, %arg9: memref<1x128xf32, #tpu.memory_space<vmem>>, %arg10: memref<128x128xbf16, #tpu.memory_space<vmem>>, %arg11: memref<1x128xf32, #tpu.memory_space<vmem>>, %arg12: memref<512x128xbf16, #tpu.memory_space<vmem>>) attributes {dimension_semantics = [#tpu.dimension_semantics<parallel>], iteration_bounds = array<i64: 2>, scalar_prefetch = 0 : i64, scratch_operands = 0 : i64, tpu.core_type = #tpu.core_type<tc>, window_params = [{transform_indices = @transform_0, window_bounds = array<i64: 512, 8>}, {pipeline_mode = #tpu.pipeline_mode<synchronous>, transform_indices = @transform_1, window_bounds = array<i64: 8, 128>}, {pipeline_mode = #tpu.pipeline_mode<synchronous>, transform_indices = @transform_2, window_bounds = array<i64: 1, 128>}, {pipeline_mode = #tpu.pipeline_mode<synchronous>, transform_indices = @transform_3, window_bounds = array<i64: 128, 128>}, {pipeline_mode = #tpu.pipeline_mode<synchronous>, transform_indices = @transform_4, window_bounds = array<i64: 1, 128>}, {pipeline_mode = #tpu.pipeline_mode<synchronous>, transform_indices = @transform_5, window_bounds = array<i64: 128, 128>}, {pipeline_mode = #tpu.pipeline_mode<synchronous>, transform_indices = @transform_6, window_bounds = array<i64: 1, 128>}, {pipeline_mode = #tpu.pipeline_mode<synchronous>, transform_indices = @transform_7, window_bounds = array<i64: 128, 128>}, {pipeline_mode = #tpu.pipeline_mode<synchronous>, transform_indices = @transform_8, window_bounds = array<i64: 1, 128>}, {pipeline_mode = #tpu.pipeline_mode<synchronous>, transform_indices = @transform_9, window_bounds = array<i64: 128, 128>}, {pipeline_mode = #tpu.pipeline_mode<synchronous>, transform_indices = @transform_10, window_bounds = array<i64: 1, 128>}, {transform_indices = @transform_11, window_bounds = array<i64: 512, 128>}]} {
    %c0 = arith.constant 0 : index
    %c0_0 = arith.constant 0 : index
    %0 = vector.load %arg1[%c0, %c0_0] : memref<512x8xf32, #tpu.memory_space<vmem>>, vector<512x8xf32>
    %c0_1 = arith.constant 0 : index
    %c0_2 = arith.constant 0 : index
    %1 = vector.load %arg2[%c0_1, %c0_2] : memref<8x128xf32, #tpu.memory_space<vmem>>, vector<8x128xf32>
    %cst = arith.constant dense<0.000000e+00> : vector<512x128xf32>
    %2 = tpu.matmul %0, %1, %cst {dimension_numbers = #tpu.dot_dimension_numbers<[1], [0], [0], [1], [0, 0, 1, 1], [], []>} : vector<512x8xf32>, vector<8x128xf32>, vector<512x128xf32> -> vector<512x128xf32>
    %c0_3 = arith.constant 0 : index
    %c0_4 = arith.constant 0 : index
    %3 = vector.load %arg3[%c0_3, %c0_4] : memref<1x128xf32, #tpu.memory_space<vmem>>, vector<1x128xf32>
    %4 = vector.broadcast %3 : vector<1x128xf32> to vector<512x128xf32>
    %5 = arith.addf %2, %4 : vector<512x128xf32>
    %cst_5 = arith.constant 0.000000e+00 : f32
    %6 = vector.broadcast %cst_5 : f32 to vector<512x128xf32>
    %7 = arith.maximumf %5, %6 : vector<512x128xf32>
    %8 = arith.truncf %7 : vector<512x128xf32> to vector<512x128xbf16>
    %c0_6 = arith.constant 0 : index
    %c0_7 = arith.constant 0 : index
    %9 = vector.load %arg4[%c0_6, %c0_7] : memref<128x128xbf16, #tpu.memory_space<vmem>>, vector<128x128xbf16>
    %c0_8 = arith.constant 0 : index
    %c0_9 = arith.constant 0 : index
    %10 = vector.load %arg5[%c0_8, %c0_9] : memref<1x128xf32, #tpu.memory_space<vmem>>, vector<1x128xf32>
    %cst_10 = arith.constant dense<0.000000e+00> : vector<512x128xf32>
    %11 = tpu.matmul %8, %9, %cst_10 {dimension_numbers = #tpu.dot_dimension_numbers<[1], [0], [0], [1], [0, 0, 1, 1], [], []>} : vector<512x128xbf16>, vector<128x128xbf16>, vector<512x128xf32> -> vector<512x128xf32>
    %12 = vector.broadcast %10 : vector<1x128xf32> to vector<512x128xf32>
    %13 = arith.addf %11, %12 : vector<512x128xf32>
    %cst_11 = arith.constant 0.000000e+00 : f32
    %14 = vector.broadcast %cst_11 : f32 to vector<512x128xf32>
    %15 = arith.maximumf %13, %14 : vector<512x128xf32>
    %16 = arith.truncf %15 : vector<512x128xf32> to vector<512x128xbf16>
    %c0_12 = arith.constant 0 : index
    %c0_13 = arith.constant 0 : index
    %17 = vector.load %arg6[%c0_12, %c0_13] : memref<128x128xbf16, #tpu.memory_space<vmem>>, vector<128x128xbf16>
    %c0_14 = arith.constant 0 : index
    %c0_15 = arith.constant 0 : index
    %18 = vector.load %arg7[%c0_14, %c0_15] : memref<1x128xf32, #tpu.memory_space<vmem>>, vector<1x128xf32>
    %cst_16 = arith.constant dense<0.000000e+00> : vector<512x128xf32>
    %19 = tpu.matmul %16, %17, %cst_16 {dimension_numbers = #tpu.dot_dimension_numbers<[1], [0], [0], [1], [0, 0, 1, 1], [], []>} : vector<512x128xbf16>, vector<128x128xbf16>, vector<512x128xf32> -> vector<512x128xf32>
    %20 = vector.broadcast %18 : vector<1x128xf32> to vector<512x128xf32>
    %21 = arith.addf %19, %20 : vector<512x128xf32>
    %cst_17 = arith.constant 0.000000e+00 : f32
    %22 = vector.broadcast %cst_17 : f32 to vector<512x128xf32>
    %23 = arith.maximumf %21, %22 : vector<512x128xf32>
    %24 = arith.truncf %23 : vector<512x128xf32> to vector<512x128xbf16>
    %c0_18 = arith.constant 0 : index
    %c0_19 = arith.constant 0 : index
    %25 = vector.load %arg8[%c0_18, %c0_19] : memref<128x128xbf16, #tpu.memory_space<vmem>>, vector<128x128xbf16>
    %c0_20 = arith.constant 0 : index
    %c0_21 = arith.constant 0 : index
    %26 = vector.load %arg9[%c0_20, %c0_21] : memref<1x128xf32, #tpu.memory_space<vmem>>, vector<1x128xf32>
    %cst_22 = arith.constant dense<0.000000e+00> : vector<512x128xf32>
    %27 = tpu.matmul %24, %25, %cst_22 {dimension_numbers = #tpu.dot_dimension_numbers<[1], [0], [0], [1], [0, 0, 1, 1], [], []>} : vector<512x128xbf16>, vector<128x128xbf16>, vector<512x128xf32> -> vector<512x128xf32>
    %28 = vector.broadcast %26 : vector<1x128xf32> to vector<512x128xf32>
    %29 = arith.addf %27, %28 : vector<512x128xf32>
    %cst_23 = arith.constant 0.000000e+00 : f32
    %30 = vector.broadcast %cst_23 : f32 to vector<512x128xf32>
    %31 = arith.maximumf %29, %30 : vector<512x128xf32>
    %32 = arith.truncf %31 : vector<512x128xf32> to vector<512x128xbf16>
    %c0_24 = arith.constant 0 : index
    %c0_25 = arith.constant 0 : index
    %33 = vector.load %arg10[%c0_24, %c0_25] : memref<128x128xbf16, #tpu.memory_space<vmem>>, vector<128x128xbf16>
    %c0_26 = arith.constant 0 : index
    %c0_27 = arith.constant 0 : index
    %34 = vector.load %arg11[%c0_26, %c0_27] : memref<1x128xf32, #tpu.memory_space<vmem>>, vector<1x128xf32>
    %cst_28 = arith.constant dense<0.000000e+00> : vector<512x128xf32>
    %35 = tpu.matmul %32, %33, %cst_28 {dimension_numbers = #tpu.dot_dimension_numbers<[1], [0], [0], [1], [0, 0, 1, 1], [], []>} : vector<512x128xbf16>, vector<128x128xbf16>, vector<512x128xf32> -> vector<512x128xf32>
    %36 = vector.broadcast %34 : vector<1x128xf32> to vector<512x128xf32>
    %37 = arith.addf %35, %36 : vector<512x128xf32>
    %38 = math.tanh %37 : vector<512x128xf32>
    %39 = arith.truncf %38 : vector<512x128xf32> to vector<512x128xbf16>
    %c0_29 = arith.constant 0 : index
    %c0_30 = arith.constant 0 : index
    %40 = vector.load %arg12[%c0_29, %c0_30] : memref<512x128xbf16, #tpu.memory_space<vmem>>, vector<512x128xbf16>
    tpu.vector_store %arg12[%c0_29, %c0_30], %39 {strides = array<i32>} : memref<512x128xbf16, #tpu.memory_space<vmem>>, vector<512x128xbf16>,
    return
  }
  func.func @transform_0(%arg0: i32) -> (i32, i32) {
    %c0_i32 = arith.constant 0 : i32
    %c0_i32_0 = arith.constant 0 : i32
    return %arg0, %c0_i32 : i32, i32
  }
  func.func @transform_1(%arg0: i32) -> (i32, i32) {
    %c0_i32 = arith.constant 0 : i32
    %c0_i32_0 = arith.constant 0 : i32
    %c0_i32_1 = arith.constant 0 : i32
    return %c0_i32, %c0_i32_0 : i32, i32
  }
  func.func @transform_2(%arg0: i32) -> (i32, i32) {
    %c0_i32 = arith.constant 0 : i32
    %c0_i32_0 = arith.constant 0 : i32
    %c0_i32_1 = arith.constant 0 : i32
    return %c0_i32, %c0_i32_0 : i32, i32
  }
  func.func @transform_3(%arg0: i32) -> (i32, i32) {
    %c0_i32 = arith.constant 0 : i32
    %c0_i32_0 = arith.constant 0 : i32
    %c0_i32_1 = arith.constant 0 : i32
    return %c0_i32, %c0_i32_0 : i32, i32
  }
  func.func @transform_4(%arg0: i32) -> (i32, i32) {
    %c0_i32 = arith.constant 0 : i32
    %c0_i32_0 = arith.constant 0 : i32
    %c0_i32_1 = arith.constant 0 : i32
    return %c0_i32, %c0_i32_0 : i32, i32
  }
  func.func @transform_5(%arg0: i32) -> (i32, i32) {
    %c0_i32 = arith.constant 0 : i32
    %c0_i32_0 = arith.constant 0 : i32
    %c0_i32_1 = arith.constant 0 : i32
    return %c0_i32, %c0_i32_0 : i32, i32
  }
  func.func @transform_6(%arg0: i32) -> (i32, i32) {
    %c0_i32 = arith.constant 0 : i32
    %c0_i32_0 = arith.constant 0 : i32
    %c0_i32_1 = arith.constant 0 : i32
    return %c0_i32, %c0_i32_0 : i32, i32
  }
  func.func @transform_7(%arg0: i32) -> (i32, i32) {
    %c0_i32 = arith.constant 0 : i32
    %c0_i32_0 = arith.constant 0 : i32
    %c0_i32_1 = arith.constant 0 : i32
    return %c0_i32, %c0_i32_0 : i32, i32
  }
  func.func @transform_8(%arg0: i32) -> (i32, i32) {
    %c0_i32 = arith.constant 0 : i32
    %c0_i32_0 = arith.constant 0 : i32
    %c0_i32_1 = arith.constant 0 : i32
    return %c0_i32, %c0_i32_0 : i32, i32
  }
  func.func @transform_9(%arg0: i32) -> (i32, i32) {
    %c0_i32 = arith.constant 0 : i32
    %c0_i32_0 = arith.constant 0 : i32
    %c0_i32_1 = arith.constant 0 : i32
    return %c0_i32, %c0_i32_0 : i32, i32
  }
  func.func @transform_10(%arg0: i32) -> (i32, i32) {
    %c0_i32 = arith.constant 0 : i32
    %c0_i32_0 = arith.constant 0 : i32
    %c0_i32_1 = arith.constant 0 : i32
    return %c0_i32, %c0_i32_0 : i32, i32
  }
  func.func @transform_11(%arg0: i32) -> (i32, i32) {
    %c0_i32 = arith.constant 0 : i32
    %c0_i32_0 = arith.constant 0 : i32
    return %arg0, %c0_i32 : i32, i32
  }
}

</mosaic_0001>

<llo_original>
// kernel: tpu_custom_call.1
$region0: #{tpu_custom_call.1}
  #allocation0 [shape = 'u32[]', space=smem, size = 0x4, offset = 0x4, fixed_abs, tag = 'smem constant byte address 0x4 - core index']
  #allocation1 [shape = 'u32[144,128]{1,0:T(1,128)}', space=vmem, size = 0x12000, scoped, tag = 'internal scratch']
  %s0 = inlined_call_operand.vmem [shape: f32[1024,8], index: 0, kind: input, shape index: {}]
  %s1 = inlined_call_operand.vmem [shape: f32[8,128], index: 1, kind: input, shape index: {}]
  %s2 = inlined_call_operand.vmem [shape: f32[1,128], index: 2, kind: input, shape index: {}]
  %s3 = inlined_call_operand.vmem [shape: bf16[128,128], index: 3, kind: input, shape index: {}]
  %s4 = inlined_call_operand.vmem [shape: f32[1,128], index: 4, kind: input, shape index: {}]
  %s5 = inlined_call_operand.vmem [shape: bf16[128,128], index: 5, kind: input, shape index: {}]
  %s6 = inlined_call_operand.vmem [shape: f32[1,128], index: 6, kind: input, shape index: {}]
  %s7 = inlined_call_operand.vmem [shape: bf16[128,128], index: 7, kind: input, shape index: {}]
  %s8 = inlined_call_operand.vmem [shape: f32[1,128], index: 8, kind: input, shape index: {}]
  %s9 = inlined_call_operand.vmem [shape: bf16[128,128], index: 9, kind: input, shape index: {}]
  %s10 = inlined_call_operand.vmem [shape: f32[1,128], index: 10, kind: input, shape index: {}]
  %s11 = inlined_call_operand.hbm [shape: bf16[1024,128], index: 11, kind: output, shape index: {}]
  %s12 = sld [smem:[#allocation0]]
  $region77: #{tpu_custom_call.1} parent=0
    _
  %s14 = ssub.s32 1, %s12
  %s15 = scalar_select 0, %s14, %s12
  $region1: #{tpu_custom_call.1} parent=0
    #allocation2 [shape = 'u8[262144]{0}', space=vmem, size = 0x40000, scoped, tag = 'output window, operand 0']
    #allocation3 [shape = 's32[2]{0}', space=sflag, size = 0x8, scoped, tag = 'scoped memory for tpu_custom_call.1']
    %16 = vsyncpa [#allocation3], 0
    %s17 = scalar_lea.sflag [#allocation3], 1
    %18 = vsyncpa %s17, 0
    loop: start=0, step=1, limit=4
    $region2: #{tpu_custom_call.1} parent=1 // loop_pre_header
      _
    $region3: #{tpu_custom_call.1} parent=1 // loop_header
      %s20 = sphi 0, %s24
      %p21 = scmp.ge.s32.totalorder %s20, 4
      %s30 = sphi 0, %s32
      %s33 = sphi 0, %s30
      %s34 = sphi 0, %s33
      %s50 = sphi 0, %s34
      %s54 = sphi 0, %s54
      %s56 = sphi 0, %s54
      %s57 = sphi 0, %s56
      %s71 = sphi 0, %s57
      %s75 = sphi 0, %s75
      %s77 = sphi 0, %s75
      %s78 = sphi 0, %s77
      %s92 = sphi 0, %s78
      %s96 = sphi 0, %s96
      %s98 = sphi 0, %s96
      %s99 = sphi 0, %s98
      %s113 = sphi 0, %s99
      %s117 = sphi 0, %s117
      %s119 = sphi 0, %s117
      %s120 = sphi 0, %s119
      %s134 = sphi 0, %s120
      %s138 = sphi 0, %s138
      %s140 = sphi 0, %s138
      %s141 = sphi 0, %s140
      %s155 = sphi 0, %s141
      %s159 = sphi 0, %s159
      %s161 = sphi 0, %s159
      %s162 = sphi 0, %s161
      %s176 = sphi 0, %s162
      %s180 = sphi 0, %s180
      %s182 = sphi 0, %s180
      %s183 = sphi 0, %s182
      %s197 = sphi 0, %s183
      %s201 = sphi 0, %s201
      %s203 = sphi 0, %s201
      %s204 = sphi 0, %s203
      %s218 = sphi 0, %s204
      %s222 = sphi 0, %s222
      %s224 = sphi 0, %s222
      %s225 = sphi 0, %s224
      %s239 = sphi 0, %s225
      %s243 = sphi 0, %s243
      %s245 = sphi 0, %s243
      %s246 = sphi 0, %s245
      %s260 = sphi 0, %s246
      %s266 = sphi 0, %s268
      %s269 = sphi 0, %s266
      %s270 = sphi 0, %s269
      %s286 = sphi 0, %s270
    $region4: #{tpu_custom_call.1} parent=1 // loop_header_branch
      %23 = sbr.rel (%p21) target = $region8
    $region5: #{tpu_custom_call.1} parent=1 // loop_body
      %s25 = ssub.s32 %s20, 1
      %s26 = ssub.s32 %s20, 2
      %s27 = sadd.s32 %s20, 1
      %s28 = ssub.s32 %s20, %s27
      %p29 = scmp.eq.s32.totalorder %s28, 0
      %s31 = sadd.s32 %s30, 1
      %s32 = scalar_select %p29, %s30, %s31
      %p35 = pneg %p29
      %p36 = scmp.eq.s32.totalorder %s20, 1
      %p37 = por %p35, %p36
      %p38 = scmp.ne.s32.totalorder %s30, %s33
      %p39 = scmp.eq.s32.totalorder %s20, 0
      %p40 = por %p38, %p39
      %p41 = scmp.ne.s32.totalorder %s30, %s33
      %p42 = scmp.eq.s32.totalorder %s25, 1
      %p43 = por %p41, %p42
      %p44 = scmp.ne.s32.totalorder %s33, %s34
      %p45 = scmp.eq.s32.totalorder %s25, 0
      %p46 = por %p44, %p45
      %p47 = scmp.ne.s32.totalorder %s33, %s34
      %p48 = scmp.eq.s32.totalorder %s26, 1
      %p49 = por %p47, %p48
      %p51 = scmp.ne.s32.totalorder %s34, %s50
      %p52 = scmp.eq.s32.totalorder %s26, 0
      %p53 = por %p51, %p52
      %s55 = sadd.s32 %s54, 1
      %p58 = scmp.eq.s32.totalorder %s20, 1
      %p59 = scmp.ne.s32.totalorder %s54, %s56
      %p60 = scmp.eq.s32.totalorder %s20, 0
      %p61 = por %p59, %p60
      %p62 = scmp.ne.s32.totalorder %s54, %s56
      %p63 = scmp.eq.s32.totalorder %s25, 1
      %p64 = por %p62, %p63
      %p65 = scmp.ne.s32.totalorder %s56, %s57
      %p66 = scmp.eq.s32.totalorder %s25, 0
      %p67 = por %p65, %p66
      %p68 = scmp.ne.s32.totalorder %s56, %s57
      %p69 = scmp.eq.s32.totalorder %s26, 1
      %p70 = por %p68, %p69
      %p72 = scmp.ne.s32.totalorder %s57, %s71
      %p73 = scmp.eq.s32.totalorder %s26, 0
      %p74 = por %p72, %p73
      %s76 = sadd.s32 %s75, 1
      %p79 = scmp.eq.s32.totalorder %s20, 1
      %p80 = scmp.ne.s32.totalorder %s75, %s77
      %p81 = scmp.eq.s32.totalorder %s20, 0
      %p82 = por %p80, %p81
      %p83 = scmp.ne.s32.totalorder %s75, %s77
      %p84 = scmp.eq.s32.totalorder %s25, 1
      %p85 = por %p83, %p84
      %p86 = scmp.ne.s32.totalorder %s77, %s78
      %p87 = scmp.eq.s32.totalorder %s25, 0
      %p88 = por %p86, %p87
      %p89 = scmp.ne.s32.totalorder %s77, %s78
      %p90 = scmp.eq.s32.totalorder %s26, 1
      %p91 = por %p89, %p90
      %p93 = scmp.ne.s32.totalorder %s78, %s92
      %p94 = scmp.eq.s32.totalorder %s26, 0
      %p95 = por %p93, %p94
      %s97 = sadd.s32 %s96, 1
      %p100 = scmp.eq.s32.totalorder %s20, 1
      %p101 = scmp.ne.s32.totalorder %s96, %s98
      %p102 = scmp.eq.s32.totalorder %s20, 0
      %p103 = por %p101, %p102
      %p104 = scmp.ne.s32.totalorder %s96, %s98
      %p105 = scmp.eq.s32.totalorder %s25, 1
      %p106 = por %p104, %p105
      %p107 = scmp.ne.s32.totalorder %s98, %s99
      %p108 = scmp.eq.s32.totalorder %s25, 0
      %p109 = por %p107, %p108
      %p110 = scmp.ne.s32.totalorder %s98, %s99
      %p111 = scmp.eq.s32.totalorder %s26, 1
      %p112 = por %p110, %p111
      %p114 = scmp.ne.s32.totalorder %s99, %s113
      %p115 = scmp.eq.s32.totalorder %s26, 0
      %p116 = por %p114, %p115
      %s118 = sadd.s32 %s117, 1
      %p121 = scmp.eq.s32.totalorder %s20, 1
      %p122 = scmp.ne.s32.totalorder %s117, %s119
      %p123 = scmp.eq.s32.totalorder %s20, 0
      %p124 = por %p122, %p123
      %p125 = scmp.ne.s32.totalorder %s117, %s119
      %p126 = scmp.eq.s32.totalorder %s25, 1
      %p127 = por %p125, %p126
      %p128 = scmp.ne.s32.totalorder %s119, %s120
      %p129 = scmp.eq.s32.totalorder %s25, 0
      %p130 = por %p128, %p129
      %p131 = scmp.ne.s32.totalorder %s119, %s120
      %p132 = scmp.eq.s32.totalorder %s26, 1
      %p133 = por %p131, %p132
      %p135 = scmp.ne.s32.totalorder %s120, %s134
      %p136 = scmp.eq.s32.totalorder %s26, 0
      %p137 = por %p135, %p136
      %s139 = sadd.s32 %s138, 1
      %p142 = scmp.eq.s32.totalorder %s20, 1
      %p143 = scmp.ne.s32.totalorder %s138, %s140
      %p144 = scmp.eq.s32.totalorder %s20, 0
      %p145 = por %p143, %p144
      %p146 = scmp.ne.s32.totalorder %s138, %s140
      %p147 = scmp.eq.s32.totalorder %s25, 1
      %p148 = por %p146, %p147
      %p149 = scmp.ne.s32.totalorder %s140, %s141
      %p150 = scmp.eq.s32.totalorder %s25, 0
      %p151 = por %p149, %p150
      %p152 = scmp.ne.s32.totalorder %s140, %s141
      %p153 = scmp.eq.s32.totalorder %s26, 1
      %p154 = por %p152, %p153
      %p156 = scmp.ne.s32.totalorder %s141, %s155
      %p157 = scmp.eq.s32.totalorder %s26, 0
      %p158 = por %p156, %p157
      %s160 = sadd.s32 %s159, 1
      %p163 = scmp.eq.s32.totalorder %s20, 1
      %p164 = scmp.ne.s32.totalorder %s159, %s161
      %p165 = scmp.eq.s32.totalorder %s20, 0
      %p166 = por %p164, %p165
      %p167 = scmp.ne.s32.totalorder %s159, %s161
      %p168 = scmp.eq.s32.totalorder %s25, 1
      %p169 = por %p167, %p168
      %p170 = scmp.ne.s32.totalorder %s161, %s162
      %p171 = scmp.eq.s32.totalorder %s25, 0
      %p172 = por %p170, %p171
      %p173 = scmp.ne.s32.totalorder %s161, %s162
      %p174 = scmp.eq.s32.totalorder %s26, 1
      %p175 = por %p173, %p174
      %p177 = scmp.ne.s32.totalorder %s162, %s176
      %p178 = scmp.eq.s32.totalorder %s26, 0
      %p179 = por %p177, %p178
      %s181 = sadd.s32 %s180, 1
      %p184 = scmp.eq.s32.totalorder %s20, 1
      %p185 = scmp.ne.s32.totalorder %s180, %s182
      %p186 = scmp.eq.s32.totalorder %s20, 0
      %p187 = por %p185, %p186
      %p188 = scmp.ne.s32.totalorder %s180, %s182
      %p189 = scmp.eq.s32.totalorder %s25, 1
      %p190 = por %p188, %p189
      %p191 = scmp.ne.s32.totalorder %s182, %s183
      %p192 = scmp.eq.s32.totalorder %s25, 0
      %p193 = por %p191, %p192
      %p194 = scmp.ne.s32.totalorder %s182, %s183
      %p195 = scmp.eq.s32.totalorder %s26, 1
      %p196 = por %p194, %p195
      %p198 = scmp.ne.s32.totalorder %s183, %s197
      %p199 = scmp.eq.s32.totalorder %s26, 0
      %p200 = por %p198, %p199
      %s202 = sadd.s32 %s201, 1
      %p205 = scmp.eq.s32.totalorder %s20, 1
      %p206 = scmp.ne.s32.totalorder %s201, %s203
      %p207 = scmp.eq.s32.totalorder %s20, 0
      %p208 = por %p206, %p207
      %p209 = scmp.ne.s32.totalorder %s201, %s203
      %p210 = scmp.eq.s32.totalorder %s25, 1
      %p211 = por %p209, %p210
      %p212 = scmp.ne.s32.totalorder %s203, %s204
      %p213 = scmp.eq.s32.totalorder %s25, 0
      %p214 = por %p212, %p213
      %p215 = scmp.ne.s32.totalorder %s203, %s204
      %p216 = scmp.eq.s32.totalorder %s26, 1
      %p217 = por %p215, %p216
      %p219 = scmp.ne.s32.totalorder %s204, %s218
      %p220 = scmp.eq.s32.totalorder %s26, 0
      %p221 = por %p219, %p220
      %s223 = sadd.s32 %s222, 1
      %p226 = scmp.eq.s32.totalorder %s20, 1
      %p227 = scmp.ne.s32.totalorder %s222, %s224
      %p228 = scmp.eq.s32.totalorder %s20, 0
      %p229 = por %p227, %p228
      %p230 = scmp.ne.s32.totalorder %s222, %s224
      %p231 = scmp.eq.s32.totalorder %s25, 1
      %p232 = por %p230, %p231
      %p233 = scmp.ne.s32.totalorder %s224, %s225
      %p234 = scmp.eq.s32.totalorder %s25, 0
      %p235 = por %p233, %p234
      %p236 = scmp.ne.s32.totalorder %s224, %s225
      %p237 = scmp.eq.s32.totalorder %s26, 1
      %p238 = por %p236, %p237
      %p240 = scmp.ne.s32.totalorder %s225, %s239
      %p241 = scmp.eq.s32.totalorder %s26, 0
      %p242 = por %p240, %p241
      %s244 = sadd.s32 %s243, 1
      %p247 = scmp.eq.s32.totalorder %s20, 1
      %p248 = scmp.ne.s32.totalorder %s243, %s245
      %p249 = scmp.eq.s32.totalorder %s20, 0
      %p250 = por %p248, %p249
      %p251 = scmp.ne.s32.totalorder %s243, %s245
      %p252 = scmp.eq.s32.totalorder %s25, 1
      %p253 = por %p251, %p252
      %p254 = scmp.ne.s32.totalorder %s245, %s246
      %p255 = scmp.eq.s32.totalorder %s25, 0
      %p256 = por %p254, %p255
      %p257 = scmp.ne.s32.totalorder %s245, %s246
      %p258 = scmp.eq.s32.totalorder %s26, 1
      %p259 = por %p257, %p258
      %p261 = scmp.ne.s32.totalorder %s246, %s260
      %p262 = scmp.eq.s32.totalorder %s26, 0
      %p263 = por %p261, %p262
      %s264 = ssub.s32 %s20, %s27
      %p265 = scmp.eq.s32.totalorder %s264, 0
      %s267 = sadd.s32 %s266, 1
      %s268 = scalar_select %p265, %s266, %s267
      %p271 = pneg %p265
      %p272 = scmp.eq.s32.totalorder %s20, 1
      %p273 = por %p271, %p272
      %p274 = scmp.ne.s32.totalorder %s266, %s269
      %p275 = scmp.eq.s32.totalorder %s20, 0
      %p276 = por %p274, %p275
      %p277 = scmp.ne.s32.totalorder %s266, %s269
      %p278 = scmp.eq.s32.totalorder %s25, 1
      %p279 = por %p277, %p278
      %p280 = scmp.ne.s32.totalorder %s269, %s270
      %p281 = scmp.eq.s32.totalorder %s25, 0
      %p282 = por %p280, %p281
      %p283 = scmp.ne.s32.totalorder %s269, %s270
      %p284 = scmp.eq.s32.totalorder %s26, 1
      %p285 = por %p283, %p284
      %p287 = scmp.ne.s32.totalorder %s270, %s286
      %p288 = scmp.eq.s32.totalorder %s26, 0
      %p289 = por %p287, %p288
      %p290 = scmp.le.s32.totalorder 1, %s20
      %p291 = scmp.lt.s32.totalorder %s20, 3
      %p292 = pnand %p290, %p291
      %p293 = pneg %p292
      // Predicated region
      $region9: #{tpu_custom_call.1} parent=5 // pred_check
        _
      $region10: #{tpu_custom_call.1} parent=5 // pred_check_branch
        %295 = sbr.rel (%p292) target = $region12
      $region11: #{tpu_custom_call.1} parent=5 // pred_region
        %s296 = ssub.s32 %s20, 1
        // Predicated region
        $region13: #{tpu_custom_call.1} parent=11 // pred_check
          %p297 = pneg %p67
        $region14: #{tpu_custom_call.1} parent=11 // pred_check_branch
          %299 = sbr.rel (%p297) target = $region16
        $region15: #{tpu_custom_call.1} parent=11 // pred_region
          _
        $region16: #{tpu_custom_call.1} parent=11 // pred_fallthru
          _
        // Predicated region
        $region17: #{tpu_custom_call.1} parent=11 // pred_check
          %p300 = pneg %p88
        $region18: #{tpu_custom_call.1} parent=11 // pred_check_branch
          %302 = sbr.rel (%p300) target = $region20
        $region19: #{tpu_custom_call.1} parent=11 // pred_region
          _
        $region20: #{tpu_custom_call.1} parent=11 // pred_fallthru
          _
        // Predicated region
        $region21: #{tpu_custom_call.1} parent=11 // pred_check
          %p303 = pneg %p109
        $region22: #{tpu_custom_call.1} parent=11 // pred_check_branch
          %305 = sbr.rel (%p303) target = $region24
        $region23: #{tpu_custom_call.1} parent=11 // pred_region
          _
        $region24: #{tpu_custom_call.1} parent=11 // pred_fallthru
          _
        // Predicated region
        $region25: #{tpu_custom_call.1} parent=11 // pred_check
          %p306 = pneg %p130
        $region26: #{tpu_custom_call.1} parent=11 // pred_check_branch
          %308 = sbr.rel (%p306) target = $region28
        $region27: #{tpu_custom_call.1} parent=11 // pred_region
          _
        $region28: #{tpu_custom_call.1} parent=11 // pred_fallthru
          _
        // Predicated region
        $region29: #{tpu_custom_call.1} parent=11 // pred_check
          %p309 = pneg %p151
        $region30: #{tpu_custom_call.1} parent=11 // pred_check_branch
          %311 = sbr.rel (%p309) target = $region32
        $region31: #{tpu_custom_call.1} parent=11 // pred_region
          _
        $region32: #{tpu_custom_call.1} parent=11 // pred_fallthru
          _
        // Predicated region
        $region33: #{tpu_custom_call.1} parent=11 // pred_check
          %p312 = pneg %p172
        $region34: #{tpu_custom_call.1} parent=11 // pred_check_branch
          %314 = sbr.rel (%p312) target = $region36
        $region35: #{tpu_custom_call.1} parent=11 // pred_region
          _
        $region36: #{tpu_custom_call.1} parent=11 // pred_fallthru
          _
        // Predicated region
        $region37: #{tpu_custom_call.1} parent=11 // pred_check
          %p315 = pneg %p193
        $region38: #{tpu_custom_call.1} parent=11 // pred_check_branch
          %317 = sbr.rel (%p315) target = $region40
        $region39: #{tpu_custom_call.1} parent=11 // pred_region
          _
        $region40: #{tpu_custom_call.1} parent=11 // pred_fallthru
          _
        // Predicated region
        $region41: #{tpu_custom_call.1} parent=11 // pred_check
          %p318 = pneg %p214
        $region42: #{tpu_custom_call.1} parent=11 // pred_check_branch
          %320 = sbr.rel (%p318) target = $region44
        $region43: #{tpu_custom_call.1} parent=11 // pred_region
          _
        $region44: #{tpu_custom_call.1} parent=11 // pred_fallthru
          _
        // Predicated region
        $region45: #{tpu_custom_call.1} parent=11 // pred_check
          %p321 = pneg %p235
        $region46: #{tpu_custom_call.1} parent=11 // pred_check_branch
          %323 = sbr.rel (%p321) target = $region48
        $region47: #{tpu_custom_call.1} parent=11 // pred_region
          _
        $region48: #{tpu_custom_call.1} parent=11 // pred_fallthru
          _
        // Predicated region
        $region49: #{tpu_custom_call.1} parent=11 // pred_check
          %p324 = pneg %p256
        $region50: #{tpu_custom_call.1} parent=11 // pred_check_branch
          %326 = sbr.rel (%p324) target = $region52
        $region51: #{tpu_custom_call.1} parent=11 // pred_region
          _
        $region52: #{tpu_custom_call.1} parent=11 // pred_fallthru
          _
      $region12: #{tpu_custom_call.1} parent=5 // pred_fallthru
        _
      %p327 = scmp.lt.s32.totalorder %s20, 2
      // Predicated region
      $region53: #{tpu_custom_call.1} parent=5 // pred_check
        %p328 = pneg %p327
      $region54: #{tpu_custom_call.1} parent=5 // pred_check_branch
        %330 = sbr.rel (%p328) target = $region56
      $region55: #{tpu_custom_call.1} parent=5 // pred_region
        // Predicated region
        $region57: #{tpu_custom_call.1} parent=55 // pred_check
          %p331 = pneg %p40
        $region58: #{tpu_custom_call.1} parent=55 // pred_check_branch
          %333 = sbr.rel (%p331) target = $region60
        $region59: #{tpu_custom_call.1} parent=55 // pred_region
          %s334 = smul.u32 64, %s20
          %p335 = scmp.lt.s32.totalorder %s334, 127
          %s336 = scalar_select %p335, %s334, 127
          %s337 = smul.addr %s336, 8
          %s338 = scalar_lea.vmem %s0, %s337
          %s339 = smul.u32 64, %s20
        $region60: #{tpu_custom_call.1} parent=55 // pred_fallthru
          _
      $region56: #{tpu_custom_call.1} parent=5 // pred_fallthru
        _
      %p340 = scmp.le.s32.totalorder 1, %s20
      %p341 = scmp.lt.s32.totalorder %s20, 3
      %p342 = pnand %p340, %p341
      %p343 = pneg %p342
      // Predicated region
      $region61: #{tpu_custom_call.1} parent=5 // pred_check
        _
      $region62: #{tpu_custom_call.1} parent=5 // pred_check_branch
        %345 = sbr.rel (%p342) target = $region64
      $region63: #{tpu_custom_call.1} parent=5 // pred_region
        %s346 = ssub.s32 %s20, 1
        %s347 = smul.u32 64, %s25
        %p348 = scmp.lt.s32.totalorder %s347, 127
        %s349 = scalar_select %p348, %s347, 127
        %s350 = smul.addr %s349, 8
        %s351 = scalar_lea.vmem %s0, %s350
        %p352 = pneg %p46
        %p353 = pneg %p43
        %p354 = pneg %p67
        %p355 = pneg %p64
        %p356 = pneg %p88
        %p357 = pneg %p85
        %p358 = pneg %p109
        %p359 = pneg %p106
        %p360 = pneg %p130
        %p361 = pneg %p127
        %p362 = pneg %p151
        %p363 = pneg %p148
        %p364 = pneg %p172
        %p365 = pneg %p169
        %p366 = pneg %p193
        %p367 = pneg %p190
        %p368 = pneg %p214
        %p369 = pneg %p211
        %p370 = pneg %p235
        %p371 = pneg %p232
        %p372 = pneg %p256
        %p373 = pneg %p253
        %p374 = pneg %p282
        %p375 = pneg %p279
        %s376 = sand.u32 %s269, 1
        %s377 = scalar_lea.sflag [#allocation3], %s376
        %s378 = sand.u32 %s269, 1
        %s379 = smul.addr %s378, 256
        %s380 = scalar_lea.vmem [#allocation2], %s379
        %s381 = smul.u32 64, %s25
        %p382 = scmp.lt.s32.totalorder %s381, 127
        %s383 = scalar_select %p382, %s381, 127
        %s384 = smul.addr %s383, 8
        %s385 = scalar_lea.vmem %s0, %s384
        %s386 = smul.u32 64, %s25
        %s387 = smul.u32 64, %s25
        %v389 = vld [vmem:[%s385] sm:$0xff]
        %v390 = vld [vmem:[%s385 + $0x8] sm:$0xff]
        %v391 = vld [vmem:[%s385 + $0x10] sm:$0xff]
        %v392 = vld [vmem:[%s385 + $0x18] sm:$0xff]
        %v393 = vld [vmem:[%s385 + $0x20] sm:$0xff]
        %v394 = vld [vmem:[%s385 + $0x28] sm:$0xff]
        %v395 = vld [vmem:[%s385 + $0x30] sm:$0xff]
        %v396 = vld [vmem:[%s385 + $0x38] sm:$0xff]
        %v397 = vld [vmem:[%s385 + $0x40] sm:$0xff]
        %v398 = vld [vmem:[%s385 + $0x48] sm:$0xff]
        %v399 = vld [vmem:[%s385 + $0x50] sm:$0xff]
        %v400 = vld [vmem:[%s385 + $0x58] sm:$0xff]
        %v401 = vld [vmem:[%s385 + $0x60] sm:$0xff]
        %v402 = vld [vmem:[%s385 + $0x68] sm:$0xff]
        %v403 = vld [vmem:[%s385 + $0x70] sm:$0xff]
        %v404 = vld [vmem:[%s385 + $0x78] sm:$0xff]
        %v405 = vld [vmem:[%s385 + $0x80] sm:$0xff]
        %v406 = vld [vmem:[%s385 + $0x88] sm:$0xff]
        %v407 = vld [vmem:[%s385 + $0x90] sm:$0xff]
        %v408 = vld [vmem:[%s385 + $0x98] sm:$0xff]
        %v409 = vld [vmem:[%s385 + $0xa0] sm:$0xff]
        %v410 = vld [vmem:[%s385 + $0xa8] sm:$0xff]
        %v411 = vld [vmem:[%s385 + $0xb0] sm:$0xff]
        %v412 = vld [vmem:[%s385 + $0xb8] sm:$0xff]
        %v413 = vld [vmem:[%s385 + $0xc0] sm:$0xff]
        %v414 = vld [vmem:[%s385 + $0xc8] sm:$0xff]
        %v415 = vld [vmem:[%s385 + $0xd0] sm:$0xff]
        %v416 = vld [vmem:[%s385 + $0xd8] sm:$0xff]
        %v417 = vld [vmem:[%s385 + $0xe0] sm:$0xff]
        %v418 = vld [vmem:[%s385 + $0xe8] sm:$0xff]
        %v419 = vld [vmem:[%s385 + $0xf0] sm:$0xff]
        %v420 = vld [vmem:[%s385 + $0xf8] sm:$0xff]
        %v421 = vld [vmem:[%s385 + $0x100] sm:$0xff]
        %v422 = vld [vmem:[%s385 + $0x108] sm:$0xff]
        %v423 = vld [vmem:[%s385 + $0x110] sm:$0xff]
        %v424 = vld [vmem:[%s385 + $0x118] sm:$0xff]
        %v425 = vld [vmem:[%s385 + $0x120] sm:$0xff]
        %v426 = vld [vmem:[%s385 + $0x128] sm:$0xff]
        %v427 = vld [vmem:[%s385 + $0x130] sm:$0xff]
        %v428 = vld [vmem:[%s385 + $0x138] sm:$0xff]
        %v429 = vld [vmem:[%s385 + $0x140] sm:$0xff]
        %v430 = vld [vmem:[%s385 + $0x148] sm:$0xff]
        %v431 = vld [vmem:[%s385 + $0x150] sm:$0xff]
        %v432 = vld [vmem:[%s385 + $0x158] sm:$0xff]
        %v433 = vld [vmem:[%s385 + $0x160] sm:$0xff]
        %v434 = vld [vmem:[%s385 + $0x168] sm:$0xff]
        %v435 = vld [vmem:[%s385 + $0x170] sm:$0xff]
        %v436 = vld [vmem:[%s385 + $0x178] sm:$0xff]
        %v437 = vld [vmem:[%s385 + $0x180] sm:$0xff]
        %v438 = vld [vmem:[%s385 + $0x188] sm:$0xff]
        %v439 = vld [vmem:[%s385 + $0x190] sm:$0xff]
        %v440 = vld [vmem:[%s385 + $0x198] sm:$0xff]
        %v441 = vld [vmem:[%s385 + $0x1a0] sm:$0xff]
        %v442 = vld [vmem:[%s385 + $0x1a8] sm:$0xff]
        %v443 = vld [vmem:[%s385 + $0x1b0] sm:$0xff]
        %v444 = vld [vmem:[%s385 + $0x1b8] sm:$0xff]
        %v445 = vld [vmem:[%s385 + $0x1c0] sm:$0xff]
        %v446 = vld [vmem:[%s385 + $0x1c8] sm:$0xff]
        %v447 = vld [vmem:[%s385 + $0x1d0] sm:$0xff]
        %v448 = vld [vmem:[%s385 + $0x1d8] sm:$0xff]
        %v449 = vld [vmem:[%s385 + $0x1e0] sm:$0xff]
        %v450 = vld [vmem:[%s385 + $0x1e8] sm:$0xff]
        %v451 = vld [vmem:[%s385 + $0x1f0] sm:$0xff]
        %v452 = vld [vmem:[%s385 + $0x1f8] sm:$0xff]
        %v453 = vld [vmem:[%s1] sm:$0xff]
        %v454 = vld [vmem:[%s2] sm:$0x1]
        %v456 = vlaneseq
        %v457 = vshrl.u32 %v456, 7
        %v458 = vsub.s32 0, %v457
        %v459 = vrot.slane %v454, %v458
        %vm461 = vcmask 64512
        %v463 = vsel %vm461, %v389, 0
        %v466 = vsel %vm461, %v390, 0
        %v469 = vsel %vm461, %v391, 0
        %v472 = vsel %vm461, %v392, 0
        %v475 = vsel %vm461, %v393, 0
        %v478 = vsel %vm461, %v394, 0
        %v481 = vsel %vm461, %v395, 0
        %v484 = vsel %vm461, %v396, 0
        %v487 = vsel %vm461, %v397, 0
        %v490 = vsel %vm461, %v398, 0
        %v493 = vsel %vm461, %v399, 0
        %v496 = vsel %vm461, %v400, 0
        %v499 = vsel %vm461, %v401, 0
        %v502 = vsel %vm461, %v402, 0
        %v505 = vsel %vm461, %v403, 0
        %v508 = vsel %vm461, %v404, 0
        %v511 = vsel %vm461, %v405, 0
        %v514 = vsel %vm461, %v406, 0
        %v517 = vsel %vm461, %v407, 0
        %v520 = vsel %vm461, %v408, 0
        %v523 = vsel %vm461, %v409, 0
        %v526 = vsel %vm461, %v410, 0
        %v529 = vsel %vm461, %v411, 0
        %v532 = vsel %vm461, %v412, 0
        %v535 = vsel %vm461, %v413, 0
        %v538 = vsel %vm461, %v414, 0
        %v541 = vsel %vm461, %v415, 0
        %v544 = vsel %vm461, %v416, 0
        %v547 = vsel %vm461, %v417, 0
        %v550 = vsel %vm461, %v418, 0
        %v553 = vsel %vm461, %v419, 0
        %v556 = vsel %vm461, %v420, 0
        %v559 = vsel %vm461, %v421, 0
        %v562 = vsel %vm461, %v422, 0
        %v565 = vsel %vm461, %v423, 0
        %v568 = vsel %vm461, %v424, 0
        %v571 = vsel %vm461, %v425, 0
        %v574 = vsel %vm461, %v426, 0
        %v577 = vsel %vm461, %v427, 0
        %v580 = vsel %vm461, %v428, 0
        %v583 = vsel %vm461, %v429, 0
        %v586 = vsel %vm461, %v430, 0
        %v589 = vsel %vm461, %v431, 0
        %v592 = vsel %vm461, %v432, 0
        %v595 = vsel %vm461, %v433, 0
        %v598 = vsel %vm461, %v434, 0
        %v601 = vsel %vm461, %v435, 0
        %v604 = vsel %vm461, %v436, 0
        %v607 = vsel %vm461, %v437, 0
        %v610 = vsel %vm461, %v438, 0
        %v613 = vsel %vm461, %v439, 0
        %v616 = vsel %vm461, %v440, 0
        %v619 = vsel %vm461, %v441, 0
        %v622 = vsel %vm461, %v442, 0
        %v625 = vsel %vm461, %v443, 0
        %v628 = vsel %vm461, %v444, 0
        %v631 = vsel %vm461, %v445, 0
        %v634 = vsel %vm461, %v446, 0
        %v637 = vsel %vm461, %v447, 0
        %v640 = vsel %vm461, %v448, 0
        %v643 = vsel %vm461, %v449, 0
        %v646 = vsel %vm461, %v450, 0
        %v649 = vsel %vm461, %v451, 0
        %v652 = vsel %vm461, %v452, 0
        %654 = vmatprep.subr.mxu0 0.0
        %655 = vmatpush1.msra.mxu0 %v453
        %656 = vmatprep.subr.mxu0 0.0
        %657 = vmatpush1.msra.mxu0 0.0
        %658 = vmatprep.subr.mxu0 0.0
        %659 = vmatpush1.msra.mxu0 0.0
        %660 = vmatprep.subr.mxu0 0.0
        %661 = vmatpush1.msra.mxu0 0.0
        %662 = vmatprep.subr.mxu0 0.0
        %663 = vmatpush1.msra.mxu0 0.0
        %664 = vmatprep.subr.mxu0 0.0
        %665 = vmatpush1.msra.mxu0 0.0
        %666 = vmatprep.subr.mxu0 0.0
        %667 = vmatpush1.msra.mxu0 0.0
        %668 = vmatprep.subr.mxu0 0.0
        %669 = vmatpush1.msra.mxu0 0.0
        %670 = vmatprep.subr.mxu0 0.0
        %671 = vmatpush1.msra.mxu0 0.0
        %672 = vmatprep.subr.mxu0 0.0
        %673 = vmatpush1.msra.mxu0 0.0
        %674 = vmatprep.subr.mxu0 0.0
        %675 = vmatpush1.msra.mxu0 0.0
        %676 = vmatprep.subr.mxu0 0.0
        %677 = vmatpush1.msra.mxu0 0.0
        %678 = vmatprep.subr.mxu0 0.0
        %679 = vmatpush1.msra.mxu0 0.0
        %680 = vmatprep.subr.mxu0 0.0
        %681 = vmatpush1.msra.mxu0 0.0
        %682 = vmatprep.subr.mxu0 0.0
        %683 = vmatpush1.msra.mxu0 0.0
        %684 = vmatprep.subr.mxu0 0.0
        %685 = vmatpush1.msra.mxu0 0.0
        %686 = vmatprep.subr.mxu0 0.0
        %687 = vmatpush1.msra.mxu0 0.0
        %688 = vmatprep.subr.mxu0 0.0
        %689 = vmatpush1.msra.mxu0 0.0
        %690 = vmatprep.subr.mxu0 0.0
        %691 = vmatpush1.msra.mxu0 0.0
        %692 = vmatprep.subr.mxu0 0.0
        %693 = vmatpush1.msra.mxu0 0.0
        %694 = vmatprep.subr.mxu0 0.0
        %695 = vmatpush1.msra.mxu0 0.0
        %696 = vmatprep.subr.mxu0 0.0
        %697 = vmatpush1.msra.mxu0 0.0
        %698 = vmatprep.subr.mxu0 0.0
        %699 = vmatpush1.msra.mxu0 0.0
        %700 = vmatprep.subr.mxu0 0.0
        %701 = vmatpush1.msra.mxu0 0.0
        %702 = vmatprep.subr.mxu0 0.0
        %703 = vmatpush1.msra.mxu0 0.0
        %704 = vmatprep.subr.mxu0 0.0
        %705 = vmatpush1.msra.mxu0 0.0
        %706 = vmatprep.subr.mxu0 0.0
        %707 = vmatpush1.msra.mxu0 0.0
        %708 = vmatprep.subr.mxu0 0.0
        %709 = vmatpush1.msra.mxu0 0.0
        %710 = vmatprep.subr.mxu0 0.0
        %711 = vmatpush1.msra.mxu0 0.0
        %712 = vmatprep.subr.mxu0 0.0
        %713 = vmatpush1.msra.mxu0 0.0
        %714 = vmatprep.subr.mxu0 0.0
        %715 = vmatpush1.msra.mxu0 0.0
        %716 = vmatprep.subr.mxu0 0.0
        %717 = vmatpush1.msra.mxu0 0.0
        %718 = vmatprep.mubr.f32.mxu0 0.0
        %719 = vmatmul.mubr.f32.gmra.mrb[0].mxu0 %v463
        %v720 = vpop.f32.mrb[0].mxu0
        %v721 = vadd.f32 %v459, %v720
        %v722 = vpop.f32.mrb[0].mxu0
        %723 = vmatprep.mubr.f32.mxu0 0.0
        %724 = vmatmul.mubr.f32.gmra.mrb[0].mxu0 %v466
        %v725 = vpop.f32.mrb[0].mxu0
        %v726 = vadd.f32 %v459, %v725
        %v727 = vpop.f32.mrb[0].mxu0
        %728 = vmatprep.mubr.f32.mxu0 0.0
        %729 = vmatmul.mubr.f32.gmra.mrb[0].mxu0 %v469
        %v730 = vpop.f32.mrb[0].mxu0
        %v731 = vadd.f32 %v459, %v730
        %v732 = vpop.f32.mrb[0].mxu0
        %733 = vmatprep.mubr.f32.mxu0 0.0
        %734 = vmatmul.mubr.f32.gmra.mrb[0].mxu0 %v472
        %v735 = vpop.f32.mrb[0].mxu0
        %v736 = vadd.f32 %v459, %v735
        %v737 = vpop.f32.mrb[0].mxu0
        %738 = vmatprep.mubr.f32.mxu0 0.0
        %739 = vmatmul.mubr.f32.gmra.mrb[0].mxu0 %v475
        %v740 = vpop.f32.mrb[0].mxu0
        %v741 = vadd.f32 %v459, %v740
        %v742 = vpop.f32.mrb[0].mxu0
        %743 = vmatprep.mubr.f32.mxu0 0.0
        %744 = vmatmul.mubr.f32.gmra.mrb[0].mxu0 %v478
        %v745 = vpop.f32.mrb[0].mxu0
        %v746 = vadd.f32 %v459, %v745
        %v747 = vpop.f32.mrb[0].mxu0
        %748 = vmatprep.mubr.f32.mxu0 0.0
        %749 = vmatmul.mubr.f32.gmra.mrb[0].mxu0 %v481
        %v750 = vpop.f32.mrb[0].mxu0
        %v751 = vadd.f32 %v459, %v750
        %v752 = vpop.f32.mrb[0].mxu0
        %753 = vmatprep.mubr.f32.mxu0 0.0
        %754 = vmatmul.mubr.f32.gmra.mrb[0].mxu0 %v484
        %v755 = vpop.f32.mrb[0].mxu0
        %v756 = vadd.f32 %v459, %v755
        %v757 = vpop.f32.mrb[0].mxu0
        %758 = vmatprep.mubr.f32.mxu0 0.0
        %759 = vmatmul.mubr.f32.gmra.mrb[0].mxu0 %v487
        %v760 = vpop.f32.mrb[0].mxu0
        %v761 = vadd.f32 %v459, %v760
        %v762 = vpop.f32.mrb[0].mxu0
        %763 = vmatprep.mubr.f32.mxu0 0.0
        %764 = vmatmul.mubr.f32.gmra.mrb[0].mxu0 %v490
        %v765 = vpop.f32.mrb[0].mxu0
        %v766 = vadd.f32 %v459, %v765
        %v767 = vpop.f32.mrb[0].mxu0
        %768 = vmatprep.mubr.f32.mxu0 0.0
        %769 = vmatmul.mubr.f32.gmra.mrb[0].mxu0 %v493
        %v770 = vpop.f32.mrb[0].mxu0
        %v771 = vadd.f32 %v459, %v770
        %v772 = vpop.f32.mrb[0].mxu0
        %773 = vmatprep.mubr.f32.mxu0 0.0
        %774 = vmatmul.mubr.f32.gmra.mrb[0].mxu0 %v496
        %v775 = vpop.f32.mrb[0].mxu0
        %v776 = vadd.f32 %v459, %v775
        %v777 = vpop.f32.mrb[0].mxu0
        %778 = vmatprep.mubr.f32.mxu0 0.0
        %779 = vmatmul.mubr.f32.gmra.mrb[0].mxu0 %v499
        %v780 = vpop.f32.mrb[0].mxu0
        %v781 = vadd.f32 %v459, %v780
        %v782 = vpop.f32.mrb[0].mxu0
        %783 = vmatprep.mubr.f32.mxu0 0.0
        %784 = vmatmul.mubr.f32.gmra.mrb[0].mxu0 %v502
        %v785 = vpop.f32.mrb[0].mxu0
        %v786 = vadd.f32 %v459, %v785
        %v787 = vpop.f32.mrb[0].mxu0
        %788 = vmatprep.mubr.f32.mxu0 0.0
        %789 = vmatmul.mubr.f32.gmra.mrb[0].mxu0 %v505
        %v790 = vpop.f32.mrb[0].mxu0
        %v791 = vadd.f32 %v459, %v790
        %v792 = vpop.f32.mrb[0].mxu0
        %793 = vmatprep.mubr.f32.mxu0 0.0
        %794 = vmatmul.mubr.f32.gmra.mrb[0].mxu0 %v508
        %v795 = vpop.f32.mrb[0].mxu0
        %v796 = vadd.f32 %v459, %v795
        %v797 = vpop.f32.mrb[0].mxu0
        %798 = vmatprep.mubr.f32.mxu0 0.0
        %799 = vmatmul.mubr.f32.gmra.mrb[0].mxu0 %v511
        %v800 = vpop.f32.mrb[0].mxu0
        %v801 = vadd.f32 %v459, %v800
        %v802 = vpop.f32.mrb[0].mxu0
        %803 = vmatprep.mubr.f32.mxu0 0.0
        %804 = vmatmul.mubr.f32.gmra.mrb[0].mxu0 %v514
        %v805 = vpop.f32.mrb[0].mxu0
        %v806 = vadd.f32 %v459, %v805
        %v807 = vpop.f32.mrb[0].mxu0
        %808 = vmatprep.mubr.f32.mxu0 0.0
        %809 = vmatmul.mubr.f32.gmra.mrb[0].mxu0 %v517
        %v810 = vpop.f32.mrb[0].mxu0
        %v811 = vadd.f32 %v459, %v810
        %v812 = vpop.f32.mrb[0].mxu0
        %813 = vmatprep.mubr.f32.mxu0 0.0
        %814 = vmatmul.mubr.f32.gmra.mrb[0].mxu0 %v520
        %v815 = vpop.f32.mrb[0].mxu0
        %v816 = vadd.f32 %v459, %v815
        %v817 = vpop.f32.mrb[0].mxu0
        %818 = vmatprep.mubr.f32.mxu0 0.0
        %819 = vmatmul.mubr.f32.gmra.mrb[0].mxu0 %v523
        %v820 = vpop.f32.mrb[0].mxu0
        %v821 = vadd.f32 %v459, %v820
        %v822 = vpop.f32.mrb[0].mxu0
        %823 = vmatprep.mubr.f32.mxu0 0.0
        %824 = vmatmul.mubr.f32.gmra.mrb[0].mxu0 %v526
        %v825 = vpop.f32.mrb[0].mxu0
        %v826 = vadd.f32 %v459, %v825
        %v827 = vpop.f32.mrb[0].mxu0
        %828 = vmatprep.mubr.f32.mxu0 0.0
        %829 = vmatmul.mubr.f32.gmra.mrb[0].mxu0 %v529
        %v830 = vpop.f32.mrb[0].mxu0
        %v831 = vadd.f32 %v459, %v830
        %v832 = vpop.f32.mrb[0].mxu0
        %833 = vmatprep.mubr.f32.mxu0 0.0
        %834 = vmatmul.mubr.f32.gmra.mrb[0].mxu0 %v532
        %v835 = vpop.f32.mrb[0].mxu0
        %v836 = vadd.f32 %v459, %v835
        %v837 = vpop.f32.mrb[0].mxu0
        %838 = vmatprep.mubr.f32.mxu0 0.0
        %839 = vmatmul.mubr.f32.gmra.mrb[0].mxu0 %v535
        %v840 = vpop.f32.mrb[0].mxu0
        %v841 = vadd.f32 %v459, %v840
        %v842 = vpop.f32.mrb[0].mxu0
        %843 = vmatprep.mubr.f32.mxu0 0.0
        %844 = vmatmul.mubr.f32.gmra.mrb[0].mxu0 %v538
        %v845 = vpop.f32.mrb[0].mxu0
        %v846 = vadd.f32 %v459, %v845
        %v847 = vpop.f32.mrb[0].mxu0
        %848 = vmatprep.mubr.f32.mxu0 0.0
        %849 = vmatmul.mubr.f32.gmra.mrb[0].mxu0 %v541
        %v850 = vpop.f32.mrb[0].mxu0
        %v851 = vadd.f32 %v459, %v850
        %v852 = vpop.f32.mrb[0].mxu0
        %853 = vmatprep.mubr.f32.mxu0 0.0
        %854 = vmatmul.mubr.f32.gmra.mrb[0].mxu0 %v544
        %v855 = vpop.f32.mrb[0].mxu0
        %v856 = vadd.f32 %v459, %v855
        %v857 = vpop.f32.mrb[0].mxu0
        %858 = vmatprep.mubr.f32.mxu0 0.0
        %859 = vmatmul.mubr.f32.gmra.mrb[0].mxu0 %v547
        %v860 = vpop.f32.mrb[0].mxu0
        %v861 = vadd.f32 %v459, %v860
        %v862 = vpop.f32.mrb[0].mxu0
        %863 = vmatprep.mubr.f32.mxu0 0.0
        %864 = vmatmul.mubr.f32.gmra.mrb[0].mxu0 %v550
        %v865 = vpop.f32.mrb[0].mxu0
        %v866 = vadd.f32 %v459, %v865
        %v867 = vpop.f32.mrb[0].mxu0
        %868 = vmatprep.mubr.f32.mxu0 0.0
        %869 = vmatmul.mubr.f32.gmra.mrb[0].mxu0 %v553
        %v870 = vpop.f32.mrb[0].mxu0
        %v871 = vadd.f32 %v459, %v870
        %v872 = vpop.f32.mrb[0].mxu0
        %873 = vmatprep.mubr.f32.mxu0 0.0
        %874 = vmatmul.mubr.f32.gmra.mrb[0].mxu0 %v556
        %v875 = vpop.f32.mrb[0].mxu0
        %v876 = vadd.f32 %v459, %v875
        %v877 = vpop.f32.mrb[0].mxu0
        %878 = vmatprep.mubr.f32.mxu0 0.0
        %879 = vmatmul.mubr.f32.gmra.mrb[0].mxu0 %v559
        %v880 = vpop.f32.mrb[0].mxu0
        %v881 = vadd.f32 %v459, %v880
        %v882 = vpop.f32.mrb[0].mxu0
        %883 = vmatprep.mubr.f32.mxu0 0.0
        %884 = vmatmul.mubr.f32.gmra.mrb[0].mxu0 %v562
        %v885 = vpop.f32.mrb[0].mxu0
        %v886 = vadd.f32 %v459, %v885
        %v887 = vpop.f32.mrb[0].mxu0
        %888 = vmatprep.mubr.f32.mxu0 0.0
        %889 = vmatmul.mubr.f32.gmra.mrb[0].mxu0 %v565
        %v890 = vpop.f32.mrb[0].mxu0
        %v891 = vadd.f32 %v459, %v890
        %v892 = vpop.f32.mrb[0].mxu0
        %893 = vmatprep.mubr.f32.mxu0 0.0
        %894 = vmatmul.mubr.f32.gmra.mrb[0].mxu0 %v568
        %v895 = vpop.f32.mrb[0].mxu0
        %v896 = vadd.f32 %v459, %v895
        %v897 = vpop.f32.mrb[0].mxu0
        %898 = vmatprep.mubr.f32.mxu0 0.0
        %899 = vmatmul.mubr.f32.gmra.mrb[0].mxu0 %v571
        %v900 = vpop.f32.mrb[0].mxu0
        %v901 = vadd.f32 %v459, %v900
        %v902 = vpop.f32.mrb[0].mxu0
        %903 = vmatprep.mubr.f32.mxu0 0.0
        %904 = vmatmul.mubr.f32.gmra.mrb[0].mxu0 %v574
        %v905 = vpop.f32.mrb[0].mxu0
        %v906 = vadd.f32 %v459, %v905
        %v907 = vpop.f32.mrb[0].mxu0
        %908 = vmatprep.mubr.f32.mxu0 0.0
        %909 = vmatmul.mubr.f32.gmra.mrb[0].mxu0 %v577
        %v910 = vpop.f32.mrb[0].mxu0
        %v911 = vadd.f32 %v459, %v910
        %v912 = vpop.f32.mrb[0].mxu0
        %913 = vmatprep.mubr.f32.mxu0 0.0
        %914 = vmatmul.mubr.f32.gmra.mrb[0].mxu0 %v580
        %v915 = vpop.f32.mrb[0].mxu0
        %v916 = vadd.f32 %v459, %v915
        %v917 = vpop.f32.mrb[0].mxu0
        %918 = vmatprep.mubr.f32.mxu0 0.0
        %919 = vmatmul.mubr.f32.gmra.mrb[0].mxu0 %v583
        %v920 = vpop.f32.mrb[0].mxu0
        %v921 = vadd.f32 %v459, %v920
        %v922 = vpop.f32.mrb[0].mxu0
        %923 = vmatprep.mubr.f32.mxu0 0.0
        %924 = vmatmul.mubr.f32.gmra.mrb[0].mxu0 %v586
        %v925 = vpop.f32.mrb[0].mxu0
        %v926 = vadd.f32 %v459, %v925
        %v927 = vpop.f32.mrb[0].mxu0
        %928 = vmatprep.mubr.f32.mxu0 0.0
        %929 = vmatmul.mubr.f32.gmra.mrb[0].mxu0 %v589
        %v930 = vpop.f32.mrb[0].mxu0
        %v931 = vadd.f32 %v459, %v930
        %v932 = vpop.f32.mrb[0].mxu0
        %933 = vmatprep.mubr.f32.mxu0 0.0
        %934 = vmatmul.mubr.f32.gmra.mrb[0].mxu0 %v592
        %v935 = vpop.f32.mrb[0].mxu0
        %v936 = vadd.f32 %v459, %v935
        %v937 = vpop.f32.mrb[0].mxu0
        %938 = vmatprep.mubr.f32.mxu0 0.0
        %939 = vmatmul.mubr.f32.gmra.mrb[0].mxu0 %v595
        %v940 = vpop.f32.mrb[0].mxu0
        %v941 = vadd.f32 %v459, %v940
        %v942 = vpop.f32.mrb[0].mxu0
        %943 = vmatprep.mubr.f32.mxu0 0.0
        %944 = vmatmul.mubr.f32.gmra.mrb[0].mxu0 %v598
        %v945 = vpop.f32.mrb[0].mxu0
        %v946 = vadd.f32 %v459, %v945
        %v947 = vpop.f32.mrb[0].mxu0
        %948 = vmatprep.mubr.f32.mxu0 0.0
        %949 = vmatmul.mubr.f32.gmra.mrb[0].mxu0 %v601
        %v950 = vpop.f32.mrb[0].mxu0
        %v951 = vadd.f32 %v459, %v950
        %v952 = vpop.f32.mrb[0].mxu0
        %953 = vmatprep.mubr.f32.mxu0 0.0
        %954 = vmatmul.mubr.f32.gmra.mrb[0].mxu0 %v604
        %v955 = vpop.f32.mrb[0].mxu0
        %v956 = vadd.f32 %v459, %v955
        %v957 = vpop.f32.mrb[0].mxu0
        %958 = vmatprep.mubr.f32.mxu0 0.0
        %959 = vmatmul.mubr.f32.gmra.mrb[0].mxu0 %v607
        %v960 = vpop.f32.mrb[0].mxu0
        %v961 = vadd.f32 %v459, %v960
        %v962 = vpop.f32.mrb[0].mxu0
        %963 = vmatprep.mubr.f32.mxu0 0.0
        %964 = vmatmul.mubr.f32.gmra.mrb[0].mxu0 %v610
        %v965 = vpop.f32.mrb[0].mxu0
        %v966 = vadd.f32 %v459, %v965
        %v967 = vpop.f32.mrb[0].mxu0
        %968 = vmatprep.mubr.f32.mxu0 0.0
        %969 = vmatmul.mubr.f32.gmra.mrb[0].mxu0 %v613
        %v970 = vpop.f32.mrb[0].mxu0
        %v971 = vadd.f32 %v459, %v970
        %v972 = vpop.f32.mrb[0].mxu0
        %973 = vmatprep.mubr.f32.mxu0 0.0
        %974 = vmatmul.mubr.f32.gmra.mrb[0].mxu0 %v616
        %v975 = vpop.f32.mrb[0].mxu0
        %v976 = vadd.f32 %v459, %v975
        %v977 = vpop.f32.mrb[0].mxu0
        %978 = vmatprep.mubr.f32.mxu0 0.0
        %979 = vmatmul.mubr.f32.gmra.mrb[0].mxu0 %v619
        %v980 = vpop.f32.mrb[0].mxu0
        %v981 = vadd.f32 %v459, %v980
        %v982 = vpop.f32.mrb[0].mxu0
        %983 = vmatprep.mubr.f32.mxu0 0.0
        %984 = vmatmul.mubr.f32.gmra.mrb[0].mxu0 %v622
        %v985 = vpop.f32.mrb[0].mxu0
        %v986 = vadd.f32 %v459, %v985
        %v987 = vpop.f32.mrb[0].mxu0
        %988 = vmatprep.mubr.f32.mxu0 0.0
        %989 = vmatmul.mubr.f32.gmra.mrb[0].mxu0 %v625
        %v990 = vpop.f32.mrb[0].mxu0
        %v991 = vadd.f32 %v459, %v990
        %v992 = vpop.f32.mrb[0].mxu0
        %993 = vmatprep.mubr.f32.mxu0 0.0
        %994 = vmatmul.mubr.f32.gmra.mrb[0].mxu0 %v628
        %v995 = vpop.f32.mrb[0].mxu0
        %v996 = vadd.f32 %v459, %v995
        %v997 = vpop.f32.mrb[0].mxu0
        %998 = vmatprep.mubr.f32.mxu0 0.0
        %999 = vmatmul.mubr.f32.gmra.mrb[0].mxu0 %v631
        %v1000 = vpop.f32.mrb[0].mxu0
        %v1001 = vadd.f32 %v459, %v1000
        %v1002 = vpop.f32.mrb[0].mxu0
        %1003 = vmatprep.mubr.f32.mxu0 0.0
        %1004 = vmatmul.mubr.f32.gmra.mrb[0].mxu0 %v634
        %v1005 = vpop.f32.mrb[0].mxu0
        %v1006 = vadd.f32 %v459, %v1005
        %v1007 = vpop.f32.mrb[0].mxu0
        %1008 = vmatprep.mubr.f32.mxu0 0.0
        %1009 = vmatmul.mubr.f32.gmra.mrb[0].mxu0 %v637
        %v1010 = vpop.f32.mrb[0].mxu0
        %v1011 = vadd.f32 %v459, %v1010
        %v1012 = vpop.f32.mrb[0].mxu0
        %1013 = vmatprep.mubr.f32.mxu0 0.0
        %1014 = vmatmul.mubr.f32.gmra.mrb[0].mxu0 %v640
        %v1015 = vpop.f32.mrb[0].mxu0
        %v1016 = vadd.f32 %v459, %v1015
        %v1017 = vpop.f32.mrb[0].mxu0
        %1018 = vmatprep.mubr.f32.mxu0 0.0
        %1019 = vmatmul.mubr.f32.gmra.mrb[0].mxu0 %v643
        %v1020 = vpop.f32.mrb[0].mxu0
        %v1021 = vadd.f32 %v459, %v1020
        %v1022 = vpop.f32.mrb[0].mxu0
        %1023 = vmatprep.mubr.f32.mxu0 0.0
        %1024 = vmatmul.mubr.f32.gmra.mrb[0].mxu0 %v646
        %v1025 = vpop.f32.mrb[0].mxu0
        %v1026 = vadd.f32 %v459, %v1025
        %v1027 = vpop.f32.mrb[0].mxu0
        %1028 = vmatprep.mubr.f32.mxu0 0.0
        %1029 = vmatmul.mubr.f32.gmra.mrb[0].mxu0 %v649
        %v1030 = vpop.f32.mrb[0].mxu0
        %v1031 = vadd.f32 %v459, %v1030
        %v1032 = vpop.f32.mrb[0].mxu0
        %1033 = vmatprep.mubr.f32.mxu0 0.0
        %1034 = vmatmul.mubr.f32.gmra.mrb[0].mxu0 %v652
        %v1035 = vpop.f32.mrb[0].mxu0
        %v1036 = vadd.f32 %v459, %v1035
        %v1037 = vpop.f32.mrb[0].mxu0
        %1038 = vdwg.mxu0
        %v1039 = vmax.f32 %v721, 0.0
        %v1040 = vmax.f32 %v726, 0.0
        %v1041 = vmax.f32 %v731, 0.0
        %v1042 = vmax.f32 %v736, 0.0
        %v1043 = vmax.f32 %v741, 0.0
        %v1044 = vmax.f32 %v746, 0.0
        %v1045 = vmax.f32 %v751, 0.0
        %v1046 = vmax.f32 %v756, 0.0
        %v1047 = vmax.f32 %v761, 0.0
        %v1048 = vmax.f32 %v766, 0.0
        %v1049 = vmax.f32 %v771, 0.0
        %v1050 = vmax.f32 %v776, 0.0
        %v1051 = vmax.f32 %v781, 0.0
        %v1052 = vmax.f32 %v786, 0.0
        %v1053 = vmax.f32 %v791, 0.0
        %v1054 = vmax.f32 %v796, 0.0
        %v1055 = vmax.f32 %v801, 0.0
        %v1056 = vmax.f32 %v806, 0.0
        %v1057 = vmax.f32 %v811, 0.0
        %v1058 = vmax.f32 %v816, 0.0
        %v1059 = vmax.f32 %v821, 0.0
        %v1060 = vmax.f32 %v826, 0.0
        %v1061 = vmax.f32 %v831, 0.0
        %v1062 = vmax.f32 %v836, 0.0
        %v1063 = vmax.f32 %v841, 0.0
        %v1064 = vmax.f32 %v846, 0.0
        %v1065 = vmax.f32 %v851, 0.0
        %v1066 = vmax.f32 %v856, 0.0
        %v1067 = vmax.f32 %v861, 0.0
        %v1068 = vmax.f32 %v866, 0.0
        %v1069 = vmax.f32 %v871, 0.0
        %v1070 = vmax.f32 %v876, 0.0
        %v1071 = vmax.f32 %v881, 0.0
        %v1072 = vmax.f32 %v886, 0.0
        %v1073 = vmax.f32 %v891, 0.0
        %v1074 = vmax.f32 %v896, 0.0
        %v1075 = vmax.f32 %v901, 0.0
        %v1076 = vmax.f32 %v906, 0.0
        %v1077 = vmax.f32 %v911, 0.0
        %v1078 = vmax.f32 %v916, 0.0
        %v1079 = vmax.f32 %v921, 0.0
        %v1080 = vmax.f32 %v926, 0.0
        %v1081 = vmax.f32 %v931, 0.0
        %v1082 = vmax.f32 %v936, 0.0
        %v1083 = vmax.f32 %v941, 0.0
        %v1084 = vmax.f32 %v946, 0.0
        %v1085 = vmax.f32 %v951, 0.0
        %v1086 = vmax.f32 %v956, 0.0
        %v1087 = vmax.f32 %v961, 0.0
        %v1088 = vmax.f32 %v966, 0.0
        %v1089 = vmax.f32 %v971, 0.0
        %v1090 = vmax.f32 %v976, 0.0
        %v1091 = vmax.f32 %v981, 0.0
        %v1092 = vmax.f32 %v986, 0.0
        %v1093 = vmax.f32 %v991, 0.0
        %v1094 = vmax.f32 %v996, 0.0
        %v1095 = vmax.f32 %v1001, 0.0
        %v1096 = vmax.f32 %v1006, 0.0
        %v1097 = vmax.f32 %v1011, 0.0
        %v1098 = vmax.f32 %v1016, 0.0
        %v1099 = vmax.f32 %v1021, 0.0
        %v1100 = vmax.f32 %v1026, 0.0
        %v1101 = vmax.f32 %v1031, 0.0
        %v1102 = vmax.f32 %v1036, 0.0
        %v1103 = vpack.c.bf16 %v1040, %v1039
        %v1104 = vpack.c.bf16 %v1042, %v1041
        %v1105 = vpack.c.bf16 %v1044, %v1043
        %v1106 = vpack.c.bf16 %v1046, %v1045
        %v1107 = vpack.c.bf16 %v1048, %v1047
        %v1108 = vpack.c.bf16 %v1050, %v1049
        %v1109 = vpack.c.bf16 %v1052, %v1051
        %v1110 = vpack.c.bf16 %v1054, %v1053
        %v1111 = vpack.c.bf16 %v1056, %v1055
        %v1112 = vpack.c.bf16 %v1058, %v1057
        %v1113 = vpack.c.bf16 %v1060, %v1059
        %v1114 = vpack.c.bf16 %v1062, %v1061
        %v1115 = vpack.c.bf16 %v1064, %v1063
        %v1116 = vpack.c.bf16 %v1066, %v1065
        %v1117 = vpack.c.bf16 %v1068, %v1067
        %v1118 = vpack.c.bf16 %v1070, %v1069
        %v1119 = vpack.c.bf16 %v1072, %v1071
        %v1120 = vpack.c.bf16 %v1074, %v1073
        %v1121 = vpack.c.bf16 %v1076, %v1075
        %v1122 = vpack.c.bf16 %v1078, %v1077
        %v1123 = vpack.c.bf16 %v1080, %v1079
        %v1124 = vpack.c.bf16 %v1082, %v1081
        %v1125 = vpack.c.bf16 %v1084, %v1083
        %v1126 = vpack.c.bf16 %v1086, %v1085
        %v1127 = vpack.c.bf16 %v1088, %v1087
        %v1128 = vpack.c.bf16 %v1090, %v1089
        %v1129 = vpack.c.bf16 %v1092, %v1091
        %v1130 = vpack.c.bf16 %v1094, %v1093
        %v1131 = vpack.c.bf16 %v1096, %v1095
        %v1132 = vpack.c.bf16 %v1098, %v1097
        %v1133 = vpack.c.bf16 %v1100, %v1099
        %v1134 = vpack.c.bf16 %v1102, %v1101
        %v1135 = vld [vmem:[%s3] sm:$0xf]
        %v1136 = vld [vmem:[%s3 + $0x4] sm:$0xf]
        %v1137 = vld [vmem:[%s3 + $0x8] sm:$0xf]
        %v1138 = vld [vmem:[%s3 + $0xc] sm:$0xf]
        %v1139 = vld [vmem:[%s3 + $0x10] sm:$0xf]
        %v1140 = vld [vmem:[%s3 + $0x14] sm:$0xf]
        %v1141 = vld [vmem:[%s3 + $0x18] sm:$0xf]
        %v1142 = vld [vmem:[%s3 + $0x1c] sm:$0xf]
        %v1143 = vld [vmem:[%s3 + $0x20] sm:$0xf]
        %v1144 = vld [vmem:[%s3 + $0x24] sm:$0xf]
        %v1145 = vld [vmem:[%s3 + $0x28] sm:$0xf]
        %v1146 = vld [vmem:[%s3 + $0x2c] sm:$0xf]
        %v1147 = vld [vmem:[%s3 + $0x30] sm:$0xf]
        %v1148 = vld [vmem:[%s3 + $0x34] sm:$0xf]
        %v1149 = vld [vmem:[%s3 + $0x38] sm:$0xf]
        %v1150 = vld [vmem:[%s3 + $0x3c] sm:$0xf]
        %v1151 = vld [vmem:[%s4] sm:$0x1]
        %v1153 = vlaneseq
        %v1154 = vshrl.u32 %v1153, 7
        %v1155 = vsub.s32 0, %v1154
        %v1156 = vrot.slane %v1151, %v1155
        %v1174 = vunpack.c.l.b16 %v1135
        %v1175 = vunpack.c.l.b16 %v1136
        %v1176 = vunpack.c.l.b16 %v1137
        %v1177 = vunpack.c.l.b16 %v1138
        %v1178 = vunpack.c.l.b16 %v1139
        %v1179 = vunpack.c.l.b16 %v1140
        %v1180 = vunpack.c.l.b16 %v1141
        %v1181 = vunpack.c.l.b16 %v1142
        %v1182 = vunpack.c.l.b16 %v1143
        %v1183 = vunpack.c.l.b16 %v1144
        %v1184 = vunpack.c.l.b16 %v1145
        %v1185 = vunpack.c.l.b16 %v1146
        %v1186 = vunpack.c.l.b16 %v1147
        %v1187 = vunpack.c.l.b16 %v1148
        %v1188 = vunpack.c.l.b16 %v1149
        %v1189 = vunpack.c.l.b16 %v1150
        %v1190 = vpack.c.b16 %v1175, %v1174
        %v1191 = vpack.c.b16 %v1177, %v1176
        %v1192 = vpack.c.b16 %v1179, %v1178
        %v1193 = vpack.c.b16 %v1181, %v1180
        %v1194 = vpack.c.b16 %v1183, %v1182
        %v1195 = vpack.c.b16 %v1185, %v1184
        %v1196 = vpack.c.b16 %v1187, %v1186
        %v1197 = vpack.c.b16 %v1189, %v1188
        %1206 = vmatprep.subr.bf16.mxu0 0
        %1207 = vmatpush1.bf16.msra.mxu0 %v1190
        %1208 = vmatprep.subr.bf16.mxu0 0
        %1209 = vmatpush1.bf16.msra.mxu0 %v1191
        %1210 = vmatprep.subr.bf16.mxu0 0
        %1211 = vmatpush1.bf16.msra.mxu0 %v1192
        %1212 = vmatprep.subr.bf16.mxu0 0
        %1213 = vmatpush1.bf16.msra.mxu0 %v1193
        %1214 = vmatprep.subr.bf16.mxu0 0
        %1215 = vmatpush1.bf16.msra.mxu0 %v1194
        %1216 = vmatprep.subr.bf16.mxu0 0
        %1217 = vmatpush1.bf16.msra.mxu0 %v1195
        %1218 = vmatprep.subr.bf16.mxu0 0
        %1219 = vmatpush1.bf16.msra.mxu0 %v1196
        %1220 = vmatprep.subr.bf16.mxu0 0
        %1221 = vmatpush1.bf16.msra.mxu0 %v1197
        %1222 = vmatprep.subr.bf16.mxu0 0
        %1223 = vmatpush1.bf16.msra.mxu0 0
        %1224 = vmatprep.subr.bf16.mxu0 0
        %1225 = vmatpush1.bf16.msra.mxu0 0
        %1226 = vmatprep.subr.bf16.mxu0 0
        %1227 = vmatpush1.bf16.msra.mxu0 0
        %1228 = vmatprep.subr.bf16.mxu0 0
        %1229 = vmatpush1.bf16.msra.mxu0 0
        %1230 = vmatprep.subr.bf16.mxu0 0
        %1231 = vmatpush1.bf16.msra.mxu0 0
        %1232 = vmatprep.subr.bf16.mxu0 0
        %1233 = vmatpush1.bf16.msra.mxu0 0
        %1234 = vmatprep.subr.bf16.mxu0 0
        %1235 = vmatpush1.bf16.msra.mxu0 0
        %1236 = vmatprep.subr.bf16.mxu0 0
        %1237 = vmatpush1.bf16.msra.mxu0 0
        %1238 = vmatprep.mubr.bf16.mxu0 0
        %1239 = vmatmul.mubr.bf16.gmra.mrb[0].mxu0 %v1103
        %v1240 = vpop.f32.mrb[0].mxu0
        %v1241 = vadd.f32 %v1156, %v1240
        %v1242 = vpop.f32.mrb[0].mxu0
        %v1243 = vpop.f32.mrb[0].mxu0
        %v1244 = vadd.f32 %v1156, %v1243
        %v1245 = vpop.f32.mrb[0].mxu0
        %1246 = vmatprep.mubr.bf16.mxu0 0
        %1247 = vmatmul.mubr.bf16.gmra.mrb[0].mxu0 %v1104
        %v1248 = vpop.f32.mrb[0].mxu0
        %v1249 = vadd.f32 %v1156, %v1248
        %v1250 = vpop.f32.mrb[0].mxu0
        %v1251 = vpop.f32.mrb[0].mxu0
        %v1252 = vadd.f32 %v1156, %v1251
        %v1253 = vpop.f32.mrb[0].mxu0
        %1254 = vmatprep.mubr.bf16.mxu0 0
        %1255 = vmatmul.mubr.bf16.gmra.mrb[0].mxu0 %v1105
        %v1256 = vpop.f32.mrb[0].mxu0
        %v1257 = vadd.f32 %v1156, %v1256
        %v1258 = vpop.f32.mrb[0].mxu0
        %v1259 = vpop.f32.mrb[0].mxu0
        %v1260 = vadd.f32 %v1156, %v1259
        %v1261 = vpop.f32.mrb[0].mxu0
        %1262 = vmatprep.mubr.bf16.mxu0 0
        %1263 = vmatmul.mubr.bf16.gmra.mrb[0].mxu0 %v1106
        %v1264 = vpop.f32.mrb[0].mxu0
        %v1265 = vadd.f32 %v1156, %v1264
        %v1266 = vpop.f32.mrb[0].mxu0
        %v1267 = vpop.f32.mrb[0].mxu0
        %v1268 = vadd.f32 %v1156, %v1267
        %v1269 = vpop.f32.mrb[0].mxu0
        %1270 = vmatprep.mubr.bf16.mxu0 0
        %1271 = vmatmul.mubr.bf16.gmra.mrb[0].mxu0 %v1107
        %v1272 = vpop.f32.mrb[0].mxu0
        %v1273 = vadd.f32 %v1156, %v1272
        %v1274 = vpop.f32.mrb[0].mxu0
        %v1275 = vpop.f32.mrb[0].mxu0
        %v1276 = vadd.f32 %v1156, %v1275
        %v1277 = vpop.f32.mrb[0].mxu0
        %1278 = vmatprep.mubr.bf16.mxu0 0
        %1279 = vmatmul.mubr.bf16.gmra.mrb[0].mxu0 %v1108
        %v1280 = vpop.f32.mrb[0].mxu0
        %v1281 = vadd.f32 %v1156, %v1280
        %v1282 = vpop.f32.mrb[0].mxu0
        %v1283 = vpop.f32.mrb[0].mxu0
        %v1284 = vadd.f32 %v1156, %v1283
        %v1285 = vpop.f32.mrb[0].mxu0
        %1286 = vmatprep.mubr.bf16.mxu0 0
        %1287 = vmatmul.mubr.bf16.gmra.mrb[0].mxu0 %v1109
        %v1288 = vpop.f32.mrb[0].mxu0
        %v1289 = vadd.f32 %v1156, %v1288
        %v1290 = vpop.f32.mrb[0].mxu0
        %v1291 = vpop.f32.mrb[0].mxu0
        %v1292 = vadd.f32 %v1156, %v1291
        %v1293 = vpop.f32.mrb[0].mxu0
        %1294 = vmatprep.mubr.bf16.mxu0 0
        %1295 = vmatmul.mubr.bf16.gmra.mrb[0].mxu0 %v1110
        %v1296 = vpop.f32.mrb[0].mxu0
        %v1297 = vadd.f32 %v1156, %v1296
        %v1298 = vpop.f32.mrb[0].mxu0
        %v1299 = vpop.f32.mrb[0].mxu0
        %v1300 = vadd.f32 %v1156, %v1299
        %v1301 = vpop.f32.mrb[0].mxu0
        %1302 = vmatprep.mubr.bf16.mxu0 0
        %1303 = vmatmul.mubr.bf16.gmra.mrb[0].mxu0 %v1111
        %v1304 = vpop.f32.mrb[0].mxu0
        %v1305 = vadd.f32 %v1156, %v1304
        %v1306 = vpop.f32.mrb[0].mxu0
        %v1307 = vpop.f32.mrb[0].mxu0
        %v1308 = vadd.f32 %v1156, %v1307
        %v1309 = vpop.f32.mrb[0].mxu0
        %1310 = vmatprep.mubr.bf16.mxu0 0
        %1311 = vmatmul.mubr.bf16.gmra.mrb[0].mxu0 %v1112
        %v1312 = vpop.f32.mrb[0].mxu0
        %v1313 = vadd.f32 %v1156, %v1312
        %v1314 = vpop.f32.mrb[0].mxu0
        %v1315 = vpop.f32.mrb[0].mxu0
        %v1316 = vadd.f32 %v1156, %v1315
        %v1317 = vpop.f32.mrb[0].mxu0
        %1318 = vmatprep.mubr.bf16.mxu0 0
        %1319 = vmatmul.mubr.bf16.gmra.mrb[0].mxu0 %v1113
        %v1320 = vpop.f32.mrb[0].mxu0
        %v1321 = vadd.f32 %v1156, %v1320
        %v1322 = vpop.f32.mrb[0].mxu0
        %v1323 = vpop.f32.mrb[0].mxu0
        %v1324 = vadd.f32 %v1156, %v1323
        %v1325 = vpop.f32.mrb[0].mxu0
        %1326 = vmatprep.mubr.bf16.mxu0 0
        %1327 = vmatmul.mubr.bf16.gmra.mrb[0].mxu0 %v1114
        %v1328 = vpop.f32.mrb[0].mxu0
        %v1329 = vadd.f32 %v1156, %v1328
        %v1330 = vpop.f32.mrb[0].mxu0
        %v1331 = vpop.f32.mrb[0].mxu0
        %v1332 = vadd.f32 %v1156, %v1331
        %v1333 = vpop.f32.mrb[0].mxu0
        %1334 = vmatprep.mubr.bf16.mxu0 0
        %1335 = vmatmul.mubr.bf16.gmra.mrb[0].mxu0 %v1115
        %v1336 = vpop.f32.mrb[0].mxu0
        %v1337 = vadd.f32 %v1156, %v1336
        %v1338 = vpop.f32.mrb[0].mxu0
        %v1339 = vpop.f32.mrb[0].mxu0
        %v1340 = vadd.f32 %v1156, %v1339
        %v1341 = vpop.f32.mrb[0].mxu0
        %1342 = vmatprep.mubr.bf16.mxu0 0
        %1343 = vmatmul.mubr.bf16.gmra.mrb[0].mxu0 %v1116
        %v1344 = vpop.f32.mrb[0].mxu0
        %v1345 = vadd.f32 %v1156, %v1344
        %v1346 = vpop.f32.mrb[0].mxu0
        %v1347 = vpop.f32.mrb[0].mxu0
        %v1348 = vadd.f32 %v1156, %v1347
        %v1349 = vpop.f32.mrb[0].mxu0
        %1350 = vmatprep.mubr.bf16.mxu0 0
        %1351 = vmatmul.mubr.bf16.gmra.mrb[0].mxu0 %v1117
        %v1352 = vpop.f32.mrb[0].mxu0
        %v1353 = vadd.f32 %v1156, %v1352
        %v1354 = vpop.f32.mrb[0].mxu0
        %v1355 = vpop.f32.mrb[0].mxu0
        %v1356 = vadd.f32 %v1156, %v1355
        %v1357 = vpop.f32.mrb[0].mxu0
        %1358 = vmatprep.mubr.bf16.mxu0 0
        %1359 = vmatmul.mubr.bf16.gmra.mrb[0].mxu0 %v1118
        %v1360 = vpop.f32.mrb[0].mxu0
        %v1361 = vadd.f32 %v1156, %v1360
        %v1362 = vpop.f32.mrb[0].mxu0
        %v1363 = vpop.f32.mrb[0].mxu0
        %v1364 = vadd.f32 %v1156, %v1363
        %v1365 = vpop.f32.mrb[0].mxu0
        %1366 = vmatprep.mubr.bf16.mxu0 0
        %1367 = vmatmul.mubr.bf16.gmra.mrb[0].mxu0 %v1119
        %v1368 = vpop.f32.mrb[0].mxu0
        %v1369 = vadd.f32 %v1156, %v1368
        %v1370 = vpop.f32.mrb[0].mxu0
        %v1371 = vpop.f32.mrb[0].mxu0
        %v1372 = vadd.f32 %v1156, %v1371
        %v1373 = vpop.f32.mrb[0].mxu0
        %1374 = vmatprep.mubr.bf16.mxu0 0
        %1375 = vmatmul.mubr.bf16.gmra.mrb[0].mxu0 %v1120
        %v1376 = vpop.f32.mrb[0].mxu0
        %v1377 = vadd.f32 %v1156, %v1376
        %v1378 = vpop.f32.mrb[0].mxu0
        %v1379 = vpop.f32.mrb[0].mxu0
        %v1380 = vadd.f32 %v1156, %v1379
        %v1381 = vpop.f32.mrb[0].mxu0
        %1382 = vmatprep.mubr.bf16.mxu0 0
        %1383 = vmatmul.mubr.bf16.gmra.mrb[0].mxu0 %v1121
        %v1384 = vpop.f32.mrb[0].mxu0
        %v1385 = vadd.f32 %v1156, %v1384
        %v1386 = vpop.f32.mrb[0].mxu0
        %v1387 = vpop.f32.mrb[0].mxu0
        %v1388 = vadd.f32 %v1156, %v1387
        %v1389 = vpop.f32.mrb[0].mxu0
        %1390 = vmatprep.mubr.bf16.mxu0 0
        %1391 = vmatmul.mubr.bf16.gmra.mrb[0].mxu0 %v1122
        %v1392 = vpop.f32.mrb[0].mxu0
        %v1393 = vadd.f32 %v1156, %v1392
        %v1394 = vpop.f32.mrb[0].mxu0
        %v1395 = vpop.f32.mrb[0].mxu0
        %v1396 = vadd.f32 %v1156, %v1395
        %v1397 = vpop.f32.mrb[0].mxu0
        %1398 = vmatprep.mubr.bf16.mxu0 0
        %1399 = vmatmul.mubr.bf16.gmra.mrb[0].mxu0 %v1123
        %v1400 = vpop.f32.mrb[0].mxu0
        %v1401 = vadd.f32 %v1156, %v1400
        %v1402 = vpop.f32.mrb[0].mxu0
        %v1403 = vpop.f32.mrb[0].mxu0
        %v1404 = vadd.f32 %v1156, %v1403
        %v1405 = vpop.f32.mrb[0].mxu0
        %1406 = vmatprep.mubr.bf16.mxu0 0
        %1407 = vmatmul.mubr.bf16.gmra.mrb[0].mxu0 %v1124
        %v1408 = vpop.f32.mrb[0].mxu0
        %v1409 = vadd.f32 %v1156, %v1408
        %v1410 = vpop.f32.mrb[0].mxu0
        %v1411 = vpop.f32.mrb[0].mxu0
        %v1412 = vadd.f32 %v1156, %v1411
        %v1413 = vpop.f32.mrb[0].mxu0
        %1414 = vmatprep.mubr.bf16.mxu0 0
        %1415 = vmatmul.mubr.bf16.gmra.mrb[0].mxu0 %v1125
        %v1416 = vpop.f32.mrb[0].mxu0
        %v1417 = vadd.f32 %v1156, %v1416
        %v1418 = vpop.f32.mrb[0].mxu0
        %v1419 = vpop.f32.mrb[0].mxu0
        %v1420 = vadd.f32 %v1156, %v1419
        %v1421 = vpop.f32.mrb[0].mxu0
        %1422 = vmatprep.mubr.bf16.mxu0 0
        %1423 = vmatmul.mubr.bf16.gmra.mrb[0].mxu0 %v1126
        %v1424 = vpop.f32.mrb[0].mxu0
        %v1425 = vadd.f32 %v1156, %v1424
        %v1426 = vpop.f32.mrb[0].mxu0
        %v1427 = vpop.f32.mrb[0].mxu0
        %v1428 = vadd.f32 %v1156, %v1427
        %v1429 = vpop.f32.mrb[0].mxu0
        %1430 = vmatprep.mubr.bf16.mxu0 0
        %1431 = vmatmul.mubr.bf16.gmra.mrb[0].mxu0 %v1127
        %v1432 = vpop.f32.mrb[0].mxu0
        %v1433 = vadd.f32 %v1156, %v1432
        %v1434 = vpop.f32.mrb[0].mxu0
        %v1435 = vpop.f32.mrb[0].mxu0
        %v1436 = vadd.f32 %v1156, %v1435
        %v1437 = vpop.f32.mrb[0].mxu0
        %1438 = vmatprep.mubr.bf16.mxu0 0
        %1439 = vmatmul.mubr.bf16.gmra.mrb[0].mxu0 %v1128
        %v1440 = vpop.f32.mrb[0].mxu0
        %v1441 = vadd.f32 %v1156, %v1440
        %v1442 = vpop.f32.mrb[0].mxu0
        %v1443 = vpop.f32.mrb[0].mxu0
        %v1444 = vadd.f32 %v1156, %v1443
        %v1445 = vpop.f32.mrb[0].mxu0
        %1446 = vmatprep.mubr.bf16.mxu0 0
        %1447 = vmatmul.mubr.bf16.gmra.mrb[0].mxu0 %v1129
        %v1448 = vpop.f32.mrb[0].mxu0
        %v1449 = vadd.f32 %v1156, %v1448
        %v1450 = vpop.f32.mrb[0].mxu0
        %v1451 = vpop.f32.mrb[0].mxu0
        %v1452 = vadd.f32 %v1156, %v1451
        %v1453 = vpop.f32.mrb[0].mxu0
        %1454 = vmatprep.mubr.bf16.mxu0 0
        %1455 = vmatmul.mubr.bf16.gmra.mrb[0].mxu0 %v1130
        %v1456 = vpop.f32.mrb[0].mxu0
        %v1457 = vadd.f32 %v1156, %v1456
        %v1458 = vpop.f32.mrb[0].mxu0
        %v1459 = vpop.f32.mrb[0].mxu0
        %v1460 = vadd.f32 %v1156, %v1459
        %v1461 = vpop.f32.mrb[0].mxu0
        %1462 = vmatprep.mubr.bf16.mxu0 0
        %1463 = vmatmul.mubr.bf16.gmra.mrb[0].mxu0 %v1131
        %v1464 = vpop.f32.mrb[0].mxu0
        %v1465 = vadd.f32 %v1156, %v1464
        %v1466 = vpop.f32.mrb[0].mxu0
        %v1467 = vpop.f32.mrb[0].mxu0
        %v1468 = vadd.f32 %v1156, %v1467
        %v1469 = vpop.f32.mrb[0].mxu0
        %1470 = vmatprep.mubr.bf16.mxu0 0
        %1471 = vmatmul.mubr.bf16.gmra.mrb[0].mxu0 %v1132
        %v1472 = vpop.f32.mrb[0].mxu0
        %v1473 = vadd.f32 %v1156, %v1472
        %v1474 = vpop.f32.mrb[0].mxu0
        %v1475 = vpop.f32.mrb[0].mxu0
        %v1476 = vadd.f32 %v1156, %v1475
        %v1477 = vpop.f32.mrb[0].mxu0
        %1478 = vmatprep.mubr.bf16.mxu0 0
        %1479 = vmatmul.mubr.bf16.gmra.mrb[0].mxu0 %v1133
        %v1480 = vpop.f32.mrb[0].mxu0
        %v1481 = vadd.f32 %v1156, %v1480
        %v1482 = vpop.f32.mrb[0].mxu0
        %v1483 = vpop.f32.mrb[0].mxu0
        %v1484 = vadd.f32 %v1156, %v1483
        %v1485 = vpop.f32.mrb[0].mxu0
        %1486 = vmatprep.mubr.bf16.mxu0 0
        %1487 = vmatmul.mubr.bf16.gmra.mrb[0].mxu0 %v1134
        %v1488 = vpop.f32.mrb[0].mxu0
        %v1489 = vadd.f32 %v1156, %v1488
        %v1490 = vpop.f32.mrb[0].mxu0
        %v1491 = vpop.f32.mrb[0].mxu0
        %v1492 = vadd.f32 %v1156, %v1491
        %v1493 = vpop.f32.mrb[0].mxu0
        %1494 = vdwg.mxu0
        %v1495 = vmax.f32 %v1241, 0.0
        %v1496 = vmax.f32 %v1244, 0.0
        %v1497 = vmax.f32 %v1249, 0.0
        %v1498 = vmax.f32 %v1252, 0.0
        %v1499 = vmax.f32 %v1257, 0.0
        %v1500 = vmax.f32 %v1260, 0.0
        %v1501 = vmax.f32 %v1265, 0.0
        %v1502 = vmax.f32 %v1268, 0.0
        %v1503 = vmax.f32 %v1273, 0.0
        %v1504 = vmax.f32 %v1276, 0.0
        %v1505 = vmax.f32 %v1281, 0.0
        %v1506 = vmax.f32 %v1284, 0.0
        %v1507 = vmax.f32 %v1289, 0.0
        %v1508 = vmax.f32 %v1292, 0.0
        %v1509 = vmax.f32 %v1297, 0.0
        %v1510 = vmax.f32 %v1300, 0.0
        %v1511 = vmax.f32 %v1305, 0.0
        %v1512 = vmax.f32 %v1308, 0.0
        %v1513 = vmax.f32 %v1313, 0.0
        %v1514 = vmax.f32 %v1316, 0.0
        %v1515 = vmax.f32 %v1321, 0.0
        %v1516 = vmax.f32 %v1324, 0.0
        %v1517 = vmax.f32 %v1329, 0.0
        %v1518 = vmax.f32 %v1332, 0.0
        %v1519 = vmax.f32 %v1337, 0.0
        %v1520 = vmax.f32 %v1340, 0.0
        %v1521 = vmax.f32 %v1345, 0.0
        %v1522 = vmax.f32 %v1348, 0.0
        %v1523 = vmax.f32 %v1353, 0.0
        %v1524 = vmax.f32 %v1356, 0.0
        %v1525 = vmax.f32 %v1361, 0.0
        %v1526 = vmax.f32 %v1364, 0.0
        %v1527 = vmax.f32 %v1369, 0.0
        %v1528 = vmax.f32 %v1372, 0.0
        %v1529 = vmax.f32 %v1377, 0.0
        %v1530 = vmax.f32 %v1380, 0.0
        %v1531 = vmax.f32 %v1385, 0.0
        %v1532 = vmax.f32 %v1388, 0.0
        %v1533 = vmax.f32 %v1393, 0.0
        %v1534 = vmax.f32 %v1396, 0.0
        %v1535 = vmax.f32 %v1401, 0.0
        %v1536 = vmax.f32 %v1404, 0.0
        %v1537 = vmax.f32 %v1409, 0.0
        %v1538 = vmax.f32 %v1412, 0.0
        %v1539 = vmax.f32 %v1417, 0.0
        %v1540 = vmax.f32 %v1420, 0.0
        %v1541 = vmax.f32 %v1425, 0.0
        %v1542 = vmax.f32 %v1428, 0.0
        %v1543 = vmax.f32 %v1433, 0.0
        %v1544 = vmax.f32 %v1436, 0.0
        %v1545 = vmax.f32 %v1441, 0.0
        %v1546 = vmax.f32 %v1444, 0.0
        %v1547 = vmax.f32 %v1449, 0.0
        %v1548 = vmax.f32 %v1452, 0.0
        %v1549 = vmax.f32 %v1457, 0.0
        %v1550 = vmax.f32 %v1460, 0.0
        %v1551 = vmax.f32 %v1465, 0.0
        %v1552 = vmax.f32 %v1468, 0.0
        %v1553 = vmax.f32 %v1473, 0.0
        %v1554 = vmax.f32 %v1476, 0.0
        %v1555 = vmax.f32 %v1481, 0.0
        %v1556 = vmax.f32 %v1484, 0.0
        %v1557 = vmax.f32 %v1489, 0.0
        %v1558 = vmax.f32 %v1492, 0.0
        %v1559 = vpack.c.bf16 %v1496, %v1495
        %v1560 = vpack.c.bf16 %v1498, %v1497
        %v1561 = vpack.c.bf16 %v1500, %v1499
        %v1562 = vpack.c.bf16 %v1502, %v1501
        %v1563 = vpack.c.bf16 %v1504, %v1503
        %v1564 = vpack.c.bf16 %v1506, %v1505
        %v1565 = vpack.c.bf16 %v1508, %v1507
        %v1566 = vpack.c.bf16 %v1510, %v1509
        %v1567 = vpack.c.bf16 %v1512, %v1511
        %v1568 = vpack.c.bf16 %v1514, %v1513
        %v1569 = vpack.c.bf16 %v1516, %v1515
        %v1570 = vpack.c.bf16 %v1518, %v1517
        %v1571 = vpack.c.bf16 %v1520, %v1519
        %v1572 = vpack.c.bf16 %v1522, %v1521
        %v1573 = vpack.c.bf16 %v1524, %v1523
        %v1574 = vpack.c.bf16 %v1526, %v1525
        %v1575 = vpack.c.bf16 %v1528, %v1527
        %v1576 = vpack.c.bf16 %v1530, %v1529
        %v1577 = vpack.c.bf16 %v1532, %v1531
        %v1578 = vpack.c.bf16 %v1534, %v1533
        %v1579 = vpack.c.bf16 %v1536, %v1535
        %v1580 = vpack.c.bf16 %v1538, %v1537
        %v1581 = vpack.c.bf16 %v1540, %v1539
        %v1582 = vpack.c.bf16 %v1542, %v1541
        %v1583 = vpack.c.bf16 %v1544, %v1543
        %v1584 = vpack.c.bf16 %v1546, %v1545
        %v1585 = vpack.c.bf16 %v1548, %v1547
        %v1586 = vpack.c.bf16 %v1550, %v1549
        %v1587 = vpack.c.bf16 %v1552, %v1551
        %v1588 = vpack.c.bf16 %v1554, %v1553
        %v1589 = vpack.c.bf16 %v1556, %v1555
        %v1590 = vpack.c.bf16 %v1558, %v1557
        %v1591 = vld [vmem:[%s5] sm:$0xf]
        %v1592 = vld [vmem:[%s5 + $0x4] sm:$0xf]
        %v1593 = vld [vmem:[%s5 + $0x8] sm:$0xf]
        %v1594 = vld [vmem:[%s5 + $0xc] sm:$0xf]
        %v1595 = vld [vmem:[%s5 + $0x10] sm:$0xf]
        %v1596 = vld [vmem:[%s5 + $0x14] sm:$0xf]
        %v1597 = vld [vmem:[%s5 + $0x18] sm:$0xf]
        %v1598 = vld [vmem:[%s5 + $0x1c] sm:$0xf]
        %v1599 = vld [vmem:[%s5 + $0x20] sm:$0xf]
        %v1600 = vld [vmem:[%s5 + $0x24] sm:$0xf]
        %v1601 = vld [vmem:[%s5 + $0x28] sm:$0xf]
        %v1602 = vld [vmem:[%s5 + $0x2c] sm:$0xf]
        %v1603 = vld [vmem:[%s5 + $0x30] sm:$0xf]
        %v1604 = vld [vmem:[%s5 + $0x34] sm:$0xf]
        %v1605 = vld [vmem:[%s5 + $0x38] sm:$0xf]
        %v1606 = vld [vmem:[%s5 + $0x3c] sm:$0xf]
        %v1607 = vld [vmem:[%s6] sm:$0x1]
        %v1609 = vlaneseq
        %v1610 = vshrl.u32 %v1609, 7
        %v1611 = vsub.s32 0, %v1610
        %v1612 = vrot.slane %v1607, %v1611
        %v1630 = vunpack.c.l.b16 %v1591
        %v1631 = vunpack.c.l.b16 %v1592
        %v1632 = vunpack.c.l.b16 %v1593
        %v1633 = vunpack.c.l.b16 %v1594
        %v1634 = vunpack.c.l.b16 %v1595
        %v1635 = vunpack.c.l.b16 %v1596
        %v1636 = vunpack.c.l.b16 %v1597
        %v1637 = vunpack.c.l.b16 %v1598
        %v1638 = vunpack.c.l.b16 %v1599
        %v1639 = vunpack.c.l.b16 %v1600
        %v1640 = vunpack.c.l.b16 %v1601
        %v1641 = vunpack.c.l.b16 %v1602
        %v1642 = vunpack.c.l.b16 %v1603
        %v1643 = vunpack.c.l.b16 %v1604
        %v1644 = vunpack.c.l.b16 %v1605
        %v1645 = vunpack.c.l.b16 %v1606
        %v1646 = vpack.c.b16 %v1631, %v1630
        %v1647 = vpack.c.b16 %v1633, %v1632
        %v1648 = vpack.c.b16 %v1635, %v1634
        %v1649 = vpack.c.b16 %v1637, %v1636
        %v1650 = vpack.c.b16 %v1639, %v1638
        %v1651 = vpack.c.b16 %v1641, %v1640
        %v1652 = vpack.c.b16 %v1643, %v1642
        %v1653 = vpack.c.b16 %v1645, %v1644
        %1662 = vmatprep.subr.bf16.mxu0 0
        %1663 = vmatpush1.bf16.msra.mxu0 %v1646
        %1664 = vmatprep.subr.bf16.mxu0 0
        %1665 = vmatpush1.bf16.msra.mxu0 %v1647
        %1666 = vmatprep.subr.bf16.mxu0 0
        %1667 = vmatpush1.bf16.msra.mxu0 %v1648
        %1668 = vmatprep.subr.bf16.mxu0 0
        %1669 = vmatpush1.bf16.msra.mxu0 %v1649
        %1670 = vmatprep.subr.bf16.mxu0 0
        %1671 = vmatpush1.bf16.msra.mxu0 %v1650
        %1672 = vmatprep.subr.bf16.mxu0 0
        %1673 = vmatpush1.bf16.msra.mxu0 %v1651
        %1674 = vmatprep.subr.bf16.mxu0 0
        %1675 = vmatpush1.bf16.msra.mxu0 %v1652
        %1676 = vmatprep.subr.bf16.mxu0 0
        %1677 = vmatpush1.bf16.msra.mxu0 %v1653
        %1678 = vmatprep.subr.bf16.mxu0 0
        %1679 = vmatpush1.bf16.msra.mxu0 0
        %1680 = vmatprep.subr.bf16.mxu0 0
        %1681 = vmatpush1.bf16.msra.mxu0 0
        %1682 = vmatprep.subr.bf16.mxu0 0
        %1683 = vmatpush1.bf16.msra.mxu0 0
        %1684 = vmatprep.subr.bf16.mxu0 0
        %1685 = vmatpush1.bf16.msra.mxu0 0
        %1686 = vmatprep.subr.bf16.mxu0 0
        %1687 = vmatpush1.bf16.msra.mxu0 0
        %1688 = vmatprep.subr.bf16.mxu0 0
        %1689 = vmatpush1.bf16.msra.mxu0 0
        %1690 = vmatprep.subr.bf16.mxu0 0
        %1691 = vmatpush1.bf16.msra.mxu0 0
        %1692 = vmatprep.subr.bf16.mxu0 0
        %1693 = vmatpush1.bf16.msra.mxu0 0
        %1694 = vmatprep.mubr.bf16.mxu0 0
        %1695 = vmatmul.mubr.bf16.gmra.mrb[0].mxu0 %v1559
        %v1696 = vpop.f32.mrb[0].mxu0
        %v1697 = vadd.f32 %v1612, %v1696
        %v1698 = vpop.f32.mrb[0].mxu0
        %v1699 = vpop.f32.mrb[0].mxu0
        %v1700 = vadd.f32 %v1612, %v1699
        %v1701 = vpop.f32.mrb[0].mxu0
        %1702 = vmatprep.mubr.bf16.mxu0 0
        %1703 = vmatmul.mubr.bf16.gmra.mrb[0].mxu0 %v1560
        %v1704 = vpop.f32.mrb[0].mxu0
        %v1705 = vadd.f32 %v1612, %v1704
        %v1706 = vpop.f32.mrb[0].mxu0
        %v1707 = vpop.f32.mrb[0].mxu0
        %v1708 = vadd.f32 %v1612, %v1707
        %v1709 = vpop.f32.mrb[0].mxu0
        %1710 = vmatprep.mubr.bf16.mxu0 0
        %1711 = vmatmul.mubr.bf16.gmra.mrb[0].mxu0 %v1561
        %v1712 = vpop.f32.mrb[0].mxu0
        %v1713 = vadd.f32 %v1612, %v1712
        %v1714 = vpop.f32.mrb[0].mxu0
        %v1715 = vpop.f32.mrb[0].mxu0
        %v1716 = vadd.f32 %v1612, %v1715
        %v1717 = vpop.f32.mrb[0].mxu0
        %1718 = vmatprep.mubr.bf16.mxu0 0
        %1719 = vmatmul.mubr.bf16.gmra.mrb[0].mxu0 %v1562
        %v1720 = vpop.f32.mrb[0].mxu0
        %v1721 = vadd.f32 %v1612, %v1720
        %v1722 = vpop.f32.mrb[0].mxu0
        %v1723 = vpop.f32.mrb[0].mxu0
        %v1724 = vadd.f32 %v1612, %v1723
        %v1725 = vpop.f32.mrb[0].mxu0
        %1726 = vmatprep.mubr.bf16.mxu0 0
        %1727 = vmatmul.mubr.bf16.gmra.mrb[0].mxu0 %v1563
        %v1728 = vpop.f32.mrb[0].mxu0
        %v1729 = vadd.f32 %v1612, %v1728
        %v1730 = vpop.f32.mrb[0].mxu0
        %v1731 = vpop.f32.mrb[0].mxu0
        %v1732 = vadd.f32 %v1612, %v1731
        %v1733 = vpop.f32.mrb[0].mxu0
        %1734 = vmatprep.mubr.bf16.mxu0 0
        %1735 = vmatmul.mubr.bf16.gmra.mrb[0].mxu0 %v1564
        %v1736 = vpop.f32.mrb[0].mxu0
        %v1737 = vadd.f32 %v1612, %v1736
        %v1738 = vpop.f32.mrb[0].mxu0
        %v1739 = vpop.f32.mrb[0].mxu0
        %v1740 = vadd.f32 %v1612, %v1739
        %v1741 = vpop.f32.mrb[0].mxu0
        %1742 = vmatprep.mubr.bf16.mxu0 0
        %1743 = vmatmul.mubr.bf16.gmra.mrb[0].mxu0 %v1565
        %v1744 = vpop.f32.mrb[0].mxu0
        %v1745 = vadd.f32 %v1612, %v1744
        %v1746 = vpop.f32.mrb[0].mxu0
        %v1747 = vpop.f32.mrb[0].mxu0
        %v1748 = vadd.f32 %v1612, %v1747
        %v1749 = vpop.f32.mrb[0].mxu0
        %1750 = vmatprep.mubr.bf16.mxu0 0
        %1751 = vmatmul.mubr.bf16.gmra.mrb[0].mxu0 %v1566
        %v1752 = vpop.f32.mrb[0].mxu0
        %v1753 = vadd.f32 %v1612, %v1752
        %v1754 = vpop.f32.mrb[0].mxu0
        %v1755 = vpop.f32.mrb[0].mxu0
        %v1756 = vadd.f32 %v1612, %v1755
        %v1757 = vpop.f32.mrb[0].mxu0
        %1758 = vmatprep.mubr.bf16.mxu0 0
        %1759 = vmatmul.mubr.bf16.gmra.mrb[0].mxu0 %v1567
        %v1760 = vpop.f32.mrb[0].mxu0
        %v1761 = vadd.f32 %v1612, %v1760
        %v1762 = vpop.f32.mrb[0].mxu0
        %v1763 = vpop.f32.mrb[0].mxu0
        %v1764 = vadd.f32 %v1612, %v1763
        %v1765 = vpop.f32.mrb[0].mxu0
        %1766 = vmatprep.mubr.bf16.mxu0 0
        %1767 = vmatmul.mubr.bf16.gmra.mrb[0].mxu0 %v1568
        %v1768 = vpop.f32.mrb[0].mxu0
        %v1769 = vadd.f32 %v1612, %v1768
        %v1770 = vpop.f32.mrb[0].mxu0
        %v1771 = vpop.f32.mrb[0].mxu0
        %v1772 = vadd.f32 %v1612, %v1771
        %v1773 = vpop.f32.mrb[0].mxu0
        %1774 = vmatprep.mubr.bf16.mxu0 0
        %1775 = vmatmul.mubr.bf16.gmra.mrb[0].mxu0 %v1569
        %v1776 = vpop.f32.mrb[0].mxu0
        %v1777 = vadd.f32 %v1612, %v1776
        %v1778 = vpop.f32.mrb[0].mxu0
        %v1779 = vpop.f32.mrb[0].mxu0
        %v1780 = vadd.f32 %v1612, %v1779
        %v1781 = vpop.f32.mrb[0].mxu0
        %1782 = vmatprep.mubr.bf16.mxu0 0
        %1783 = vmatmul.mubr.bf16.gmra.mrb[0].mxu0 %v1570
        %v1784 = vpop.f32.mrb[0].mxu0
        %v1785 = vadd.f32 %v1612, %v1784
        %v1786 = vpop.f32.mrb[0].mxu0
        %v1787 = vpop.f32.mrb[0].mxu0
        %v1788 = vadd.f32 %v1612, %v1787
        %v1789 = vpop.f32.mrb[0].mxu0
        %1790 = vmatprep.mubr.bf16.mxu0 0
        %1791 = vmatmul.mubr.bf16.gmra.mrb[0].mxu0 %v1571
        %v1792 = vpop.f32.mrb[0].mxu0
        %v1793 = vadd.f32 %v1612, %v1792
        %v1794 = vpop.f32.mrb[0].mxu0
        %v1795 = vpop.f32.mrb[0].mxu0
        %v1796 = vadd.f32 %v1612, %v1795
        %v1797 = vpop.f32.mrb[0].mxu0
        %1798 = vmatprep.mubr.bf16.mxu0 0
        %1799 = vmatmul.mubr.bf16.gmra.mrb[0].mxu0 %v1572
        %v1800 = vpop.f32.mrb[0].mxu0
        %v1801 = vadd.f32 %v1612, %v1800
        %v1802 = vpop.f32.mrb[0].mxu0
        %v1803 = vpop.f32.mrb[0].mxu0
        %v1804 = vadd.f32 %v1612, %v1803
        %v1805 = vpop.f32.mrb[0].mxu0
        %1806 = vmatprep.mubr.bf16.mxu0 0
        %1807 = vmatmul.mubr.bf16.gmra.mrb[0].mxu0 %v1573
        %v1808 = vpop.f32.mrb[0].mxu0
        %v1809 = vadd.f32 %v1612, %v1808
        %v1810 = vpop.f32.mrb[0].mxu0
        %v1811 = vpop.f32.mrb[0].mxu0
        %v1812 = vadd.f32 %v1612, %v1811
        %v1813 = vpop.f32.mrb[0].mxu0
        %1814 = vmatprep.mubr.bf16.mxu0 0
        %1815 = vmatmul.mubr.bf16.gmra.mrb[0].mxu0 %v1574
        %v1816 = vpop.f32.mrb[0].mxu0
        %v1817 = vadd.f32 %v1612, %v1816
        %v1818 = vpop.f32.mrb[0].mxu0
        %v1819 = vpop.f32.mrb[0].mxu0
        %v1820 = vadd.f32 %v1612, %v1819
        %v1821 = vpop.f32.mrb[0].mxu0
        %1822 = vmatprep.mubr.bf16.mxu0 0
        %1823 = vmatmul.mubr.bf16.gmra.mrb[0].mxu0 %v1575
        %v1824 = vpop.f32.mrb[0].mxu0
        %v1825 = vadd.f32 %v1612, %v1824
        %v1826 = vpop.f32.mrb[0].mxu0
        %v1827 = vpop.f32.mrb[0].mxu0
        %v1828 = vadd.f32 %v1612, %v1827
        %v1829 = vpop.f32.mrb[0].mxu0
        %1830 = vmatprep.mubr.bf16.mxu0 0
        %1831 = vmatmul.mubr.bf16.gmra.mrb[0].mxu0 %v1576
        %v1832 = vpop.f32.mrb[0].mxu0
        %v1833 = vadd.f32 %v1612, %v1832
        %v1834 = vpop.f32.mrb[0].mxu0
        %v1835 = vpop.f32.mrb[0].mxu0
        %v1836 = vadd.f32 %v1612, %v1835
        %v1837 = vpop.f32.mrb[0].mxu0
        %1838 = vmatprep.mubr.bf16.mxu0 0
        %1839 = vmatmul.mubr.bf16.gmra.mrb[0].mxu0 %v1577
        %v1840 = vpop.f32.mrb[0].mxu0
        %v1841 = vadd.f32 %v1612, %v1840
        %v1842 = vpop.f32.mrb[0].mxu0
        %v1843 = vpop.f32.mrb[0].mxu0
        %v1844 = vadd.f32 %v1612, %v1843
        %v1845 = vpop.f32.mrb[0].mxu0
        %1846 = vmatprep.mubr.bf16.mxu0 0
        %1847 = vmatmul.mubr.bf16.gmra.mrb[0].mxu0 %v1578
        %v1848 = vpop.f32.mrb[0].mxu0
        %v1849 = vadd.f32 %v1612, %v1848
        %v1850 = vpop.f32.mrb[0].mxu0
        %v1851 = vpop.f32.mrb[0].mxu0
        %v1852 = vadd.f32 %v1612, %v1851
        %v1853 = vpop.f32.mrb[0].mxu0
        %1854 = vmatprep.mubr.bf16.mxu0 0
        %1855 = vmatmul.mubr.bf16.gmra.mrb[0].mxu0 %v1579
        %v1856 = vpop.f32.mrb[0].mxu0
        %v1857 = vadd.f32 %v1612, %v1856
        %v1858 = vpop.f32.mrb[0].mxu0
        %v1859 = vpop.f32.mrb[0].mxu0
        %v1860 = vadd.f32 %v1612, %v1859
        %v1861 = vpop.f32.mrb[0].mxu0
        %1862 = vmatprep.mubr.bf16.mxu0 0
        %1863 = vmatmul.mubr.bf16.gmra.mrb[0].mxu0 %v1580
        %v1864 = vpop.f32.mrb[0].mxu0
        %v1865 = vadd.f32 %v1612, %v1864
        %v1866 = vpop.f32.mrb[0].mxu0
        %v1867 = vpop.f32.mrb[0].mxu0
        %v1868 = vadd.f32 %v1612, %v1867
        %v1869 = vpop.f32.mrb[0].mxu0
        %1870 = vmatprep.mubr.bf16.mxu0 0
        %1871 = vmatmul.mubr.bf16.gmra.mrb[0].mxu0 %v1581
        %v1872 = vpop.f32.mrb[0].mxu0
        %v1873 = vadd.f32 %v1612, %v1872
        %v1874 = vpop.f32.mrb[0].mxu0
        %v1875 = vpop.f32.mrb[0].mxu0
        %v1876 = vadd.f32 %v1612, %v1875
        %v1877 = vpop.f32.mrb[0].mxu0
        %1878 = vmatprep.mubr.bf16.mxu0 0
        %1879 = vmatmul.mubr.bf16.gmra.mrb[0].mxu0 %v1582
        %v1880 = vpop.f32.mrb[0].mxu0
        %v1881 = vadd.f32 %v1612, %v1880
        %v1882 = vpop.f32.mrb[0].mxu0
        %v1883 = vpop.f32.mrb[0].mxu0
        %v1884 = vadd.f32 %v1612, %v1883
        %v1885 = vpop.f32.mrb[0].mxu0
        %1886 = vmatprep.mubr.bf16.mxu0 0
        %1887 = vmatmul.mubr.bf16.gmra.mrb[0].mxu0 %v1583
        %v1888 = vpop.f32.mrb[0].mxu0
        %v1889 = vadd.f32 %v1612, %v1888
        %v1890 = vpop.f32.mrb[0].mxu0
        %v1891 = vpop.f32.mrb[0].mxu0
        %v1892 = vadd.f32 %v1612, %v1891
        %v1893 = vpop.f32.mrb[0].mxu0
        %1894 = vmatprep.mubr.bf16.mxu0 0
        %1895 = vmatmul.mubr.bf16.gmra.mrb[0].mxu0 %v1584
        %v1896 = vpop.f32.mrb[0].mxu0
        %v1897 = vadd.f32 %v1612, %v1896
        %v1898 = vpop.f32.mrb[0].mxu0
        %v1899 = vpop.f32.mrb[0].mxu0
        %v1900 = vadd.f32 %v1612, %v1899
        %v1901 = vpop.f32.mrb[0].mxu0
        %1902 = vmatprep.mubr.bf16.mxu0 0
        %1903 = vmatmul.mubr.bf16.gmra.mrb[0].mxu0 %v1585
        %v1904 = vpop.f32.mrb[0].mxu0
        %v1905 = vadd.f32 %v1612, %v1904
        %v1906 = vpop.f32.mrb[0].mxu0
        %v1907 = vpop.f32.mrb[0].mxu0
        %v1908 = vadd.f32 %v1612, %v1907
        %v1909 = vpop.f32.mrb[0].mxu0
        %1910 = vmatprep.mubr.bf16.mxu0 0
        %1911 = vmatmul.mubr.bf16.gmra.mrb[0].mxu0 %v1586
        %v1912 = vpop.f32.mrb[0].mxu0
        %v1913 = vadd.f32 %v1612, %v1912
        %v1914 = vpop.f32.mrb[0].mxu0
        %v1915 = vpop.f32.mrb[0].mxu0
        %v1916 = vadd.f32 %v1612, %v1915
        %v1917 = vpop.f32.mrb[0].mxu0
        %1918 = vmatprep.mubr.bf16.mxu0 0
        %1919 = vmatmul.mubr.bf16.gmra.mrb[0].mxu0 %v1587
        %v1920 = vpop.f32.mrb[0].mxu0
        %v1921 = vadd.f32 %v1612, %v1920
        %v1922 = vpop.f32.mrb[0].mxu0
        %v1923 = vpop.f32.mrb[0].mxu0
        %v1924 = vadd.f32 %v1612, %v1923
        %v1925 = vpop.f32.mrb[0].mxu0
        %1926 = vmatprep.mubr.bf16.mxu0 0
        %1927 = vmatmul.mubr.bf16.gmra.mrb[0].mxu0 %v1588
        %v1928 = vpop.f32.mrb[0].mxu0
        %v1929 = vadd.f32 %v1612, %v1928
        %v1930 = vpop.f32.mrb[0].mxu0
        %v1931 = vpop.f32.mrb[0].mxu0
        %v1932 = vadd.f32 %v1612, %v1931
        %v1933 = vpop.f32.mrb[0].mxu0
        %1934 = vmatprep.mubr.bf16.mxu0 0
        %1935 = vmatmul.mubr.bf16.gmra.mrb[0].mxu0 %v1589
        %v1936 = vpop.f32.mrb[0].mxu0
        %v1937 = vadd.f32 %v1612, %v1936
        %v1938 = vpop.f32.mrb[0].mxu0
        %v1939 = vpop.f32.mrb[0].mxu0
        %v1940 = vadd.f32 %v1612, %v1939
        %v1941 = vpop.f32.mrb[0].mxu0
        %1942 = vmatprep.mubr.bf16.mxu0 0
        %1943 = vmatmul.mubr.bf16.gmra.mrb[0].mxu0 %v1590
        %v1944 = vpop.f32.mrb[0].mxu0
        %v1945 = vadd.f32 %v1612, %v1944
        %v1946 = vpop.f32.mrb[0].mxu0
        %v1947 = vpop.f32.mrb[0].mxu0
        %v1948 = vadd.f32 %v1612, %v1947
        %v1949 = vpop.f32.mrb[0].mxu0
        %1950 = vdwg.mxu0
        %v1951 = vmax.f32 %v1697, 0.0
        %v1952 = vmax.f32 %v1700, 0.0
        %v1953 = vmax.f32 %v1705, 0.0
        %v1954 = vmax.f32 %v1708, 0.0
        %v1955 = vmax.f32 %v1713, 0.0
        %v1956 = vmax.f32 %v1716, 0.0
        %v1957 = vmax.f32 %v1721, 0.0
        %v1958 = vmax.f32 %v1724, 0.0
        %v1959 = vmax.f32 %v1729, 0.0
        %v1960 = vmax.f32 %v1732, 0.0
        %v1961 = vmax.f32 %v1737, 0.0
        %v1962 = vmax.f32 %v1740, 0.0
        %v1963 = vmax.f32 %v1745, 0.0
        %v1964 = vmax.f32 %v1748, 0.0
        %v1965 = vmax.f32 %v1753, 0.0
        %v1966 = vmax.f32 %v1756, 0.0
        %v1967 = vmax.f32 %v1761, 0.0
        %v1968 = vmax.f32 %v1764, 0.0
        %v1969 = vmax.f32 %v1769, 0.0
        %v1970 = vmax.f32 %v1772, 0.0
        %v1971 = vmax.f32 %v1777, 0.0
        %v1972 = vmax.f32 %v1780, 0.0
        %v1973 = vmax.f32 %v1785, 0.0
        %v1974 = vmax.f32 %v1788, 0.0
        %v1975 = vmax.f32 %v1793, 0.0
        %v1976 = vmax.f32 %v1796, 0.0
        %v1977 = vmax.f32 %v1801, 0.0
        %v1978 = vmax.f32 %v1804, 0.0
        %v1979 = vmax.f32 %v1809, 0.0
        %v1980 = vmax.f32 %v1812, 0.0
        %v1981 = vmax.f32 %v1817, 0.0
        %v1982 = vmax.f32 %v1820, 0.0
        %v1983 = vmax.f32 %v1825, 0.0
        %v1984 = vmax.f32 %v1828, 0.0
        %v1985 = vmax.f32 %v1833, 0.0
        %v1986 = vmax.f32 %v1836, 0.0
        %v1987 = vmax.f32 %v1841, 0.0
        %v1988 = vmax.f32 %v1844, 0.0
        %v1989 = vmax.f32 %v1849, 0.0
        %v1990 = vmax.f32 %v1852, 0.0
        %v1991 = vmax.f32 %v1857, 0.0
        %v1992 = vmax.f32 %v1860, 0.0
        %v1993 = vmax.f32 %v1865, 0.0
        %v1994 = vmax.f32 %v1868, 0.0
        %v1995 = vmax.f32 %v1873, 0.0
        %v1996 = vmax.f32 %v1876, 0.0
        %v1997 = vmax.f32 %v1881, 0.0
        %v1998 = vmax.f32 %v1884, 0.0
        %v1999 = vmax.f32 %v1889, 0.0
        %v2000 = vmax.f32 %v1892, 0.0
        %v2001 = vmax.f32 %v1897, 0.0
        %v2002 = vmax.f32 %v1900, 0.0
        %v2003 = vmax.f32 %v1905, 0.0
        %v2004 = vmax.f32 %v1908, 0.0
        %v2005 = vmax.f32 %v1913, 0.0
        %v2006 = vmax.f32 %v1916, 0.0
        %v2007 = vmax.f32 %v1921, 0.0
        %v2008 = vmax.f32 %v1924, 0.0
        %v2009 = vmax.f32 %v1929, 0.0
        %v2010 = vmax.f32 %v1932, 0.0
        %v2011 = vmax.f32 %v1937, 0.0
        %v2012 = vmax.f32 %v1940, 0.0
        %v2013 = vmax.f32 %v1945, 0.0
        %v2014 = vmax.f32 %v1948, 0.0
        %v2015 = vpack.c.bf16 %v1952, %v1951
        %v2016 = vpack.c.bf16 %v1954, %v1953
        %v2017 = vpack.c.bf16 %v1956, %v1955
        %v2018 = vpack.c.bf16 %v1958, %v1957
        %v2019 = vpack.c.bf16 %v1960, %v1959
        %v2020 = vpack.c.bf16 %v1962, %v1961
        %v2021 = vpack.c.bf16 %v1964, %v1963
        %v2022 = vpack.c.bf16 %v1966, %v1965
        %v2023 = vpack.c.bf16 %v1968, %v1967
        %v2024 = vpack.c.bf16 %v1970, %v1969
        %v2025 = vpack.c.bf16 %v1972, %v1971
        %v2026 = vpack.c.bf16 %v1974, %v1973
        %v2027 = vpack.c.bf16 %v1976, %v1975
        %v2028 = vpack.c.bf16 %v1978, %v1977
        %v2029 = vpack.c.bf16 %v1980, %v1979
        %v2030 = vpack.c.bf16 %v1982, %v1981
        %v2031 = vpack.c.bf16 %v1984, %v1983
        %v2032 = vpack.c.bf16 %v1986, %v1985
        %v2033 = vpack.c.bf16 %v1988, %v1987
        %v2034 = vpack.c.bf16 %v1990, %v1989
        %v2035 = vpack.c.bf16 %v1992, %v1991
        %v2036 = vpack.c.bf16 %v1994, %v1993
        %v2037 = vpack.c.bf16 %v1996, %v1995
        %v2038 = vpack.c.bf16 %v1998, %v1997
        %v2039 = vpack.c.bf16 %v2000, %v1999
        %v2040 = vpack.c.bf16 %v2002, %v2001
        %v2041 = vpack.c.bf16 %v2004, %v2003
        %v2042 = vpack.c.bf16 %v2006, %v2005
        %v2043 = vpack.c.bf16 %v2008, %v2007
        %v2044 = vpack.c.bf16 %v2010, %v2009
        %v2045 = vpack.c.bf16 %v2012, %v2011
        %v2046 = vpack.c.bf16 %v2014, %v2013
        %v2047 = vld [vmem:[%s7] sm:$0xf]
        %v2048 = vld [vmem:[%s7 + $0x4] sm:$0xf]
        %v2049 = vld [vmem:[%s7 + $0x8] sm:$0xf]
        %v2050 = vld [vmem:[%s7 + $0xc] sm:$0xf]
        %v2051 = vld [vmem:[%s7 + $0x10] sm:$0xf]
        %v2052 = vld [vmem:[%s7 + $0x14] sm:$0xf]
        %v2053 = vld [vmem:[%s7 + $0x18] sm:$0xf]
        %v2054 = vld [vmem:[%s7 + $0x1c] sm:$0xf]
        %v2055 = vld [vmem:[%s7 + $0x20] sm:$0xf]
        %v2056 = vld [vmem:[%s7 + $0x24] sm:$0xf]
        %v2057 = vld [vmem:[%s7 + $0x28] sm:$0xf]
        %v2058 = vld [vmem:[%s7 + $0x2c] sm:$0xf]
        %v2059 = vld [vmem:[%s7 + $0x30] sm:$0xf]
        %v2060 = vld [vmem:[%s7 + $0x34] sm:$0xf]
        %v2061 = vld [vmem:[%s7 + $0x38] sm:$0xf]
        %v2062 = vld [vmem:[%s7 + $0x3c] sm:$0xf]
        %v2063 = vld [vmem:[%s8] sm:$0x1]
        %v2065 = vlaneseq
        %v2066 = vshrl.u32 %v2065, 7
        %v2067 = vsub.s32 0, %v2066
        %v2068 = vrot.slane %v2063, %v2067
        %v2086 = vunpack.c.l.b16 %v2047
        %v2087 = vunpack.c.l.b16 %v2048
        %v2088 = vunpack.c.l.b16 %v2049
        %v2089 = vunpack.c.l.b16 %v2050
        %v2090 = vunpack.c.l.b16 %v2051
        %v2091 = vunpack.c.l.b16 %v2052
        %v2092 = vunpack.c.l.b16 %v2053
        %v2093 = vunpack.c.l.b16 %v2054
        %v2094 = vunpack.c.l.b16 %v2055
        %v2095 = vunpack.c.l.b16 %v2056
        %v2096 = vunpack.c.l.b16 %v2057
        %v2097 = vunpack.c.l.b16 %v2058
        %v2098 = vunpack.c.l.b16 %v2059
        %v2099 = vunpack.c.l.b16 %v2060
        %v2100 = vunpack.c.l.b16 %v2061
        %v2101 = vunpack.c.l.b16 %v2062
        %v2102 = vpack.c.b16 %v2087, %v2086
        %v2103 = vpack.c.b16 %v2089, %v2088
        %v2104 = vpack.c.b16 %v2091, %v2090
        %v2105 = vpack.c.b16 %v2093, %v2092
        %v2106 = vpack.c.b16 %v2095, %v2094
        %v2107 = vpack.c.b16 %v2097, %v2096
        %v2108 = vpack.c.b16 %v2099, %v2098
        %v2109 = vpack.c.b16 %v2101, %v2100
        %2118 = vmatprep.subr.bf16.mxu0 0
        %2119 = vmatpush1.bf16.msra.mxu0 %v2102
        %2120 = vmatprep.subr.bf16.mxu0 0
        %2121 = vmatpush1.bf16.msra.mxu0 %v2103
        %2122 = vmatprep.subr.bf16.mxu0 0
        %2123 = vmatpush1.bf16.msra.mxu0 %v2104
        %2124 = vmatprep.subr.bf16.mxu0 0
        %2125 = vmatpush1.bf16.msra.mxu0 %v2105
        %2126 = vmatprep.subr.bf16.mxu0 0
        %2127 = vmatpush1.bf16.msra.mxu0 %v2106
        %2128 = vmatprep.subr.bf16.mxu0 0
        %2129 = vmatpush1.bf16.msra.mxu0 %v2107
        %2130 = vmatprep.subr.bf16.mxu0 0
        %2131 = vmatpush1.bf16.msra.mxu0 %v2108
        %2132 = vmatprep.subr.bf16.mxu0 0
        %2133 = vmatpush1.bf16.msra.mxu0 %v2109
        %2134 = vmatprep.subr.bf16.mxu0 0
        %2135 = vmatpush1.bf16.msra.mxu0 0
        %2136 = vmatprep.subr.bf16.mxu0 0
        %2137 = vmatpush1.bf16.msra.mxu0 0
        %2138 = vmatprep.subr.bf16.mxu0 0
        %2139 = vmatpush1.bf16.msra.mxu0 0
        %2140 = vmatprep.subr.bf16.mxu0 0
        %2141 = vmatpush1.bf16.msra.mxu0 0
        %2142 = vmatprep.subr.bf16.mxu0 0
        %2143 = vmatpush1.bf16.msra.mxu0 0
        %2144 = vmatprep.subr.bf16.mxu0 0
        %2145 = vmatpush1.bf16.msra.mxu0 0
        %2146 = vmatprep.subr.bf16.mxu0 0
        %2147 = vmatpush1.bf16.msra.mxu0 0
        %2148 = vmatprep.subr.bf16.mxu0 0
        %2149 = vmatpush1.bf16.msra.mxu0 0
        %2150 = vmatprep.mubr.bf16.mxu0 0
        %2151 = vmatmul.mubr.bf16.gmra.mrb[0].mxu0 %v2015
        %v2152 = vpop.f32.mrb[0].mxu0
        %v2153 = vadd.f32 %v2068, %v2152
        %v2154 = vpop.f32.mrb[0].mxu0
        %v2155 = vpop.f32.mrb[0].mxu0
        %v2156 = vadd.f32 %v2068, %v2155
        %v2157 = vpop.f32.mrb[0].mxu0
        %2158 = vmatprep.mubr.bf16.mxu0 0
        %2159 = vmatmul.mubr.bf16.gmra.mrb[0].mxu0 %v2016
        %v2160 = vpop.f32.mrb[0].mxu0
        %v2161 = vadd.f32 %v2068, %v2160
        %v2162 = vpop.f32.mrb[0].mxu0
        %v2163 = vpop.f32.mrb[0].mxu0
        %v2164 = vadd.f32 %v2068, %v2163
        %v2165 = vpop.f32.mrb[0].mxu0
        %2166 = vmatprep.mubr.bf16.mxu0 0
        %2167 = vmatmul.mubr.bf16.gmra.mrb[0].mxu0 %v2017
        %v2168 = vpop.f32.mrb[0].mxu0
        %v2169 = vadd.f32 %v2068, %v2168
        %v2170 = vpop.f32.mrb[0].mxu0
        %v2171 = vpop.f32.mrb[0].mxu0
        %v2172 = vadd.f32 %v2068, %v2171
        %v2173 = vpop.f32.mrb[0].mxu0
        %2174 = vmatprep.mubr.bf16.mxu0 0
        %2175 = vmatmul.mubr.bf16.gmra.mrb[0].mxu0 %v2018
        %v2176 = vpop.f32.mrb[0].mxu0
        %v2177 = vadd.f32 %v2068, %v2176
        %v2178 = vpop.f32.mrb[0].mxu0
        %v2179 = vpop.f32.mrb[0].mxu0
        %v2180 = vadd.f32 %v2068, %v2179
        %v2181 = vpop.f32.mrb[0].mxu0
        %2182 = vmatprep.mubr.bf16.mxu0 0
        %2183 = vmatmul.mubr.bf16.gmra.mrb[0].mxu0 %v2019
        %v2184 = vpop.f32.mrb[0].mxu0
        %v2185 = vadd.f32 %v2068, %v2184
        %v2186 = vpop.f32.mrb[0].mxu0
        %v2187 = vpop.f32.mrb[0].mxu0
        %v2188 = vadd.f32 %v2068, %v2187
        %v2189 = vpop.f32.mrb[0].mxu0
        %2190 = vmatprep.mubr.bf16.mxu0 0
        %2191 = vmatmul.mubr.bf16.gmra.mrb[0].mxu0 %v2020
        %v2192 = vpop.f32.mrb[0].mxu0
        %v2193 = vadd.f32 %v2068, %v2192
        %v2194 = vpop.f32.mrb[0].mxu0
        %v2195 = vpop.f32.mrb[0].mxu0
        %v2196 = vadd.f32 %v2068, %v2195
        %v2197 = vpop.f32.mrb[0].mxu0
        %2198 = vmatprep.mubr.bf16.mxu0 0
        %2199 = vmatmul.mubr.bf16.gmra.mrb[0].mxu0 %v2021
        %v2200 = vpop.f32.mrb[0].mxu0
        %v2201 = vadd.f32 %v2068, %v2200
        %v2202 = vpop.f32.mrb[0].mxu0
        %v2203 = vpop.f32.mrb[0].mxu0
        %v2204 = vadd.f32 %v2068, %v2203
        %v2205 = vpop.f32.mrb[0].mxu0
        %2206 = vmatprep.mubr.bf16.mxu0 0
        %2207 = vmatmul.mubr.bf16.gmra.mrb[0].mxu0 %v2022
        %v2208 = vpop.f32.mrb[0].mxu0
        %v2209 = vadd.f32 %v2068, %v2208
        %v2210 = vpop.f32.mrb[0].mxu0
        %v2211 = vpop.f32.mrb[0].mxu0
        %v2212 = vadd.f32 %v2068, %v2211
        %v2213 = vpop.f32.mrb[0].mxu0
        %2214 = vmatprep.mubr.bf16.mxu0 0
        %2215 = vmatmul.mubr.bf16.gmra.mrb[0].mxu0 %v2023
        %v2216 = vpop.f32.mrb[0].mxu0
        %v2217 = vadd.f32 %v2068, %v2216
        %v2218 = vpop.f32.mrb[0].mxu0
        %v2219 = vpop.f32.mrb[0].mxu0
        %v2220 = vadd.f32 %v2068, %v2219
        %v2221 = vpop.f32.mrb[0].mxu0
        %2222 = vmatprep.mubr.bf16.mxu0 0
        %2223 = vmatmul.mubr.bf16.gmra.mrb[0].mxu0 %v2024
        %v2224 = vpop.f32.mrb[0].mxu0
        %v2225 = vadd.f32 %v2068, %v2224
        %v2226 = vpop.f32.mrb[0].mxu0
        %v2227 = vpop.f32.mrb[0].mxu0
        %v2228 = vadd.f32 %v2068, %v2227
        %v2229 = vpop.f32.mrb[0].mxu0
        %2230 = vmatprep.mubr.bf16.mxu0 0
        %2231 = vmatmul.mubr.bf16.gmra.mrb[0].mxu0 %v2025
        %v2232 = vpop.f32.mrb[0].mxu0
        %v2233 = vadd.f32 %v2068, %v2232
        %v2234 = vpop.f32.mrb[0].mxu0
        %v2235 = vpop.f32.mrb[0].mxu0
        %v2236 = vadd.f32 %v2068, %v2235
        %v2237 = vpop.f32.mrb[0].mxu0
        %2238 = vmatprep.mubr.bf16.mxu0 0
        %2239 = vmatmul.mubr.bf16.gmra.mrb[0].mxu0 %v2026
        %v2240 = vpop.f32.mrb[0].mxu0
        %v2241 = vadd.f32 %v2068, %v2240
        %v2242 = vpop.f32.mrb[0].mxu0
        %v2243 = vpop.f32.mrb[0].mxu0
        %v2244 = vadd.f32 %v2068, %v2243
        %v2245 = vpop.f32.mrb[0].mxu0
        %2246 = vmatprep.mubr.bf16.mxu0 0
        %2247 = vmatmul.mubr.bf16.gmra.mrb[0].mxu0 %v2027
        %v2248 = vpop.f32.mrb[0].mxu0
        %v2249 = vadd.f32 %v2068, %v2248
        %v2250 = vpop.f32.mrb[0].mxu0
        %v2251 = vpop.f32.mrb[0].mxu0
        %v2252 = vadd.f32 %v2068, %v2251
        %v2253 = vpop.f32.mrb[0].mxu0
        %2254 = vmatprep.mubr.bf16.mxu0 0
        %2255 = vmatmul.mubr.bf16.gmra.mrb[0].mxu0 %v2028
        %v2256 = vpop.f32.mrb[0].mxu0
        %v2257 = vadd.f32 %v2068, %v2256
        %v2258 = vpop.f32.mrb[0].mxu0
        %v2259 = vpop.f32.mrb[0].mxu0
        %v2260 = vadd.f32 %v2068, %v2259
        %v2261 = vpop.f32.mrb[0].mxu0
        %2262 = vmatprep.mubr.bf16.mxu0 0
        %2263 = vmatmul.mubr.bf16.gmra.mrb[0].mxu0 %v2029
        %v2264 = vpop.f32.mrb[0].mxu0
        %v2265 = vadd.f32 %v2068, %v2264
        %v2266 = vpop.f32.mrb[0].mxu0
        %v2267 = vpop.f32.mrb[0].mxu0
        %v2268 = vadd.f32 %v2068, %v2267
        %v2269 = vpop.f32.mrb[0].mxu0
        %2270 = vmatprep.mubr.bf16.mxu0 0
        %2271 = vmatmul.mubr.bf16.gmra.mrb[0].mxu0 %v2030
        %v2272 = vpop.f32.mrb[0].mxu0
        %v2273 = vadd.f32 %v2068, %v2272
        %v2274 = vpop.f32.mrb[0].mxu0
        %v2275 = vpop.f32.mrb[0].mxu0
        %v2276 = vadd.f32 %v2068, %v2275
        %v2277 = vpop.f32.mrb[0].mxu0
        %2278 = vmatprep.mubr.bf16.mxu0 0
        %2279 = vmatmul.mubr.bf16.gmra.mrb[0].mxu0 %v2031
        %v2280 = vpop.f32.mrb[0].mxu0
        %v2281 = vadd.f32 %v2068, %v2280
        %v2282 = vpop.f32.mrb[0].mxu0
        %v2283 = vpop.f32.mrb[0].mxu0
        %v2284 = vadd.f32 %v2068, %v2283
        %v2285 = vpop.f32.mrb[0].mxu0
        %2286 = vmatprep.mubr.bf16.mxu0 0
        %2287 = vmatmul.mubr.bf16.gmra.mrb[0].mxu0 %v2032
        %v2288 = vpop.f32.mrb[0].mxu0
        %v2289 = vadd.f32 %v2068, %v2288
        %v2290 = vpop.f32.mrb[0].mxu0
        %v2291 = vpop.f32.mrb[0].mxu0
        %v2292 = vadd.f32 %v2068, %v2291
        %v2293 = vpop.f32.mrb[0].mxu0
        %2294 = vmatprep.mubr.bf16.mxu0 0
        %2295 = vmatmul.mubr.bf16.gmra.mrb[0].mxu0 %v2033
        %v2296 = vpop.f32.mrb[0].mxu0
        %v2297 = vadd.f32 %v2068, %v2296
        %v2298 = vpop.f32.mrb[0].mxu0
        %v2299 = vpop.f32.mrb[0].mxu0
        %v2300 = vadd.f32 %v2068, %v2299
        %v2301 = vpop.f32.mrb[0].mxu0
        %2302 = vmatprep.mubr.bf16.mxu0 0
        %2303 = vmatmul.mubr.bf16.gmra.mrb[0].mxu0 %v2034
        %v2304 = vpop.f32.mrb[0].mxu0
        %v2305 = vadd.f32 %v2068, %v2304
        %v2306 = vpop.f32.mrb[0].mxu0
        %v2307 = vpop.f32.mrb[0].mxu0
        %v2308 = vadd.f32 %v2068, %v2307
        %v2309 = vpop.f32.mrb[0].mxu0
        %2310 = vmatprep.mubr.bf16.mxu0 0
        %2311 = vmatmul.mubr.bf16.gmra.mrb[0].mxu0 %v2035
        %v2312 = vpop.f32.mrb[0].mxu0
        %v2313 = vadd.f32 %v2068, %v2312
        %v2314 = vpop.f32.mrb[0].mxu0
        %v2315 = vpop.f32.mrb[0].mxu0
        %v2316 = vadd.f32 %v2068, %v2315
        %v2317 = vpop.f32.mrb[0].mxu0
        %2318 = vmatprep.mubr.bf16.mxu0 0
        %2319 = vmatmul.mubr.bf16.gmra.mrb[0].mxu0 %v2036
        %v2320 = vpop.f32.mrb[0].mxu0
        %v2321 = vadd.f32 %v2068, %v2320
        %v2322 = vpop.f32.mrb[0].mxu0
        %v2323 = vpop.f32.mrb[0].mxu0
        %v2324 = vadd.f32 %v2068, %v2323
        %v2325 = vpop.f32.mrb[0].mxu0
        %2326 = vmatprep.mubr.bf16.mxu0 0
        %2327 = vmatmul.mubr.bf16.gmra.mrb[0].mxu0 %v2037
        %v2328 = vpop.f32.mrb[0].mxu0
        %v2329 = vadd.f32 %v2068, %v2328
        %v2330 = vpop.f32.mrb[0].mxu0
        %v2331 = vpop.f32.mrb[0].mxu0
        %v2332 = vadd.f32 %v2068, %v2331
        %v2333 = vpop.f32.mrb[0].mxu0
        %2334 = vmatprep.mubr.bf16.mxu0 0
        %2335 = vmatmul.mubr.bf16.gmra.mrb[0].mxu0 %v2038
        %v2336 = vpop.f32.mrb[0].mxu0
        %v2337 = vadd.f32 %v2068, %v2336
        %v2338 = vpop.f32.mrb[0].mxu0
        %v2339 = vpop.f32.mrb[0].mxu0
        %v2340 = vadd.f32 %v2068, %v2339
        %v2341 = vpop.f32.mrb[0].mxu0
        %2342 = vmatprep.mubr.bf16.mxu0 0
        %2343 = vmatmul.mubr.bf16.gmra.mrb[0].mxu0 %v2039
        %v2344 = vpop.f32.mrb[0].mxu0
        %v2345 = vadd.f32 %v2068, %v2344
        %v2346 = vpop.f32.mrb[0].mxu0
        %v2347 = vpop.f32.mrb[0].mxu0
        %v2348 = vadd.f32 %v2068, %v2347
        %v2349 = vpop.f32.mrb[0].mxu0
        %2350 = vmatprep.mubr.bf16.mxu0 0
        %2351 = vmatmul.mubr.bf16.gmra.mrb[0].mxu0 %v2040
        %v2352 = vpop.f32.mrb[0].mxu0
        %v2353 = vadd.f32 %v2068, %v2352
        %v2354 = vpop.f32.mrb[0].mxu0
        %v2355 = vpop.f32.mrb[0].mxu0
        %v2356 = vadd.f32 %v2068, %v2355
        %v2357 = vpop.f32.mrb[0].mxu0
        %2358 = vmatprep.mubr.bf16.mxu0 0
        %2359 = vmatmul.mubr.bf16.gmra.mrb[0].mxu0 %v2041
        %v2360 = vpop.f32.mrb[0].mxu0
        %v2361 = vadd.f32 %v2068, %v2360
        %v2362 = vpop.f32.mrb[0].mxu0
        %v2363 = vpop.f32.mrb[0].mxu0
        %v2364 = vadd.f32 %v2068, %v2363
        %v2365 = vpop.f32.mrb[0].mxu0
        %2366 = vmatprep.mubr.bf16.mxu0 0
        %2367 = vmatmul.mubr.bf16.gmra.mrb[0].mxu0 %v2042
        %v2368 = vpop.f32.mrb[0].mxu0
        %v2369 = vadd.f32 %v2068, %v2368
        %v2370 = vpop.f32.mrb[0].mxu0
        %v2371 = vpop.f32.mrb[0].mxu0
        %v2372 = vadd.f32 %v2068, %v2371
        %v2373 = vpop.f32.mrb[0].mxu0
        %2374 = vmatprep.mubr.bf16.mxu0 0
        %2375 = vmatmul.mubr.bf16.gmra.mrb[0].mxu0 %v2043
        %v2376 = vpop.f32.mrb[0].mxu0
        %v2377 = vadd.f32 %v2068, %v2376
        %v2378 = vpop.f32.mrb[0].mxu0
        %v2379 = vpop.f32.mrb[0].mxu0
        %v2380 = vadd.f32 %v2068, %v2379
        %v2381 = vpop.f32.mrb[0].mxu0
        %2382 = vmatprep.mubr.bf16.mxu0 0
        %2383 = vmatmul.mubr.bf16.gmra.mrb[0].mxu0 %v2044
        %v2384 = vpop.f32.mrb[0].mxu0
        %v2385 = vadd.f32 %v2068, %v2384
        %v2386 = vpop.f32.mrb[0].mxu0
        %v2387 = vpop.f32.mrb[0].mxu0
        %v2388 = vadd.f32 %v2068, %v2387
        %v2389 = vpop.f32.mrb[0].mxu0
        %2390 = vmatprep.mubr.bf16.mxu0 0
        %2391 = vmatmul.mubr.bf16.gmra.mrb[0].mxu0 %v2045
        %v2392 = vpop.f32.mrb[0].mxu0
        %v2393 = vadd.f32 %v2068, %v2392
        %v2394 = vpop.f32.mrb[0].mxu0
        %v2395 = vpop.f32.mrb[0].mxu0
        %v2396 = vadd.f32 %v2068, %v2395
        %v2397 = vpop.f32.mrb[0].mxu0
        %2398 = vmatprep.mubr.bf16.mxu0 0
        %2399 = vmatmul.mubr.bf16.gmra.mrb[0].mxu0 %v2046
        %v2400 = vpop.f32.mrb[0].mxu0
        %v2401 = vadd.f32 %v2068, %v2400
        %v2402 = vpop.f32.mrb[0].mxu0
        %v2403 = vpop.f32.mrb[0].mxu0
        %v2404 = vadd.f32 %v2068, %v2403
        %v2405 = vpop.f32.mrb[0].mxu0
        %2406 = vdwg.mxu0
        %v2407 = vmax.f32 %v2153, 0.0
        %v2408 = vmax.f32 %v2156, 0.0
        %v2409 = vmax.f32 %v2161, 0.0
        %v2410 = vmax.f32 %v2164, 0.0
        %v2411 = vmax.f32 %v2169, 0.0
        %v2412 = vmax.f32 %v2172, 0.0
        %v2413 = vmax.f32 %v2177, 0.0
        %v2414 = vmax.f32 %v2180, 0.0
        %v2415 = vmax.f32 %v2185, 0.0
        %v2416 = vmax.f32 %v2188, 0.0
        %v2417 = vmax.f32 %v2193, 0.0
        %v2418 = vmax.f32 %v2196, 0.0
        %v2419 = vmax.f32 %v2201, 0.0
        %v2420 = vmax.f32 %v2204, 0.0
        %v2421 = vmax.f32 %v2209, 0.0
        %v2422 = vmax.f32 %v2212, 0.0
        %v2423 = vmax.f32 %v2217, 0.0
        %v2424 = vmax.f32 %v2220, 0.0
        %v2425 = vmax.f32 %v2225, 0.0
        %v2426 = vmax.f32 %v2228, 0.0
        %v2427 = vmax.f32 %v2233, 0.0
        %v2428 = vmax.f32 %v2236, 0.0
        %v2429 = vmax.f32 %v2241, 0.0
        %v2430 = vmax.f32 %v2244, 0.0
        %v2431 = vmax.f32 %v2249, 0.0
        %v2432 = vmax.f32 %v2252, 0.0
        %v2433 = vmax.f32 %v2257, 0.0
        %v2434 = vmax.f32 %v2260, 0.0
        %v2435 = vmax.f32 %v2265, 0.0
        %v2436 = vmax.f32 %v2268, 0.0
        %v2437 = vmax.f32 %v2273, 0.0
        %v2438 = vmax.f32 %v2276, 0.0
        %v2439 = vmax.f32 %v2281, 0.0
        %v2440 = vmax.f32 %v2284, 0.0
        %v2441 = vmax.f32 %v2289, 0.0
        %v2442 = vmax.f32 %v2292, 0.0
        %v2443 = vmax.f32 %v2297, 0.0
        %v2444 = vmax.f32 %v2300, 0.0
        %v2445 = vmax.f32 %v2305, 0.0
        %v2446 = vmax.f32 %v2308, 0.0
        %v2447 = vmax.f32 %v2313, 0.0
        %v2448 = vmax.f32 %v2316, 0.0
        %v2449 = vmax.f32 %v2321, 0.0
        %v2450 = vmax.f32 %v2324, 0.0
        %v2451 = vmax.f32 %v2329, 0.0
        %v2452 = vmax.f32 %v2332, 0.0
        %v2453 = vmax.f32 %v2337, 0.0
        %v2454 = vmax.f32 %v2340, 0.0
        %v2455 = vmax.f32 %v2345, 0.0
        %v2456 = vmax.f32 %v2348, 0.0
        %v2457 = vmax.f32 %v2353, 0.0
        %v2458 = vmax.f32 %v2356, 0.0
        %v2459 = vmax.f32 %v2361, 0.0
        %v2460 = vmax.f32 %v2364, 0.0
        %v2461 = vmax.f32 %v2369, 0.0
        %v2462 = vmax.f32 %v2372, 0.0
        %v2463 = vmax.f32 %v2377, 0.0
        %v2464 = vmax.f32 %v2380, 0.0
        %v2465 = vmax.f32 %v2385, 0.0
        %v2466 = vmax.f32 %v2388, 0.0
        %v2467 = vmax.f32 %v2393, 0.0
        %v2468 = vmax.f32 %v2396, 0.0
        %v2469 = vmax.f32 %v2401, 0.0
        %v2470 = vmax.f32 %v2404, 0.0
        %v2471 = vpack.c.bf16 %v2408, %v2407
        %v2472 = vpack.c.bf16 %v2410, %v2409
        %v2473 = vpack.c.bf16 %v2412, %v2411
        %v2474 = vpack.c.bf16 %v2414, %v2413
        %v2475 = vpack.c.bf16 %v2416, %v2415
        %v2476 = vpack.c.bf16 %v2418, %v2417
        %v2477 = vpack.c.bf16 %v2420, %v2419
        %v2478 = vpack.c.bf16 %v2422, %v2421
        %v2479 = vpack.c.bf16 %v2424, %v2423
        %v2480 = vpack.c.bf16 %v2426, %v2425
        %v2481 = vpack.c.bf16 %v2428, %v2427
        %v2482 = vpack.c.bf16 %v2430, %v2429
        %v2483 = vpack.c.bf16 %v2432, %v2431
        %v2484 = vpack.c.bf16 %v2434, %v2433
        %v2485 = vpack.c.bf16 %v2436, %v2435
        %v2486 = vpack.c.bf16 %v2438, %v2437
        %v2487 = vpack.c.bf16 %v2440, %v2439
        %v2488 = vpack.c.bf16 %v2442, %v2441
        %v2489 = vpack.c.bf16 %v2444, %v2443
        %v2490 = vpack.c.bf16 %v2446, %v2445
        %v2491 = vpack.c.bf16 %v2448, %v2447
        %v2492 = vpack.c.bf16 %v2450, %v2449
        %v2493 = vpack.c.bf16 %v2452, %v2451
        %v2494 = vpack.c.bf16 %v2454, %v2453
        %v2495 = vpack.c.bf16 %v2456, %v2455
        %v2496 = vpack.c.bf16 %v2458, %v2457
        %v2497 = vpack.c.bf16 %v2460, %v2459
        %v2498 = vpack.c.bf16 %v2462, %v2461
        %v2499 = vpack.c.bf16 %v2464, %v2463
        %v2500 = vpack.c.bf16 %v2466, %v2465
        %v2501 = vpack.c.bf16 %v2468, %v2467
        %v2502 = vpack.c.bf16 %v2470, %v2469
        %v2503 = vld [vmem:[%s9] sm:$0xf]
        %v2504 = vld [vmem:[%s9 + $0x4] sm:$0xf]
        %v2505 = vld [vmem:[%s9 + $0x8] sm:$0xf]
        %v2506 = vld [vmem:[%s9 + $0xc] sm:$0xf]
        %v2507 = vld [vmem:[%s9 + $0x10] sm:$0xf]
        %v2508 = vld [vmem:[%s9 + $0x14] sm:$0xf]
        %v2509 = vld [vmem:[%s9 + $0x18] sm:$0xf]
        %v2510 = vld [vmem:[%s9 + $0x1c] sm:$0xf]
        %v2511 = vld [vmem:[%s9 + $0x20] sm:$0xf]
        %v2512 = vld [vmem:[%s9 + $0x24] sm:$0xf]
        %v2513 = vld [vmem:[%s9 + $0x28] sm:$0xf]
        %v2514 = vld [vmem:[%s9 + $0x2c] sm:$0xf]
        %v2515 = vld [vmem:[%s9 + $0x30] sm:$0xf]
        %v2516 = vld [vmem:[%s9 + $0x34] sm:$0xf]
        %v2517 = vld [vmem:[%s9 + $0x38] sm:$0xf]
        %v2518 = vld [vmem:[%s9 + $0x3c] sm:$0xf]
        %v2519 = vld [vmem:[%s10] sm:$0x1]
        %v2521 = vlaneseq
        %v2522 = vshrl.u32 %v2521, 7
        %v2523 = vsub.s32 0, %v2522
        %v2524 = vrot.slane %v2519, %v2523
        %v2542 = vunpack.c.l.b16 %v2503
        %v2543 = vunpack.c.l.b16 %v2504
        %v2544 = vunpack.c.l.b16 %v2505
        %v2545 = vunpack.c.l.b16 %v2506
        %v2546 = vunpack.c.l.b16 %v2507
        %v2547 = vunpack.c.l.b16 %v2508
        %v2548 = vunpack.c.l.b16 %v2509
        %v2549 = vunpack.c.l.b16 %v2510
        %v2550 = vunpack.c.l.b16 %v2511
        %v2551 = vunpack.c.l.b16 %v2512
        %v2552 = vunpack.c.l.b16 %v2513
        %v2553 = vunpack.c.l.b16 %v2514
        %v2554 = vunpack.c.l.b16 %v2515
        %v2555 = vunpack.c.l.b16 %v2516
        %v2556 = vunpack.c.l.b16 %v2517
        %v2557 = vunpack.c.l.b16 %v2518
        %v2558 = vpack.c.b16 %v2543, %v2542
        %v2559 = vpack.c.b16 %v2545, %v2544
        %v2560 = vpack.c.b16 %v2547, %v2546
        %v2561 = vpack.c.b16 %v2549, %v2548
        %v2562 = vpack.c.b16 %v2551, %v2550
        %v2563 = vpack.c.b16 %v2553, %v2552
        %v2564 = vpack.c.b16 %v2555, %v2554
        %v2565 = vpack.c.b16 %v2557, %v2556
        %2574 = vmatprep.subr.bf16.mxu0 0
        %2575 = vmatpush1.bf16.msra.mxu0 %v2558
        %2576 = vmatprep.subr.bf16.mxu0 0
        %2577 = vmatpush1.bf16.msra.mxu0 %v2559
        %2578 = vmatprep.subr.bf16.mxu0 0
        %2579 = vmatpush1.bf16.msra.mxu0 %v2560
        %2580 = vmatprep.subr.bf16.mxu0 0
        %2581 = vmatpush1.bf16.msra.mxu0 %v2561
        %2582 = vmatprep.subr.bf16.mxu0 0
        %2583 = vmatpush1.bf16.msra.mxu0 %v2562
        %2584 = vmatprep.subr.bf16.mxu0 0
        %2585 = vmatpush1.bf16.msra.mxu0 %v2563
        %2586 = vmatprep.subr.bf16.mxu0 0
        %2587 = vmatpush1.bf16.msra.mxu0 %v2564
        %2588 = vmatprep.subr.bf16.mxu0 0
        %2589 = vmatpush1.bf16.msra.mxu0 %v2565
        %2590 = vmatprep.subr.bf16.mxu0 0
        %2591 = vmatpush1.bf16.msra.mxu0 0
        %2592 = vmatprep.subr.bf16.mxu0 0
        %2593 = vmatpush1.bf16.msra.mxu0 0
        %2594 = vmatprep.subr.bf16.mxu0 0
        %2595 = vmatpush1.bf16.msra.mxu0 0
        %2596 = vmatprep.subr.bf16.mxu0 0
        %2597 = vmatpush1.bf16.msra.mxu0 0
        %2598 = vmatprep.subr.bf16.mxu0 0
        %2599 = vmatpush1.bf16.msra.mxu0 0
        %2600 = vmatprep.subr.bf16.mxu0 0
        %2601 = vmatpush1.bf16.msra.mxu0 0
        %2602 = vmatprep.subr.bf16.mxu0 0
        %2603 = vmatpush1.bf16.msra.mxu0 0
        %2604 = vmatprep.subr.bf16.mxu0 0
        %2605 = vmatpush1.bf16.msra.mxu0 0
        %2606 = vmatprep.mubr.bf16.mxu0 0
        %2607 = vmatmul.mubr.bf16.gmra.mrb[0].mxu0 %v2471
        %v2608 = vpop.f32.mrb[0].mxu0
        %v2609 = vadd.f32 %v2524, %v2608
        %v2610 = vpop.f32.mrb[0].mxu0
        %v2611 = vpop.f32.mrb[0].mxu0
        %v2612 = vadd.f32 %v2524, %v2611
        %v2613 = vpop.f32.mrb[0].mxu0
        %2614 = vmatprep.mubr.bf16.mxu0 0
        %2615 = vmatmul.mubr.bf16.gmra.mrb[0].mxu0 %v2472
        %v2616 = vpop.f32.mrb[0].mxu0
        %v2617 = vadd.f32 %v2524, %v2616
        %v2618 = vpop.f32.mrb[0].mxu0
        %v2619 = vpop.f32.mrb[0].mxu0
        %v2620 = vadd.f32 %v2524, %v2619
        %v2621 = vpop.f32.mrb[0].mxu0
        %2622 = vmatprep.mubr.bf16.mxu0 0
        %2623 = vmatmul.mubr.bf16.gmra.mrb[0].mxu0 %v2473
        %v2624 = vpop.f32.mrb[0].mxu0
        %v2625 = vadd.f32 %v2524, %v2624
        %v2626 = vpop.f32.mrb[0].mxu0
        %v2627 = vpop.f32.mrb[0].mxu0
        %v2628 = vadd.f32 %v2524, %v2627
        %v2629 = vpop.f32.mrb[0].mxu0
        %2630 = vmatprep.mubr.bf16.mxu0 0
        %2631 = vmatmul.mubr.bf16.gmra.mrb[0].mxu0 %v2474
        %v2632 = vpop.f32.mrb[0].mxu0
        %v2633 = vadd.f32 %v2524, %v2632
        %v2634 = vpop.f32.mrb[0].mxu0
        %v2635 = vpop.f32.mrb[0].mxu0
        %v2636 = vadd.f32 %v2524, %v2635
        %v2637 = vpop.f32.mrb[0].mxu0
        %2638 = vmatprep.mubr.bf16.mxu0 0
        %2639 = vmatmul.mubr.bf16.gmra.mrb[0].mxu0 %v2475
        %v2640 = vpop.f32.mrb[0].mxu0
        %v2641 = vadd.f32 %v2524, %v2640
        %v2642 = vpop.f32.mrb[0].mxu0
        %v2643 = vpop.f32.mrb[0].mxu0
        %v2644 = vadd.f32 %v2524, %v2643
        %v2645 = vpop.f32.mrb[0].mxu0
        %2646 = vmatprep.mubr.bf16.mxu0 0
        %2647 = vmatmul.mubr.bf16.gmra.mrb[0].mxu0 %v2476
        %v2648 = vpop.f32.mrb[0].mxu0
        %v2649 = vadd.f32 %v2524, %v2648
        %v2650 = vpop.f32.mrb[0].mxu0
        %v2651 = vpop.f32.mrb[0].mxu0
        %v2652 = vadd.f32 %v2524, %v2651
        %v2653 = vpop.f32.mrb[0].mxu0
        %2654 = vmatprep.mubr.bf16.mxu0 0
        %2655 = vmatmul.mubr.bf16.gmra.mrb[0].mxu0 %v2477
        %v2656 = vpop.f32.mrb[0].mxu0
        %v2657 = vadd.f32 %v2524, %v2656
        %v2658 = vpop.f32.mrb[0].mxu0
        %v2659 = vpop.f32.mrb[0].mxu0
        %v2660 = vadd.f32 %v2524, %v2659
        %v2661 = vpop.f32.mrb[0].mxu0
        %2662 = vmatprep.mubr.bf16.mxu0 0
        %2663 = vmatmul.mubr.bf16.gmra.mrb[0].mxu0 %v2478
        %v2664 = vpop.f32.mrb[0].mxu0
        %v2665 = vadd.f32 %v2524, %v2664
        %v2666 = vpop.f32.mrb[0].mxu0
        %v2667 = vpop.f32.mrb[0].mxu0
        %v2668 = vadd.f32 %v2524, %v2667
        %v2669 = vpop.f32.mrb[0].mxu0
        %2670 = vmatprep.mubr.bf16.mxu0 0
        %2671 = vmatmul.mubr.bf16.gmra.mrb[0].mxu0 %v2479
        %v2672 = vpop.f32.mrb[0].mxu0
        %v2673 = vadd.f32 %v2524, %v2672
        %v2674 = vpop.f32.mrb[0].mxu0
        %v2675 = vpop.f32.mrb[0].mxu0
        %v2676 = vadd.f32 %v2524, %v2675
        %v2677 = vpop.f32.mrb[0].mxu0
        %2678 = vmatprep.mubr.bf16.mxu0 0
        %2679 = vmatmul.mubr.bf16.gmra.mrb[0].mxu0 %v2480
        %v2680 = vpop.f32.mrb[0].mxu0
        %v2681 = vadd.f32 %v2524, %v2680
        %v2682 = vpop.f32.mrb[0].mxu0
        %v2683 = vpop.f32.mrb[0].mxu0
        %v2684 = vadd.f32 %v2524, %v2683
        %v2685 = vpop.f32.mrb[0].mxu0
        %2686 = vmatprep.mubr.bf16.mxu0 0
        %2687 = vmatmul.mubr.bf16.gmra.mrb[0].mxu0 %v2481
        %v2688 = vpop.f32.mrb[0].mxu0
        %v2689 = vadd.f32 %v2524, %v2688
        %v2690 = vpop.f32.mrb[0].mxu0
        %v2691 = vpop.f32.mrb[0].mxu0
        %v2692 = vadd.f32 %v2524, %v2691
        %v2693 = vpop.f32.mrb[0].mxu0
        %2694 = vmatprep.mubr.bf16.mxu0 0
        %2695 = vmatmul.mubr.bf16.gmra.mrb[0].mxu0 %v2482
        %v2696 = vpop.f32.mrb[0].mxu0
        %v2697 = vadd.f32 %v2524, %v2696
        %v2698 = vpop.f32.mrb[0].mxu0
        %v2699 = vpop.f32.mrb[0].mxu0
        %v2700 = vadd.f32 %v2524, %v2699
        %v2701 = vpop.f32.mrb[0].mxu0
        %2702 = vmatprep.mubr.bf16.mxu0 0
        %2703 = vmatmul.mubr.bf16.gmra.mrb[0].mxu0 %v2483
        %v2704 = vpop.f32.mrb[0].mxu0
        %v2705 = vadd.f32 %v2524, %v2704
        %v2706 = vpop.f32.mrb[0].mxu0
        %v2707 = vpop.f32.mrb[0].mxu0
        %v2708 = vadd.f32 %v2524, %v2707
        %v2709 = vpop.f32.mrb[0].mxu0
        %2710 = vmatprep.mubr.bf16.mxu0 0
        %2711 = vmatmul.mubr.bf16.gmra.mrb[0].mxu0 %v2484
        %v2712 = vpop.f32.mrb[0].mxu0
        %v2713 = vadd.f32 %v2524, %v2712
        %v2714 = vpop.f32.mrb[0].mxu0
        %v2715 = vpop.f32.mrb[0].mxu0
        %v2716 = vadd.f32 %v2524, %v2715
        %v2717 = vpop.f32.mrb[0].mxu0
        %2718 = vmatprep.mubr.bf16.mxu0 0
        %2719 = vmatmul.mubr.bf16.gmra.mrb[0].mxu0 %v2485
        %v2720 = vpop.f32.mrb[0].mxu0
        %v2721 = vadd.f32 %v2524, %v2720
        %v2722 = vpop.f32.mrb[0].mxu0
        %v2723 = vpop.f32.mrb[0].mxu0
        %v2724 = vadd.f32 %v2524, %v2723
        %v2725 = vpop.f32.mrb[0].mxu0
        %2726 = vmatprep.mubr.bf16.mxu0 0
        %2727 = vmatmul.mubr.bf16.gmra.mrb[0].mxu0 %v2486
        %v2728 = vpop.f32.mrb[0].mxu0
        %v2729 = vadd.f32 %v2524, %v2728
        %v2730 = vpop.f32.mrb[0].mxu0
        %v2731 = vpop.f32.mrb[0].mxu0
        %v2732 = vadd.f32 %v2524, %v2731
        %v2733 = vpop.f32.mrb[0].mxu0
        %2734 = vmatprep.mubr.bf16.mxu0 0
        %2735 = vmatmul.mubr.bf16.gmra.mrb[0].mxu0 %v2487
        %v2736 = vpop.f32.mrb[0].mxu0
        %v2737 = vadd.f32 %v2524, %v2736
        %v2738 = vpop.f32.mrb[0].mxu0
        %v2739 = vpop.f32.mrb[0].mxu0
        %v2740 = vadd.f32 %v2524, %v2739
        %v2741 = vpop.f32.mrb[0].mxu0
        %2742 = vmatprep.mubr.bf16.mxu0 0
        %2743 = vmatmul.mubr.bf16.gmra.mrb[0].mxu0 %v2488
        %v2744 = vpop.f32.mrb[0].mxu0
        %v2745 = vadd.f32 %v2524, %v2744
        %v2746 = vpop.f32.mrb[0].mxu0
        %v2747 = vpop.f32.mrb[0].mxu0
        %v2748 = vadd.f32 %v2524, %v2747
        %v2749 = vpop.f32.mrb[0].mxu0
        %2750 = vmatprep.mubr.bf16.mxu0 0
        %2751 = vmatmul.mubr.bf16.gmra.mrb[0].mxu0 %v2489
        %v2752 = vpop.f32.mrb[0].mxu0
        %v2753 = vadd.f32 %v2524, %v2752
        %v2754 = vpop.f32.mrb[0].mxu0
        %v2755 = vpop.f32.mrb[0].mxu0
        %v2756 = vadd.f32 %v2524, %v2755
        %v2757 = vpop.f32.mrb[0].mxu0
        %2758 = vmatprep.mubr.bf16.mxu0 0
        %2759 = vmatmul.mubr.bf16.gmra.mrb[0].mxu0 %v2490
        %v2760 = vpop.f32.mrb[0].mxu0
        %v2761 = vadd.f32 %v2524, %v2760
        %v2762 = vpop.f32.mrb[0].mxu0
        %v2763 = vpop.f32.mrb[0].mxu0
        %v2764 = vadd.f32 %v2524, %v2763
        %v2765 = vpop.f32.mrb[0].mxu0
        %2766 = vmatprep.mubr.bf16.mxu0 0
        %2767 = vmatmul.mubr.bf16.gmra.mrb[0].mxu0 %v2491
        %v2768 = vpop.f32.mrb[0].mxu0
        %v2769 = vadd.f32 %v2524, %v2768
        %v2770 = vpop.f32.mrb[0].mxu0
        %v2771 = vpop.f32.mrb[0].mxu0
        %v2772 = vadd.f32 %v2524, %v2771
        %v2773 = vpop.f32.mrb[0].mxu0
        %2774 = vmatprep.mubr.bf16.mxu0 0
        %2775 = vmatmul.mubr.bf16.gmra.mrb[0].mxu0 %v2492
        %v2776 = vpop.f32.mrb[0].mxu0
        %v2777 = vadd.f32 %v2524, %v2776
        %v2778 = vpop.f32.mrb[0].mxu0
        %v2779 = vpop.f32.mrb[0].mxu0
        %v2780 = vadd.f32 %v2524, %v2779
        %v2781 = vpop.f32.mrb[0].mxu0
        %2782 = vmatprep.mubr.bf16.mxu0 0
        %2783 = vmatmul.mubr.bf16.gmra.mrb[0].mxu0 %v2493
        %v2784 = vpop.f32.mrb[0].mxu0
        %v2785 = vadd.f32 %v2524, %v2784
        %v2786 = vpop.f32.mrb[0].mxu0
        %v2787 = vpop.f32.mrb[0].mxu0
        %v2788 = vadd.f32 %v2524, %v2787
        %v2789 = vpop.f32.mrb[0].mxu0
        %2790 = vmatprep.mubr.bf16.mxu0 0
        %2791 = vmatmul.mubr.bf16.gmra.mrb[0].mxu0 %v2494
        %v2792 = vpop.f32.mrb[0].mxu0
        %v2793 = vadd.f32 %v2524, %v2792
        %v2794 = vpop.f32.mrb[0].mxu0
        %v2795 = vpop.f32.mrb[0].mxu0
        %v2796 = vadd.f32 %v2524, %v2795
        %v2797 = vpop.f32.mrb[0].mxu0
        %2798 = vmatprep.mubr.bf16.mxu0 0
        %2799 = vmatmul.mubr.bf16.gmra.mrb[0].mxu0 %v2495
        %v2800 = vpop.f32.mrb[0].mxu0
        %v2801 = vadd.f32 %v2524, %v2800
        %v2802 = vpop.f32.mrb[0].mxu0
        %v2803 = vpop.f32.mrb[0].mxu0
        %v2804 = vadd.f32 %v2524, %v2803
        %v2805 = vpop.f32.mrb[0].mxu0
        %2806 = vmatprep.mubr.bf16.mxu0 0
        %2807 = vmatmul.mubr.bf16.gmra.mrb[0].mxu0 %v2496
        %v2808 = vpop.f32.mrb[0].mxu0
        %v2809 = vadd.f32 %v2524, %v2808
        %v2810 = vpop.f32.mrb[0].mxu0
        %v2811 = vpop.f32.mrb[0].mxu0
        %v2812 = vadd.f32 %v2524, %v2811
        %v2813 = vpop.f32.mrb[0].mxu0
        %2814 = vmatprep.mubr.bf16.mxu0 0
        %2815 = vmatmul.mubr.bf16.gmra.mrb[0].mxu0 %v2497
        %v2816 = vpop.f32.mrb[0].mxu0
        %v2817 = vadd.f32 %v2524, %v2816
        %v2818 = vpop.f32.mrb[0].mxu0
        %v2819 = vpop.f32.mrb[0].mxu0
        %v2820 = vadd.f32 %v2524, %v2819
        %v2821 = vpop.f32.mrb[0].mxu0
        %2822 = vmatprep.mubr.bf16.mxu0 0
        %2823 = vmatmul.mubr.bf16.gmra.mrb[0].mxu0 %v2498
        %v2824 = vpop.f32.mrb[0].mxu0
        %v2825 = vadd.f32 %v2524, %v2824
        %v2826 = vpop.f32.mrb[0].mxu0
        %v2827 = vpop.f32.mrb[0].mxu0
        %v2828 = vadd.f32 %v2524, %v2827
        %v2829 = vpop.f32.mrb[0].mxu0
        %2830 = vmatprep.mubr.bf16.mxu0 0
        %2831 = vmatmul.mubr.bf16.gmra.mrb[0].mxu0 %v2499
        %v2832 = vpop.f32.mrb[0].mxu0
        %v2833 = vadd.f32 %v2524, %v2832
        %v2834 = vpop.f32.mrb[0].mxu0
        %v2835 = vpop.f32.mrb[0].mxu0
        %v2836 = vadd.f32 %v2524, %v2835
        %v2837 = vpop.f32.mrb[0].mxu0
        %2838 = vmatprep.mubr.bf16.mxu0 0
        %2839 = vmatmul.mubr.bf16.gmra.mrb[0].mxu0 %v2500
        %v2840 = vpop.f32.mrb[0].mxu0
        %v2841 = vadd.f32 %v2524, %v2840
        %v2842 = vpop.f32.mrb[0].mxu0
        %v2843 = vpop.f32.mrb[0].mxu0
        %v2844 = vadd.f32 %v2524, %v2843
        %v2845 = vpop.f32.mrb[0].mxu0
        %2846 = vmatprep.mubr.bf16.mxu0 0
        %2847 = vmatmul.mubr.bf16.gmra.mrb[0].mxu0 %v2501
        %v2848 = vpop.f32.mrb[0].mxu0
        %v2849 = vadd.f32 %v2524, %v2848
        %v2850 = vpop.f32.mrb[0].mxu0
        %v2851 = vpop.f32.mrb[0].mxu0
        %v2852 = vadd.f32 %v2524, %v2851
        %v2853 = vpop.f32.mrb[0].mxu0
        %2854 = vmatprep.mubr.bf16.mxu0 0
        %2855 = vmatmul.mubr.bf16.gmra.mrb[0].mxu0 %v2502
        %v2856 = vpop.f32.mrb[0].mxu0
        %v2857 = vadd.f32 %v2524, %v2856
        %v2858 = vpop.f32.mrb[0].mxu0
        %v2859 = vpop.f32.mrb[0].mxu0
        %v2860 = vadd.f32 %v2524, %v2859
        %v2861 = vpop.f32.mrb[0].mxu0
        %2862 = vdwg.mxu0
        %v2863 = vtanh.pop %v2609
        %v2864 = vtanh.pop %v2612
        %v2865 = vtanh.pop %v2617
        %v2866 = vtanh.pop %v2620
        %v2867 = vtanh.pop %v2625
        %v2868 = vtanh.pop %v2628
        %v2869 = vtanh.pop %v2633
        %v2870 = vtanh.pop %v2636
        %v2871 = vtanh.pop %v2641
        %v2872 = vtanh.pop %v2644
        %v2873 = vtanh.pop %v2649
        %v2874 = vtanh.pop %v2652
        %v2875 = vtanh.pop %v2657
        %v2876 = vtanh.pop %v2660
        %v2877 = vtanh.pop %v2665
        %v2878 = vtanh.pop %v2668
        %v2879 = vtanh.pop %v2673
        %v2880 = vtanh.pop %v2676
        %v2881 = vtanh.pop %v2681
        %v2882 = vtanh.pop %v2684
        %v2883 = vtanh.pop %v2689
        %v2884 = vtanh.pop %v2692
        %v2885 = vtanh.pop %v2697
        %v2886 = vtanh.pop %v2700
        %v2887 = vtanh.pop %v2705
        %v2888 = vtanh.pop %v2708
        %v2889 = vtanh.pop %v2713
        %v2890 = vtanh.pop %v2716
        %v2891 = vtanh.pop %v2721
        %v2892 = vtanh.pop %v2724
        %v2893 = vtanh.pop %v2729
        %v2894 = vtanh.pop %v2732
        %v2895 = vtanh.pop %v2737
        %v2896 = vtanh.pop %v2740
        %v2897 = vtanh.pop %v2745
        %v2898 = vtanh.pop %v2748
        %v2899 = vtanh.pop %v2753
        %v2900 = vtanh.pop %v2756
        %v2901 = vtanh.pop %v2761
        %v2902 = vtanh.pop %v2764
        %v2903 = vtanh.pop %v2769
        %v2904 = vtanh.pop %v2772
        %v2905 = vtanh.pop %v2777
        %v2906 = vtanh.pop %v2780
        %v2907 = vtanh.pop %v2785
        %v2908 = vtanh.pop %v2788
        %v2909 = vtanh.pop %v2793
        %v2910 = vtanh.pop %v2796
        %v2911 = vtanh.pop %v2801
        %v2912 = vtanh.pop %v2804
        %v2913 = vtanh.pop %v2809
        %v2914 = vtanh.pop %v2812
        %v2915 = vtanh.pop %v2817
        %v2916 = vtanh.pop %v2820
        %v2917 = vtanh.pop %v2825
        %v2918 = vtanh.pop %v2828
        %v2919 = vtanh.pop %v2833
        %v2920 = vtanh.pop %v2836
        %v2921 = vtanh.pop %v2841
        %v2922 = vtanh.pop %v2844
        %v2923 = vtanh.pop %v2849
        %v2924 = vtanh.pop %v2852
        %v2925 = vtanh.pop %v2857
        %v2926 = vtanh.pop %v2860
        %v2927 = vpack.c.bf16 %v2864, %v2863
        %v2928 = vpack.c.bf16 %v2866, %v2865
        %v2929 = vpack.c.bf16 %v2868, %v2867
        %v2930 = vpack.c.bf16 %v2870, %v2869
        %v2931 = vpack.c.bf16 %v2872, %v2871
        %v2932 = vpack.c.bf16 %v2874, %v2873
        %v2933 = vpack.c.bf16 %v2876, %v2875
        %v2934 = vpack.c.bf16 %v2878, %v2877
        %v2935 = vpack.c.bf16 %v2880, %v2879
        %v2936 = vpack.c.bf16 %v2882, %v2881
        %v2937 = vpack.c.bf16 %v2884, %v2883
        %v2938 = vpack.c.bf16 %v2886, %v2885
        %v2939 = vpack.c.bf16 %v2888, %v2887
        %v2940 = vpack.c.bf16 %v2890, %v2889
        %v2941 = vpack.c.bf16 %v2892, %v2891
        %v2942 = vpack.c.bf16 %v2894, %v2893
        %v2943 = vpack.c.bf16 %v2896, %v2895
        %v2944 = vpack.c.bf16 %v2898, %v2897
        %v2945 = vpack.c.bf16 %v2900, %v2899
        %v2946 = vpack.c.bf16 %v2902, %v2901
        %v2947 = vpack.c.bf16 %v2904, %v2903
        %v2948 = vpack.c.bf16 %v2906, %v2905
        %v2949 = vpack.c.bf16 %v2908, %v2907
        %v2950 = vpack.c.bf16 %v2910, %v2909
        %v2951 = vpack.c.bf16 %v2912, %v2911
        %v2952 = vpack.c.bf16 %v2914, %v2913
        %v2953 = vpack.c.bf16 %v2916, %v2915
        %v2954 = vpack.c.bf16 %v2918, %v2917
        %v2955 = vpack.c.bf16 %v2920, %v2919
        %v2956 = vpack.c.bf16 %v2922, %v2921
        %v2957 = vpack.c.bf16 %v2924, %v2923
        %v2958 = vpack.c.bf16 %v2926, %v2925
        %v2991 = vunpack.c.l.b16 %v2927
        %v2992 = vunpack.c.h.b16 %v2927
        %v2993 = vunpack.c.l.b16 %v2928
        %v2994 = vunpack.c.h.b16 %v2928
        %v2995 = vunpack.c.l.b16 %v2929
        %v2996 = vunpack.c.h.b16 %v2929
        %v2997 = vunpack.c.l.b16 %v2930
        %v2998 = vunpack.c.h.b16 %v2930
        %v2999 = vunpack.c.l.b16 %v2931
        %v3000 = vunpack.c.h.b16 %v2931
        %v3001 = vunpack.c.l.b16 %v2932
        %v3002 = vunpack.c.h.b16 %v2932
        %v3003 = vunpack.c.l.b16 %v2933
        %v3004 = vunpack.c.h.b16 %v2933
        %v3005 = vunpack.c.l.b16 %v2934
        %v3006 = vunpack.c.h.b16 %v2934
        %v3007 = vunpack.c.l.b16 %v2935
        %v3008 = vunpack.c.h.b16 %v2935
        %v3009 = vunpack.c.l.b16 %v2936
        %v3010 = vunpack.c.h.b16 %v2936
        %v3011 = vunpack.c.l.b16 %v2937
        %v3012 = vunpack.c.h.b16 %v2937
        %v3013 = vunpack.c.l.b16 %v2938
        %v3014 = vunpack.c.h.b16 %v2938
        %v3015 = vunpack.c.l.b16 %v2939
        %v3016 = vunpack.c.h.b16 %v2939
        %v3017 = vunpack.c.l.b16 %v2940
        %v3018 = vunpack.c.h.b16 %v2940
        %v3019 = vunpack.c.l.b16 %v2941
        %v3020 = vunpack.c.h.b16 %v2941
        %v3021 = vunpack.c.l.b16 %v2942
        %v3022 = vunpack.c.h.b16 %v2942
        %v3023 = vunpack.c.l.b16 %v2943
        %v3024 = vunpack.c.h.b16 %v2943
        %v3025 = vunpack.c.l.b16 %v2944
        %v3026 = vunpack.c.h.b16 %v2944
        %v3027 = vunpack.c.l.b16 %v2945
        %v3028 = vunpack.c.h.b16 %v2945
        %v3029 = vunpack.c.l.b16 %v2946
        %v3030 = vunpack.c.h.b16 %v2946
        %v3031 = vunpack.c.l.b16 %v2947
        %v3032 = vunpack.c.h.b16 %v2947
        %v3033 = vunpack.c.l.b16 %v2948
        %v3034 = vunpack.c.h.b16 %v2948
        %v3035 = vunpack.c.l.b16 %v2949
        %v3036 = vunpack.c.h.b16 %v2949
        %v3037 = vunpack.c.l.b16 %v2950
        %v3038 = vunpack.c.h.b16 %v2950
        %v3039 = vunpack.c.l.b16 %v2951
        %v3040 = vunpack.c.h.b16 %v2951
        %v3041 = vunpack.c.l.b16 %v2952
        %v3042 = vunpack.c.h.b16 %v2952
        %v3043 = vunpack.c.l.b16 %v2953
        %v3044 = vunpack.c.h.b16 %v2953
        %v3045 = vunpack.c.l.b16 %v2954
        %v3046 = vunpack.c.h.b16 %v2954
        %v3047 = vunpack.c.l.b16 %v2955
        %v3048 = vunpack.c.h.b16 %v2955
        %v3049 = vunpack.c.l.b16 %v2956
        %v3050 = vunpack.c.h.b16 %v2956
        %v3051 = vunpack.c.l.b16 %v2957
        %v3052 = vunpack.c.h.b16 %v2957
        %v3053 = vunpack.c.l.b16 %v2958
        %v3054 = vunpack.c.h.b16 %v2958
        %v3055 = vpack.c.b16 %v2991, %v2991
        %v3056 = vpack.c.b16 %v2992, %v2992
        %v3057 = vpack.c.b16 %v2993, %v2993
        %v3058 = vpack.c.b16 %v2994, %v2994
        %v3059 = vpack.c.b16 %v2995, %v2995
        %v3060 = vpack.c.b16 %v2996, %v2996
        %v3061 = vpack.c.b16 %v2997, %v2997
        %v3062 = vpack.c.b16 %v2998, %v2998
        %v3063 = vpack.c.b16 %v2999, %v2999
        %v3064 = vpack.c.b16 %v3000, %v3000
        %v3065 = vpack.c.b16 %v3001, %v3001
        %v3066 = vpack.c.b16 %v3002, %v3002
        %v3067 = vpack.c.b16 %v3003, %v3003
        %v3068 = vpack.c.b16 %v3004, %v3004
        %v3069 = vpack.c.b16 %v3005, %v3005
        %v3070 = vpack.c.b16 %v3006, %v3006
        %v3071 = vpack.c.b16 %v3007, %v3007
        %v3072 = vpack.c.b16 %v3008, %v3008
        %v3073 = vpack.c.b16 %v3009, %v3009
        %v3074 = vpack.c.b16 %v3010, %v3010
        %v3075 = vpack.c.b16 %v3011, %v3011
        %v3076 = vpack.c.b16 %v3012, %v3012
        %v3077 = vpack.c.b16 %v3013, %v3013
        %v3078 = vpack.c.b16 %v3014, %v3014
        %v3079 = vpack.c.b16 %v3015, %v3015
        %v3080 = vpack.c.b16 %v3016, %v3016
        %v3081 = vpack.c.b16 %v3017, %v3017
        %v3082 = vpack.c.b16 %v3018, %v3018
        %v3083 = vpack.c.b16 %v3019, %v3019
        %v3084 = vpack.c.b16 %v3020, %v3020
        %v3085 = vpack.c.b16 %v3021, %v3021
        %v3086 = vpack.c.b16 %v3022, %v3022
        %v3087 = vpack.c.b16 %v3023, %v3023
        %v3088 = vpack.c.b16 %v3024, %v3024
        %v3089 = vpack.c.b16 %v3025, %v3025
        %v3090 = vpack.c.b16 %v3026, %v3026
        %v3091 = vpack.c.b16 %v3027, %v3027
        %v3092 = vpack.c.b16 %v3028, %v3028
        %v3093 = vpack.c.b16 %v3029, %v3029
        %v3094 = vpack.c.b16 %v3030, %v3030
        %v3095 = vpack.c.b16 %v3031, %v3031
        %v3096 = vpack.c.b16 %v3032, %v3032
        %v3097 = vpack.c.b16 %v3033, %v3033
        %v3098 = vpack.c.b16 %v3034, %v3034
        %v3099 = vpack.c.b16 %v3035, %v3035
        %v3100 = vpack.c.b16 %v3036, %v3036
        %v3101 = vpack.c.b16 %v3037, %v3037
        %v3102 = vpack.c.b16 %v3038, %v3038
        %v3103 = vpack.c.b16 %v3039, %v3039
        %v3104 = vpack.c.b16 %v3040, %v3040
        %v3105 = vpack.c.b16 %v3041, %v3041
        %v3106 = vpack.c.b16 %v3042, %v3042
        %v3107 = vpack.c.b16 %v3043, %v3043
        %v3108 = vpack.c.b16 %v3044, %v3044
        %v3109 = vpack.c.b16 %v3045, %v3045
        %v3110 = vpack.c.b16 %v3046, %v3046
        %v3111 = vpack.c.b16 %v3047, %v3047
        %v3112 = vpack.c.b16 %v3048, %v3048
        %v3113 = vpack.c.b16 %v3049, %v3049
        %v3114 = vpack.c.b16 %v3050, %v3050
        %v3115 = vpack.c.b16 %v3051, %v3051
        %v3116 = vpack.c.b16 %v3052, %v3052
        %v3117 = vpack.c.b16 %v3053, %v3053
        %v3118 = vpack.c.b16 %v3054, %v3054
        %3183 = vst [vmem:[%s380] sm:$0xf] %v3055
        %3184 = vst [vmem:[%s380 + $0x4] sm:$0xf] %v3056
        %3185 = vst [vmem:[%s380 + $0x8] sm:$0xf] %v3057
        %3186 = vst [vmem:[%s380 + $0xc] sm:$0xf] %v3058
        %3187 = vst [vmem:[%s380 + $0x10] sm:$0xf] %v3059
        %3188 = vst [vmem:[%s380 + $0x14] sm:$0xf] %v3060
        %3189 = vst [vmem:[%s380 + $0x18] sm:$0xf] %v3061
        %3190 = vst [vmem:[%s380 + $0x1c] sm:$0xf] %v3062
        %3191 = vst [vmem:[%s380 + $0x20] sm:$0xf] %v3063
        %3192 = vst [vmem:[%s380 + $0x24] sm:$0xf] %v3064
        %3193 = vst [vmem:[%s380 + $0x28] sm:$0xf] %v3065
        %3194 = vst [vmem:[%s380 + $0x2c] sm:$0xf] %v3066
        %3195 = vst [vmem:[%s380 + $0x30] sm:$0xf] %v3067
        %3196 = vst [vmem:[%s380 + $0x34] sm:$0xf] %v3068
        %3197 = vst [vmem:[%s380 + $0x38] sm:$0xf] %v3069
        %3198 = vst [vmem:[%s380 + $0x3c] sm:$0xf] %v3070
        %3199 = vst [vmem:[%s380 + $0x40] sm:$0xf] %v3071
        %3200 = vst [vmem:[%s380 + $0x44] sm:$0xf] %v3072
        %3201 = vst [vmem:[%s380 + $0x48] sm:$0xf] %v3073
        %3202 = vst [vmem:[%s380 + $0x4c] sm:$0xf] %v3074
        %3203 = vst [vmem:[%s380 + $0x50] sm:$0xf] %v3075
        %3204 = vst [vmem:[%s380 + $0x54] sm:$0xf] %v3076
        %3205 = vst [vmem:[%s380 + $0x58] sm:$0xf] %v3077
        %3206 = vst [vmem:[%s380 + $0x5c] sm:$0xf] %v3078
        %3207 = vst [vmem:[%s380 + $0x60] sm:$0xf] %v3079
        %3208 = vst [vmem:[%s380 + $0x64] sm:$0xf] %v3080
        %3209 = vst [vmem:[%s380 + $0x68] sm:$0xf] %v3081
        %3210 = vst [vmem:[%s380 + $0x6c] sm:$0xf] %v3082
        %3211 = vst [vmem:[%s380 + $0x70] sm:$0xf] %v3083
        %3212 = vst [vmem:[%s380 + $0x74] sm:$0xf] %v3084
        %3213 = vst [vmem:[%s380 + $0x78] sm:$0xf] %v3085
        %3214 = vst [vmem:[%s380 + $0x7c] sm:$0xf] %v3086
        %3215 = vst [vmem:[%s380 + $0x80] sm:$0xf] %v3087
        %3216 = vst [vmem:[%s380 + $0x84] sm:$0xf] %v3088
        %3217 = vst [vmem:[%s380 + $0x88] sm:$0xf] %v3089
        %3218 = vst [vmem:[%s380 + $0x8c] sm:$0xf] %v3090
        %3219 = vst [vmem:[%s380 + $0x90] sm:$0xf] %v3091
        %3220 = vst [vmem:[%s380 + $0x94] sm:$0xf] %v3092
        %3221 = vst [vmem:[%s380 + $0x98] sm:$0xf] %v3093
        %3222 = vst [vmem:[%s380 + $0x9c] sm:$0xf] %v3094
        %3223 = vst [vmem:[%s380 + $0xa0] sm:$0xf] %v3095
        %3224 = vst [vmem:[%s380 + $0xa4] sm:$0xf] %v3096
        %3225 = vst [vmem:[%s380 + $0xa8] sm:$0xf] %v3097
        %3226 = vst [vmem:[%s380 + $0xac] sm:$0xf] %v3098
        %3227 = vst [vmem:[%s380 + $0xb0] sm:$0xf] %v3099
        %3228 = vst [vmem:[%s380 + $0xb4] sm:$0xf] %v3100
        %3229 = vst [vmem:[%s380 + $0xb8] sm:$0xf] %v3101
        %3230 = vst [vmem:[%s380 + $0xbc] sm:$0xf] %v3102
        %3231 = vst [vmem:[%s380 + $0xc0] sm:$0xf] %v3103
        %3232 = vst [vmem:[%s380 + $0xc4] sm:$0xf] %v3104
        %3233 = vst [vmem:[%s380 + $0xc8] sm:$0xf] %v3105
        %3234 = vst [vmem:[%s380 + $0xcc] sm:$0xf] %v3106
        %3235 = vst [vmem:[%s380 + $0xd0] sm:$0xf] %v3107
        %3236 = vst [vmem:[%s380 + $0xd4] sm:$0xf] %v3108
        %3237 = vst [vmem:[%s380 + $0xd8] sm:$0xf] %v3109
        %3238 = vst [vmem:[%s380 + $0xdc] sm:$0xf] %v3110
        %3239 = vst [vmem:[%s380 + $0xe0] sm:$0xf] %v3111
        %3240 = vst [vmem:[%s380 + $0xe4] sm:$0xf] %v3112
        %3241 = vst [vmem:[%s380 + $0xe8] sm:$0xf] %v3113
        %3242 = vst [vmem:[%s380 + $0xec] sm:$0xf] %v3114
        %3243 = vst [vmem:[%s380 + $0xf0] sm:$0xf] %v3115
        %3244 = vst [vmem:[%s380 + $0xf4] sm:$0xf] %v3116
        %3245 = vst [vmem:[%s380 + $0xf8] sm:$0xf] %v3117
        %3246 = vst [vmem:[%s380 + $0xfc] sm:$0xf] %v3118
        %s3247 = sand.u32 %s269, 1
        %s3248 = scalar_lea.sflag [#allocation3], %s3247
        %s3249 = sand.u32 %s269, 1
        %s3250 = smul.addr %s3249, 256
        %s3251 = scalar_lea.vmem [#allocation2], %s3250
        // Predicated region
        $region65: #{tpu_custom_call.1} parent=63 // pred_check
          %p3252 = pneg %p279
        $region66: #{tpu_custom_call.1} parent=63 // pred_check_branch
          %3254 = sbr.rel (%p3252) target = $region68
        $region67: #{tpu_custom_call.1} parent=63 // pred_region
          %s3255 = smul.u32 64, %s25
          %s3257 = ssub.s32 4096, 4096
          %3258 = vsyncadd %s3248, %s3257
          %s3259 = smul.addr %s3255, 64
          %s3260 = scalar_lea.hbm %s11, %s3259
          %s3261 = sshll.u32 %s3251, 4
          %s3262 = int_to_ptr.vmem [resolvable:$true] %s3261
          %3267 = dma.vmem_to_hbm [thread:$0]  %s3262, 4096, %s3260, %s3248, 64, 64, 4
        $region68: #{tpu_custom_call.1} parent=63 // pred_fallthru
          _
      $region64: #{tpu_custom_call.1} parent=5 // pred_fallthru
        _
      %p3268 = scmp.le.s32.totalorder 2, %s20
      // Predicated region
      $region69: #{tpu_custom_call.1} parent=5 // pred_check
        %p3269 = pneg %p3268
      $region70: #{tpu_custom_call.1} parent=5 // pred_check_branch
        %3271 = sbr.rel (%p3269) target = $region72
      $region71: #{tpu_custom_call.1} parent=5 // pred_region
        %s3272 = ssub.s32 %s20, 2
        // Predicated region
        $region73: #{tpu_custom_call.1} parent=71 // pred_check
          %p3273 = pneg %p285
        $region74: #{tpu_custom_call.1} parent=71 // pred_check_branch
          %3275 = sbr.rel (%p3273) target = $region76
        $region75: #{tpu_custom_call.1} parent=71 // pred_region
          %s3276 = sand.u32 %s270, 1
          %s3277 = scalar_lea.sflag [#allocation3], %s3276
          %s3278 = sand.u32 %s270, 1
          %s3279 = smul.addr %s3278, 256
          %s3280 = scalar_lea.vmem [#allocation2], %s3279
          %3281 = dma.done %s3277, 4096
        $region76: #{tpu_custom_call.1} parent=71 // pred_fallthru
          _
      $region72: #{tpu_custom_call.1} parent=5 // pred_fallthru
        _
    $region6: #{tpu_custom_call.1} parent=1 // loop_footer
      %s24 = sadd.s32 1, %s20
    $region7: #{tpu_custom_call.1} parent=1 // loop_footer_branch
      %19 = sbr.rel target = $region3
    $region8: #{tpu_custom_call.1} parent=1 // loop_exit
      _
    %3282 = vsyncpa [#allocation3], 1
    %s3283 = scalar_lea.sflag [#allocation3], 1
    %3284 = vsyncpa %s3283, 1

</llo_original>
